<compile_context>
chip_gen: v7x
topology: tpu7x:2x2x1
jax: 0.10.0
libtpu: 0.0.40
codegen_flags: <defaults>
</compile_context>

<pallas_src>
import math

import jax
import jax.numpy as jnp
import numpy as np
from jax import lax
from jax.experimental import pallas as pl
from jax.experimental.pallas import tpu as pltpu


# Gate order used everywhere: 0=input(i), 1=forget(f), 2=output(o), 3=memory(g)
GATE_X = ("input_x", "forget_x", "output_x", "memory_x")
GATE_H = ("input_h", "forget_h", "output_h", "memory_h")
GATE_S = ("input", "forget", "output", None)   # no spatial-semantic memory conv


def convlstm_cell_kernel(x_ref, h_ref, c_ref, sp_ref, se_ref, w_ref, b_ref,
                         out_ref, xcat_ref):
    """Fused ConvLSTM cell for one batch block.

    x_ref:    (BB, H, W, C)      bf16   input x (NHWC)
    h_ref:    (BB, H, W, C)      bf16   previous hidden state
    c_ref:    (BB, H, W, C)      f32    previous cell state (kept f32)
    sp_ref:   (BB, H, W, 1)      f32    spatial map
    se_ref:   (BB, 1, C)         f32    semantic vector
    w_ref:    (9*3C, 4C)         bf16   fused conv weights, cols = [i|f|o|g]
                                        (g cols pre-scaled by 2)
    b_ref:    (1, 4C)            f32    pre-summed per-gate bias (g bias * 2)
    out_ref:  (BB, H, W, 2C)     f32    [h_new | c_next]
    xcat_ref: (BB, H+2, W+2, 3C) bf16   VMEM scratch: zero-halo [x|h|ss]
    """
    BB, H, W, C = x_ref.shape
    C3 = 3 * C
    C4 = 4 * C
    M = BB * H * W

    # spatial_semantic outer product on the VPU (f32), single bf16 cast.
    ss = (sp_ref[...] * se_ref[...][:, :, None, :]).astype(jnp.bfloat16)

    # Zero-halo padded concat buffer [x | h | ss]; halo built in VMEM scratch.
    xcat_ref[...] = jnp.zeros_like(xcat_ref)
    interior = jnp.concatenate([x_ref[...], h_ref[...], ss], axis=-1)
    xcat_ref[:, 1:H + 1, 1:W + 1, :] = interior

    # 9-tap accumulation: each shifted (M, 3C) window goes straight to the MXU
    # against its (3C, 4C) weight block; f32 accumulation.
    acc = jnp.zeros((M, C4), jnp.float32)
    for k in range(9):
        dy, dx = divmod(k, 3)
        win = xcat_ref[:, dy:dy + H, dx:dx + W, :].reshape(M, C3)
        acc = acc + jnp.dot(win, w_ref[k * C3:(k + 1) * C3, :],
                            preferred_element_type=jnp.float32)
    acc = acc + b_ref[...]

    # Unified activation: one full-width sigmoid; g = tanh(z) = 2*sigmoid(2z)-1
    # (the 2x is folded into the g weight/bias columns at pack time).
    s = jax.nn.sigmoid(acc)
    i = s[:, 0 * C:1 * C]
    f = s[:, 1 * C:2 * C]
    o = s[:, 2 * C:3 * C]
    g = 2.0 * s[:, 3 * C:4 * C] - 1.0

    # Cell recurrence in f32.
    c_prev = c_ref[...].reshape(M, C)
    next_c = f * c_prev + i * g
    h_new = o * next_c

    # Single [h | c_next] store; o and g are not written (wrapper discards them).
    out_ref[...] = jnp.concatenate([h_new, next_c],
                                   axis=-1).reshape(BB, H, W, 2 * C)


def conv_lstm_forward(x_nchw, state, spatial, semantic, fused, *,
                      block_batch=None):
    """Matches ConvLSTM.forward: returns (h, (h, next_c)) in NCHW."""
    h0, c0 = state
    B, C, H, W = x_nchw.shape

    if block_batch is None:
        # Target >= 256 rows (B_blk*H*W) per grid step for v6e/v7x MXU fill;
        # fall back to the whole batch for small problems.
        target = max(1, -(-256 // (H * W)))
        block_batch = B if target >= B else target
        while B % block_batch:            # keep an exact divisor of B
            block_batch += 1
    assert B % block_batch == 0
    grid = (B // block_batch,)

    to_nhwc = lambda t: jnp.transpose(t, (0, 2, 3, 1))
    x_b = to_nhwc(x_nchw).astype(jnp.bfloat16)     # cast before the kernel DMA
    h_b = to_nhwc(h0).astype(jnp.bfloat16)
    c_f = to_nhwc(c0)                              # f32 cell state
    sp = spatial[..., None]                        # (B, H, W, 1) f32
    se = semantic[:, None, :]                      # (B, 1, C)    f32

    w_f, b_f = fused["w"], fused["b"]

    def batched(shape):
        zeros = (0,) * (len(shape) - 1)
        return pl.BlockSpec(shape, lambda b: (b,) + zeros)

    def resident(shape):                            # constant index_map: stays
        zeros = (0,) * len(shape)                   # VMEM-resident across steps
        return pl.BlockSpec(shape, lambda b: zeros)

    flops = 2 * B * H * W * (9 * 3 * C) * (4 * C)
    bytes_accessed = (x_b.size * 2 + h_b.size * 2 + c_f.size * 4
                      + sp.size * 4 + se.size * 4 + w_f.size * 2
                      + b_f.size * 4 + B * H * W * 2 * C * 4)

    out = pl.pallas_call(
        convlstm_cell_kernel,
        out_shape=jax.ShapeDtypeStruct((B, H, W, 2 * C), jnp.float32),
        grid_spec=pltpu.PrefetchScalarGridSpec(
            num_scalar_prefetch=0,
            grid=grid,
            in_specs=[
                batched((block_batch, H, W, C)),        # x
                batched((block_batch, H, W, C)),        # h
                batched((block_batch, H, W, C)),        # c (f32)
                batched((block_batch, H, W, 1)),        # spatial
                batched((block_batch, 1, C)),           # semantic
                resident((9 * 3 * C, 4 * C)),           # fused weight
                resident((1, 4 * C)),                   # fused bias
            ],
            out_specs=batched((block_batch, H, W, 2 * C)),
            scratch_shapes=[
                pltpu.VMEM((block_batch, H + 2, W + 2, 3 * C), jnp.bfloat16),
            ]),
        compiler_params=pltpu.CompilerParams(
            dimension_semantics=("parallel",)),
        cost_estimate=pl.CostEstimate(
            flops=flops,
            transcendentals=B * H * W * 4 * C,
            bytes_accessed=bytes_accessed),
    )(x_b, h_b, c_f, sp, se, w_f, b_f)

    to_nchw = lambda t: jnp.transpose(t, (0, 3, 1, 2))
    h_out = to_nchw(out[..., 0:C])
    c_out = to_nchw(out[..., C:2 * C])
    return h_out, (h_out, c_out)


def init_torch_params(key, C):
    """PyTorch-layout params: xavier_uniform(gain=sqrt(2)) weights, zero biases."""
    gain = math.sqrt(2.0)
    fan = C * 3 * 3
    bound = gain * math.sqrt(6.0 / (fan + fan))
    names = [n for n in GATE_X + GATE_H + GATE_S if n is not None]
    keys = jax.random.split(key, len(names))
    w_pt = {n: jax.random.uniform(k, (C, C, 3, 3), jnp.float32, -bound, bound)
            for n, k in zip(names, keys)}
    b_pt = {n: jnp.zeros((C,), jnp.float32) for n in names}
    return w_pt, b_pt


def build_fused_params(w_pt, b_pt, C):
    """Pack the 11 conv weights into one (9*3C, 4C) bf16 matrix + (1,4C) bias.

    K rows: tap k = dy*3+dx major, then channel blocks [x | h | ss] (no zero
    pad block).  N cols: gates [i | f | o | g], each C wide.  A factor of 2 is
    folded into the g (memory) columns/bias so the kernel can use one
    full-width sigmoid and recover tanh(z) = 2*sigmoid(2z) - 1.
    """
    w_np = {n: np.asarray(w) for n, w in w_pt.items()}
    b_np = {n: np.asarray(b) for n, b in b_pt.items()}

    Wf = np.zeros((9, 3 * C, 4 * C), np.float32)
    for k in range(9):
        dy, dx = divmod(k, 3)
        for g in range(4):
            scale = 2.0 if g == 3 else 1.0
            # PyTorch conv weight (Cout, Cin, 3, 3); per-tap matmul needs (Cin, Cout)
            Wf[k, 0 * C:1 * C, g * C:(g + 1) * C] = \
                scale * w_np[GATE_X[g]][:, :, dy, dx].T
            Wf[k, 1 * C:2 * C, g * C:(g + 1) * C] = \
                scale * w_np[GATE_H[g]][:, :, dy, dx].T
            if GATE_S[g] is not None:
                Wf[k, 2 * C:3 * C, g * C:(g + 1) * C] = \
                    scale * w_np[GATE_S[g]][:, :, dy, dx].T

    bf = np.zeros((1, 4 * C), np.float32)
    for g in range(4):
        b = b_np[GATE_X[g]] + b_np[GATE_H[g]]
        if GATE_S[g] is not None:
            b = b + b_np[GATE_S[g]]
        bf[0, g * C:(g + 1) * C] = (2.0 if g == 3 else 1.0) * b

    return {"w": jnp.asarray(Wf.reshape(9 * 3 * C, 4 * C), jnp.bfloat16),
            "b": jnp.asarray(bf, jnp.float32)}


def reference_forward(x, state, spatial, semantic, w_pt, b_pt):
    """Pure-JAX f32 NCHW reference mirroring the PyTorch module."""
    def conv(t, name):
        y = lax.conv_general_dilated(
            t, w_pt[name], (1, 1), "SAME",
            dimension_numbers=("NCHW", "OIHW", "NCHW"),
            precision=lax.Precision.HIGHEST)
        return y + b_pt[name][None, :, None, None]

    ss = spatial[:, None, :, :] * semantic[:, :, None, None]
    h, c = state
    i = jax.nn.sigmoid(conv(x, "input_x") + conv(h, "input_h") + conv(ss, "input"))
    f = jax.nn.sigmoid(conv(x, "forget_x") + conv(h, "forget_h") + conv(ss, "forget"))
    o = jax.nn.sigmoid(conv(x, "output_x") + conv(h, "output_h") + conv(ss, "output"))
    g = jnp.tanh(conv(x, "memory_x") + conv(h, "memory_h"))
    next_c = f * c + i * g
    h_new = o * next_c
    return h_new, (h_new, next_c)


if __name__ == "__main__":
    B, C, H, W = 2, 32, 8, 8   # embed_size=32, 8x8 spatial grid

    key = jax.random.PRNGKey(0)
    kx, kh, kc, ksp, kse, kp = jax.random.split(key, 6)

    x = jax.random.normal(kx, (B, C, H, W), jnp.float32)
    h0 = jax.random.normal(kh, (B, C, H, W), jnp.float32)
    c0 = jax.random.normal(kc, (B, C, H, W), jnp.float32)
    spatial = jax.random.normal(ksp, (B, H, W), jnp.float32)
    semantic = jax.random.normal(kse, (B, C), jnp.float32)

    w_pt, b_pt = init_torch_params(kp, C)
    fused = build_fused_params(w_pt, b_pt, C)

    h_ref, (_, c_ref_out) = reference_forward(x, (h0, c0), spatial, semantic,
                                              w_pt, b_pt)

    # Default config: whole batch in one grid step (weight resident anyway).
    forward = jax.jit(conv_lstm_forward)
    h_out, (h_state, c_state) = forward(x, (h0, c0), spatial, semantic, fused)
    jax.block_until_ready((h_out, h_state, c_state))

    # bf16 MXU inputs with f32 accumulation -> relaxed tolerance.
    np.testing.assert_allclose(np.asarray(h_out), np.asarray(h_ref),
                               rtol=2e-2, atol=2e-2)
    np.testing.assert_allclose(np.asarray(c_state), np.asarray(c_ref_out),
                               rtol=2e-2, atol=2e-2)

    # Also exercise the batch-blocked "parallel" grid path (v7x dual-TC sharding).
    forward_grid = jax.jit(
        lambda xx, st, sp_, se_, fu: conv_lstm_forward(xx, st, sp_, se_, fu,
                                                       block_batch=1))
    h_out2, (_, c_state2) = forward_grid(x, (h0, c0), spatial, semantic, fused)
    jax.block_until_ready((h_out2, c_state2))
    np.testing.assert_allclose(np.asarray(h_out2), np.asarray(h_ref),
                               rtol=2e-2, atol=2e-2)
    np.testing.assert_allclose(np.asarray(c_state2), np.asarray(c_ref_out),
                               rtol=2e-2, atol=2e-2)

    print("KERNEL_OK")
</pallas_src>

<mosaic_0001>
module attributes {stable_mosaic.version = 11 : i64} {
  func.func @convlstm_cell_kernel(%arg0: i32, %arg1: memref<2x8x8x32xbf16, #tpu.memory_space<vmem>>, %arg2: memref<2x8x8x32xbf16, #tpu.memory_space<vmem>>, %arg3: memref<2x8x8x32xf32, #tpu.memory_space<vmem>>, %arg4: memref<2x8x8x1xf32, #tpu.memory_space<vmem>>, %arg5: memref<2x1x32xf32, #tpu.memory_space<vmem>>, %arg6: memref<864x128xbf16, #tpu.memory_space<vmem>>, %arg7: memref<1x128xf32, #tpu.memory_space<vmem>>, %arg8: memref<2x8x8x64xf32, #tpu.memory_space<vmem>>, %arg9: memref<2x10x10x96xbf16, #tpu.memory_space<vmem>>) attributes {dimension_semantics = [#tpu.dimension_semantics<parallel>], iteration_bounds = array<i64: 1>, scalar_prefetch = 0 : i64, scratch_operands = 1 : i64, tpu.core_type = #tpu.core_type<tc>, window_params = [{transform_indices = @transform_0, window_bounds = array<i64: 2, 8, 8, 32>}, {transform_indices = @transform_1, window_bounds = array<i64: 2, 8, 8, 32>}, {transform_indices = @transform_2, window_bounds = array<i64: 2, 8, 8, 32>}, {transform_indices = @transform_3, window_bounds = array<i64: 2, 8, 8, 1>}, {transform_indices = @transform_4, window_bounds = array<i64: 2, 1, 32>}, {pipeline_mode = #tpu.pipeline_mode<synchronous>, transform_indices = @transform_5, window_bounds = array<i64: 864, 128>}, {pipeline_mode = #tpu.pipeline_mode<synchronous>, transform_indices = @transform_6, window_bounds = array<i64: 1, 128>}, {transform_indices = @transform_7, window_bounds = array<i64: 2, 8, 8, 64>}]} {
    %c0 = arith.constant 0 : index
    %c0_0 = arith.constant 0 : index
    %c0_1 = arith.constant 0 : index
    %c0_2 = arith.constant 0 : index
    %0 = vector.load %arg4[%c0, %c0_0, %c0_1, %c0_2] : memref<2x8x8x1xf32, #tpu.memory_space<vmem>>, vector<2x8x8x1xf32>
    %c0_3 = arith.constant 0 : index
    %c0_4 = arith.constant 0 : index
    %c0_5 = arith.constant 0 : index
    %1 = vector.load %arg5[%c0_3, %c0_4, %c0_5] : memref<2x1x32xf32, #tpu.memory_space<vmem>>, vector<2x1x32xf32>
    %2 = vector.shape_cast %1 : vector<2x1x32xf32> to vector<2x1x1x32xf32>
    %3 = vector.broadcast %0 : vector<2x8x8x1xf32> to vector<2x8x8x32xf32>
    %4 = vector.broadcast %2 : vector<2x1x1x32xf32> to vector<2x8x8x32xf32>
    %5 = arith.mulf %3, %4 : vector<2x8x8x32xf32>
    %6 = arith.truncf %5 : vector<2x8x8x32xf32> to vector<2x8x8x32xbf16>
    %cst = arith.constant 0.000000e+00 : bf16
    %7 = vector.broadcast %cst : bf16 to vector<2x10x10x96xbf16>
    %c0_6 = arith.constant 0 : index
    %c0_7 = arith.constant 0 : index
    %c0_8 = arith.constant 0 : index
    %c0_9 = arith.constant 0 : index
    %8 = vector.load %arg9[%c0_6, %c0_7, %c0_8, %c0_9] : memref<2x10x10x96xbf16, #tpu.memory_space<vmem>>, vector<2x10x10x96xbf16>
    tpu.vector_store %arg9[%c0_6, %c0_7, %c0_8, %c0_9], %7 {strides = array<i32>} : memref<2x10x10x96xbf16, #tpu.memory_space<vmem>>, vector<2x10x10x96xbf16>,
    %c0_10 = arith.constant 0 : index
    %c0_11 = arith.constant 0 : index
    %c0_12 = arith.constant 0 : index
    %c0_13 = arith.constant 0 : index
    %9 = vector.load %arg1[%c0_10, %c0_11, %c0_12, %c0_13] : memref<2x8x8x32xbf16, #tpu.memory_space<vmem>>, vector<2x8x8x32xbf16>
    %c0_14 = arith.constant 0 : index
    %c0_15 = arith.constant 0 : index
    %c0_16 = arith.constant 0 : index
    %c0_17 = arith.constant 0 : index
    %10 = vector.load %arg2[%c0_14, %c0_15, %c0_16, %c0_17] : memref<2x8x8x32xbf16, #tpu.memory_space<vmem>>, vector<2x8x8x32xbf16>
    %11 = tpu.concatenate %9, %10, %6 in 3 : vector<2x8x8x32xbf16>, vector<2x8x8x32xbf16>, vector<2x8x8x32xbf16> -> vector<2x8x8x96xbf16>
    %c0_18 = arith.constant 0 : index
    %c1 = arith.constant 1 : index
    %c1_19 = arith.constant 1 : index
    %c0_20 = arith.constant 0 : index
    %12 = vector.load %arg9[%c0_18, %c1, %c1_19, %c0_20] : memref<2x10x10x96xbf16, #tpu.memory_space<vmem>>, vector<2x8x8x96xbf16>
    tpu.vector_store %arg9[%c0_18, %c1, %c1_19, %c0_20], %11 {strides = array<i32>} : memref<2x10x10x96xbf16, #tpu.memory_space<vmem>>, vector<2x8x8x96xbf16>,
    %cst_21 = arith.constant 0.000000e+00 : f32
    %13 = vector.broadcast %cst_21 : f32 to vector<128x128xf32>
    %c0_22 = arith.constant 0 : index
    %c0_23 = arith.constant 0 : index
    %c0_24 = arith.constant 0 : index
    %c0_25 = arith.constant 0 : index
    %14 = vector.load %arg9[%c0_22, %c0_23, %c0_24, %c0_25] : memref<2x10x10x96xbf16, #tpu.memory_space<vmem>>, vector<2x8x8x96xbf16>
    %15 = vector.shape_cast %14 : vector<2x8x8x96xbf16> to vector<128x96xbf16>
    %c0_26 = arith.constant 0 : index
    %c0_27 = arith.constant 0 : index
    %16 = vector.load %arg6[%c0_26, %c0_27] : memref<864x128xbf16, #tpu.memory_space<vmem>>, vector<96x128xbf16>
    %cst_28 = arith.constant dense<0.000000e+00> : vector<128x128xf32>
    %17 = tpu.matmul %15, %16, %cst_28 {dimension_numbers = #tpu.dot_dimension_numbers<[1], [0], [0], [1], [0, 0, 1, 1], [], []>} : vector<128x96xbf16>, vector<96x128xbf16>, vector<128x128xf32> -> vector<128x128xf32>
    %18 = arith.addf %13, %17 : vector<128x128xf32>
    %c0_29 = arith.constant 0 : index
    %c0_30 = arith.constant 0 : index
    %c1_31 = arith.constant 1 : index
    %c0_32 = arith.constant 0 : index
    %19 = vector.load %arg9[%c0_29, %c0_30, %c1_31, %c0_32] : memref<2x10x10x96xbf16, #tpu.memory_space<vmem>>, vector<2x8x8x96xbf16>
    %20 = vector.shape_cast %19 : vector<2x8x8x96xbf16> to vector<128x96xbf16>
    %c96 = arith.constant 96 : index
    %c0_33 = arith.constant 0 : index
    %21 = vector.load %arg6[%c96, %c0_33] : memref<864x128xbf16, #tpu.memory_space<vmem>>, vector<96x128xbf16>
    %cst_34 = arith.constant dense<0.000000e+00> : vector<128x128xf32>
    %22 = tpu.matmul %20, %21, %cst_34 {dimension_numbers = #tpu.dot_dimension_numbers<[1], [0], [0], [1], [0, 0, 1, 1], [], []>} : vector<128x96xbf16>, vector<96x128xbf16>, vector<128x128xf32> -> vector<128x128xf32>
    %23 = arith.addf %18, %22 : vector<128x128xf32>
    %c0_35 = arith.constant 0 : index
    %c0_36 = arith.constant 0 : index
    %c2 = arith.constant 2 : index
    %c0_37 = arith.constant 0 : index
    %24 = vector.load %arg9[%c0_35, %c0_36, %c2, %c0_37] : memref<2x10x10x96xbf16, #tpu.memory_space<vmem>>, vector<2x8x8x96xbf16>
    %25 = vector.shape_cast %24 : vector<2x8x8x96xbf16> to vector<128x96xbf16>
    %c192 = arith.constant 192 : index
    %c0_38 = arith.constant 0 : index
    %26 = vector.load %arg6[%c192, %c0_38] : memref<864x128xbf16, #tpu.memory_space<vmem>>, vector<96x128xbf16>
    %cst_39 = arith.constant dense<0.000000e+00> : vector<128x128xf32>
    %27 = tpu.matmul %25, %26, %cst_39 {dimension_numbers = #tpu.dot_dimension_numbers<[1], [0], [0], [1], [0, 0, 1, 1], [], []>} : vector<128x96xbf16>, vector<96x128xbf16>, vector<128x128xf32> -> vector<128x128xf32>
    %28 = arith.addf %23, %27 : vector<128x128xf32>
    %c0_40 = arith.constant 0 : index
    %c1_41 = arith.constant 1 : index
    %c0_42 = arith.constant 0 : index
    %c0_43 = arith.constant 0 : index
    %29 = vector.load %arg9[%c0_40, %c1_41, %c0_42, %c0_43] : memref<2x10x10x96xbf16, #tpu.memory_space<vmem>>, vector<2x8x8x96xbf16>
    %30 = vector.shape_cast %29 : vector<2x8x8x96xbf16> to vector<128x96xbf16>
    %c288 = arith.constant 288 : index
    %c0_44 = arith.constant 0 : index
    %31 = vector.load %arg6[%c288, %c0_44] : memref<864x128xbf16, #tpu.memory_space<vmem>>, vector<96x128xbf16>
    %cst_45 = arith.constant dense<0.000000e+00> : vector<128x128xf32>
    %32 = tpu.matmul %30, %31, %cst_45 {dimension_numbers = #tpu.dot_dimension_numbers<[1], [0], [0], [1], [0, 0, 1, 1], [], []>} : vector<128x96xbf16>, vector<96x128xbf16>, vector<128x128xf32> -> vector<128x128xf32>
    %33 = arith.addf %28, %32 : vector<128x128xf32>
    %c0_46 = arith.constant 0 : index
    %c1_47 = arith.constant 1 : index
    %c1_48 = arith.constant 1 : index
    %c0_49 = arith.constant 0 : index
    %34 = vector.load %arg9[%c0_46, %c1_47, %c1_48, %c0_49] : memref<2x10x10x96xbf16, #tpu.memory_space<vmem>>, vector<2x8x8x96xbf16>
    %35 = vector.shape_cast %34 : vector<2x8x8x96xbf16> to vector<128x96xbf16>
    %c384 = arith.constant 384 : index
    %c0_50 = arith.constant 0 : index
    %36 = vector.load %arg6[%c384, %c0_50] : memref<864x128xbf16, #tpu.memory_space<vmem>>, vector<96x128xbf16>
    %cst_51 = arith.constant dense<0.000000e+00> : vector<128x128xf32>
    %37 = tpu.matmul %35, %36, %cst_51 {dimension_numbers = #tpu.dot_dimension_numbers<[1], [0], [0], [1], [0, 0, 1, 1], [], []>} : vector<128x96xbf16>, vector<96x128xbf16>, vector<128x128xf32> -> vector<128x128xf32>
    %38 = arith.addf %33, %37 : vector<128x128xf32>
    %c0_52 = arith.constant 0 : index
    %c1_53 = arith.constant 1 : index
    %c2_54 = arith.constant 2 : index
    %c0_55 = arith.constant 0 : index
    %39 = vector.load %arg9[%c0_52, %c1_53, %c2_54, %c0_55] : memref<2x10x10x96xbf16, #tpu.memory_space<vmem>>, vector<2x8x8x96xbf16>
    %40 = vector.shape_cast %39 : vector<2x8x8x96xbf16> to vector<128x96xbf16>
    %c480 = arith.constant 480 : index
    %c0_56 = arith.constant 0 : index
    %41 = vector.load %arg6[%c480, %c0_56] : memref<864x128xbf16, #tpu.memory_space<vmem>>, vector<96x128xbf16>
    %cst_57 = arith.constant dense<0.000000e+00> : vector<128x128xf32>
    %42 = tpu.matmul %40, %41, %cst_57 {dimension_numbers = #tpu.dot_dimension_numbers<[1], [0], [0], [1], [0, 0, 1, 1], [], []>} : vector<128x96xbf16>, vector<96x128xbf16>, vector<128x128xf32> -> vector<128x128xf32>
    %43 = arith.addf %38, %42 : vector<128x128xf32>
    %c0_58 = arith.constant 0 : index
    %c2_59 = arith.constant 2 : index
    %c0_60 = arith.constant 0 : index
    %c0_61 = arith.constant 0 : index
    %44 = vector.load %arg9[%c0_58, %c2_59, %c0_60, %c0_61] : memref<2x10x10x96xbf16, #tpu.memory_space<vmem>>, vector<2x8x8x96xbf16>
    %45 = vector.shape_cast %44 : vector<2x8x8x96xbf16> to vector<128x96xbf16>
    %c576 = arith.constant 576 : index
    %c0_62 = arith.constant 0 : index
    %46 = vector.load %arg6[%c576, %c0_62] : memref<864x128xbf16, #tpu.memory_space<vmem>>, vector<96x128xbf16>
    %cst_63 = arith.constant dense<0.000000e+00> : vector<128x128xf32>
    %47 = tpu.matmul %45, %46, %cst_63 {dimension_numbers = #tpu.dot_dimension_numbers<[1], [0], [0], [1], [0, 0, 1, 1], [], []>} : vector<128x96xbf16>, vector<96x128xbf16>, vector<128x128xf32> -> vector<128x128xf32>
    %48 = arith.addf %43, %47 : vector<128x128xf32>
    %c0_64 = arith.constant 0 : index
    %c2_65 = arith.constant 2 : index
    %c1_66 = arith.constant 1 : index
    %c0_67 = arith.constant 0 : index
    %49 = vector.load %arg9[%c0_64, %c2_65, %c1_66, %c0_67] : memref<2x10x10x96xbf16, #tpu.memory_space<vmem>>, vector<2x8x8x96xbf16>
    %50 = vector.shape_cast %49 : vector<2x8x8x96xbf16> to vector<128x96xbf16>
    %c672 = arith.constant 672 : index
    %c0_68 = arith.constant 0 : index
    %51 = vector.load %arg6[%c672, %c0_68] : memref<864x128xbf16, #tpu.memory_space<vmem>>, vector<96x128xbf16>
    %cst_69 = arith.constant dense<0.000000e+00> : vector<128x128xf32>
    %52 = tpu.matmul %50, %51, %cst_69 {dimension_numbers = #tpu.dot_dimension_numbers<[1], [0], [0], [1], [0, 0, 1, 1], [], []>} : vector<128x96xbf16>, vector<96x128xbf16>, vector<128x128xf32> -> vector<128x128xf32>
    %53 = arith.addf %48, %52 : vector<128x128xf32>
    %c0_70 = arith.constant 0 : index
    %c2_71 = arith.constant 2 : index
    %c2_72 = arith.constant 2 : index
    %c0_73 = arith.constant 0 : index
    %54 = vector.load %arg9[%c0_70, %c2_71, %c2_72, %c0_73] : memref<2x10x10x96xbf16, #tpu.memory_space<vmem>>, vector<2x8x8x96xbf16>
    %55 = vector.shape_cast %54 : vector<2x8x8x96xbf16> to vector<128x96xbf16>
    %c768 = arith.constant 768 : index
    %c0_74 = arith.constant 0 : index
    %56 = vector.load %arg6[%c768, %c0_74] : memref<864x128xbf16, #tpu.memory_space<vmem>>, vector<96x128xbf16>
    %cst_75 = arith.constant dense<0.000000e+00> : vector<128x128xf32>
    %57 = tpu.matmul %55, %56, %cst_75 {dimension_numbers = #tpu.dot_dimension_numbers<[1], [0], [0], [1], [0, 0, 1, 1], [], []>} : vector<128x96xbf16>, vector<96x128xbf16>, vector<128x128xf32> -> vector<128x128xf32>
    %58 = arith.addf %53, %57 : vector<128x128xf32>
    %c0_76 = arith.constant 0 : index
    %c0_77 = arith.constant 0 : index
    %59 = vector.load %arg7[%c0_76, %c0_77] : memref<1x128xf32, #tpu.memory_space<vmem>>, vector<1x128xf32>
    %60 = vector.broadcast %59 : vector<1x128xf32> to vector<128x128xf32>
    %61 = arith.addf %58, %60 : vector<128x128xf32>
    %62 = arith.negf %61 : vector<128x128xf32>
    %63 = math.exp %62 : vector<128x128xf32>
    %cst_78 = arith.constant 1.000000e+00 : f32
    %64 = vector.broadcast %cst_78 : f32 to vector<128x128xf32>
    %65 = arith.addf %64, %63 : vector<128x128xf32>
    %66 = arith.divf %64, %65 : vector<128x128xf32>
    %67 = vector.extract_strided_slice %66 {offsets = [0, 0], sizes = [128, 32], strides = [1, 1]} : vector<128x128xf32> to vector<128x32xf32>
    %68 = vector.extract_strided_slice %66 {offsets = [0, 32], sizes = [128, 32], strides = [1, 1]} : vector<128x128xf32> to vector<128x32xf32>
    %69 = vector.extract_strided_slice %66 {offsets = [0, 64], sizes = [128, 32], strides = [1, 1]} : vector<128x128xf32> to vector<128x32xf32>
    %70 = vector.extract_strided_slice %66 {offsets = [0, 96], sizes = [128, 32], strides = [1, 1]} : vector<128x128xf32> to vector<128x32xf32>
    %cst_79 = arith.constant 2.000000e+00 : f32
    %71 = vector.broadcast %cst_79 : f32 to vector<128x32xf32>
    %72 = arith.mulf %71, %70 : vector<128x32xf32>
    %cst_80 = arith.constant 1.000000e+00 : f32
    %73 = vector.broadcast %cst_80 : f32 to vector<128x32xf32>
    %74 = arith.subf %72, %73 : vector<128x32xf32>
    %c0_81 = arith.constant 0 : index
    %c0_82 = arith.constant 0 : index
    %c0_83 = arith.constant 0 : index
    %c0_84 = arith.constant 0 : index
    %75 = vector.load %arg3[%c0_81, %c0_82, %c0_83, %c0_84] : memref<2x8x8x32xf32, #tpu.memory_space<vmem>>, vector<2x8x8x32xf32>
    %76 = vector.shape_cast %75 : vector<2x8x8x32xf32> to vector<128x32xf32>
    %77 = arith.mulf %68, %76 : vector<128x32xf32>
    %78 = arith.mulf %67, %74 : vector<128x32xf32>
    %79 = arith.addf %77, %78 : vector<128x32xf32>
    %80 = arith.mulf %69, %79 : vector<128x32xf32>
    %81 = tpu.concatenate %80, %79 in 1 : vector<128x32xf32>, vector<128x32xf32> -> vector<128x64xf32>
    %82 = vector.shape_cast %81 : vector<128x64xf32> to vector<2x8x8x64xf32>
    %c0_85 = arith.constant 0 : index
    %c0_86 = arith.constant 0 : index
    %c0_87 = arith.constant 0 : index
    %c0_88 = arith.constant 0 : index
    %83 = vector.load %arg8[%c0_85, %c0_86, %c0_87, %c0_88] : memref<2x8x8x64xf32, #tpu.memory_space<vmem>>, vector<2x8x8x64xf32>
    tpu.vector_store %arg8[%c0_85, %c0_86, %c0_87, %c0_88], %82 {strides = array<i32>} : memref<2x8x8x64xf32, #tpu.memory_space<vmem>>, vector<2x8x8x64xf32>,
    return
  }
  func.func @transform_0(%arg0: i32) -> (i32, i32, i32, i32) {
    %c0_i32 = arith.constant 0 : i32
    %c0_i32_0 = arith.constant 0 : i32
    %c0_i32_1 = arith.constant 0 : i32
    %c0_i32_2 = arith.constant 0 : i32
    return %arg0, %c0_i32, %c0_i32_0, %c0_i32_1 : i32, i32, i32, i32
  }
  func.func @transform_1(%arg0: i32) -> (i32, i32, i32, i32) {
    %c0_i32 = arith.constant 0 : i32
    %c0_i32_0 = arith.constant 0 : i32
    %c0_i32_1 = arith.constant 0 : i32
    %c0_i32_2 = arith.constant 0 : i32
    return %arg0, %c0_i32, %c0_i32_0, %c0_i32_1 : i32, i32, i32, i32
  }
  func.func @transform_2(%arg0: i32) -> (i32, i32, i32, i32) {
    %c0_i32 = arith.constant 0 : i32
    %c0_i32_0 = arith.constant 0 : i32
    %c0_i32_1 = arith.constant 0 : i32
    %c0_i32_2 = arith.constant 0 : i32
    return %arg0, %c0_i32, %c0_i32_0, %c0_i32_1 : i32, i32, i32, i32
  }
  func.func @transform_3(%arg0: i32) -> (i32, i32, i32, i32) {
    %c0_i32 = arith.constant 0 : i32
    %c0_i32_0 = arith.constant 0 : i32
    %c0_i32_1 = arith.constant 0 : i32
    %c0_i32_2 = arith.constant 0 : i32
    return %arg0, %c0_i32, %c0_i32_0, %c0_i32_1 : i32, i32, i32, i32
  }
  func.func @transform_4(%arg0: i32) -> (i32, i32, i32) {
    %c0_i32 = arith.constant 0 : i32
    %c0_i32_0 = arith.constant 0 : i32
    %c0_i32_1 = arith.constant 0 : i32
    return %arg0, %c0_i32, %c0_i32_0 : i32, i32, i32
  }
  func.func @transform_5(%arg0: i32) -> (i32, i32) {
    %c0_i32 = arith.constant 0 : i32
    %c0_i32_0 = arith.constant 0 : i32
    %c0_i32_1 = arith.constant 0 : i32
    return %c0_i32, %c0_i32_0 : i32, i32
  }
  func.func @transform_6(%arg0: i32) -> (i32, i32) {
    %c0_i32 = arith.constant 0 : i32
    %c0_i32_0 = arith.constant 0 : i32
    %c0_i32_1 = arith.constant 0 : i32
    return %c0_i32, %c0_i32_0 : i32, i32
  }
  func.func @transform_7(%arg0: i32) -> (i32, i32, i32, i32) {
    %c0_i32 = arith.constant 0 : i32
    %c0_i32_0 = arith.constant 0 : i32
    %c0_i32_1 = arith.constant 0 : i32
    %c0_i32_2 = arith.constant 0 : i32
    return %arg0, %c0_i32, %c0_i32_0, %c0_i32_1 : i32, i32, i32, i32
  }
}

</mosaic_0001>

<llo_original>
// kernel: conv_lstm_forward.1
$region0: #{conv_lstm_forward.1}
  #allocation0 [shape = 'u32[]', space=smem, size = 0x4, offset = 0x4, fixed_abs, tag = 'smem constant byte address 0x4 - core index']
  #allocation1 [shape = 'u32[144,128]{1,0:T(1,128)}', space=vmem, size = 0x12000, scoped, tag = 'internal scratch']
  #allocation2 [shape = 'bf16[2,10,10,96]{3,2,1,0:T(8,128)(2,1)}', space=vmem, size = 0x14000, scoped, tag = 'scratch operand']
  %s0 = inlined_call_operand.vmem [shape: bf16[2,8,8,32], index: 0, kind: input, shape index: {}]
  %s1 = inlined_call_operand.vmem [shape: bf16[2,8,8,32], index: 1, kind: input, shape index: {}]
  %s2 = inlined_call_operand.vmem [shape: f32[2,8,8,32], index: 2, kind: input, shape index: {}]
  %s3 = inlined_call_operand.vmem [shape: f32[2,8,8,1], index: 3, kind: input, shape index: {}]
  %s4 = inlined_call_operand.vmem [shape: f32[2,1,32], index: 4, kind: input, shape index: {}]
  %s5 = inlined_call_operand.vmem [shape: bf16[864,128], index: 5, kind: input, shape index: {}]
  %s6 = inlined_call_operand.vmem [shape: f32[1,128], index: 6, kind: input, shape index: {}]
  %s7 = inlined_call_operand.vmem [shape: f32[2,8,8,64], index: 7, kind: output, shape index: {}]
  %s8 = sld [smem:[#allocation0]]
  $region38: #{conv_lstm_forward.1} parent=0
    _
  %s10 = ssub.s32 1, %s8
  %s11 = scalar_select 0, %s10, %s8
  // Predicated region
  $region2: #{conv_lstm_forward.1} parent=0 // pred_check
    _
  $region3: #{conv_lstm_forward.1} parent=0 // pred_check_branch
    %13 = sbr.rel (0) target = $region5
  $region4: #{conv_lstm_forward.1} parent=0 // pred_region
    _
  $region5: #{conv_lstm_forward.1} parent=0 // pred_fallthru
    _
  // Predicated region
  $region6: #{conv_lstm_forward.1} parent=0 // pred_check
    _
  $region7: #{conv_lstm_forward.1} parent=0 // pred_check_branch
    %15 = sbr.rel (0) target = $region9
  $region8: #{conv_lstm_forward.1} parent=0 // pred_region
    _
  $region9: #{conv_lstm_forward.1} parent=0 // pred_fallthru
    _
  // Predicated region
  $region10: #{conv_lstm_forward.1} parent=0 // pred_check
    _
  $region11: #{conv_lstm_forward.1} parent=0 // pred_check_branch
    %17 = sbr.rel (0) target = $region13
  $region12: #{conv_lstm_forward.1} parent=0 // pred_region
    _
  $region13: #{conv_lstm_forward.1} parent=0 // pred_fallthru
    _
  // Predicated region
  $region14: #{conv_lstm_forward.1} parent=0 // pred_check
    _
  $region15: #{conv_lstm_forward.1} parent=0 // pred_check_branch
    %19 = sbr.rel (0) target = $region17
  $region16: #{conv_lstm_forward.1} parent=0 // pred_region
    _
  $region17: #{conv_lstm_forward.1} parent=0 // pred_fallthru
    _
  // Predicated region
  $region18: #{conv_lstm_forward.1} parent=0 // pred_check
    _
  $region19: #{conv_lstm_forward.1} parent=0 // pred_check_branch
    %21 = sbr.rel (0) target = $region21
  $region20: #{conv_lstm_forward.1} parent=0 // pred_region
    _
  $region21: #{conv_lstm_forward.1} parent=0 // pred_fallthru
    _
  // Predicated region
  $region22: #{conv_lstm_forward.1} parent=0 // pred_check
    _
  $region23: #{conv_lstm_forward.1} parent=0 // pred_check_branch
    %23 = sbr.rel (0) target = $region25
  $region24: #{conv_lstm_forward.1} parent=0 // pred_region
    _
  $region25: #{conv_lstm_forward.1} parent=0 // pred_fallthru
    _
  // Predicated region
  $region26: #{conv_lstm_forward.1} parent=0 // pred_check
    _
  $region27: #{conv_lstm_forward.1} parent=0 // pred_check_branch
    %25 = sbr.rel (0) target = $region29
  $region28: #{conv_lstm_forward.1} parent=0 // pred_region
    _
  $region29: #{conv_lstm_forward.1} parent=0 // pred_fallthru
    _
  %v27 = vld [vmem:[%s3] sm:$0xff]
  %v28 = vld [vmem:[%s3 + $0x8] sm:$0xff]
  %v29 = vld [vmem:[%s3 + $0x10] sm:$0xff]
  %v30 = vld [vmem:[%s3 + $0x18] sm:$0xff]
  %v31 = vld [vmem:[%s3 + $0x20] sm:$0xff]
  %v32 = vld [vmem:[%s3 + $0x28] sm:$0xff]
  %v33 = vld [vmem:[%s3 + $0x30] sm:$0xff]
  %v34 = vld [vmem:[%s3 + $0x38] sm:$0xff]
  %v35 = vld [vmem:[%s3 + $0x40] sm:$0xff]
  %v36 = vld [vmem:[%s3 + $0x48] sm:$0xff]
  %v37 = vld [vmem:[%s3 + $0x50] sm:$0xff]
  %v38 = vld [vmem:[%s3 + $0x58] sm:$0xff]
  %v39 = vld [vmem:[%s3 + $0x60] sm:$0xff]
  %v40 = vld [vmem:[%s3 + $0x68] sm:$0xff]
  %v41 = vld [vmem:[%s3 + $0x70] sm:$0xff]
  %v42 = vld [vmem:[%s3 + $0x78] sm:$0xff]
  %v43 = vld [vmem:[%s4] sm:$0x1]
  %v44 = vld [vmem:[%s4 + $0x1] sm:$0x1]
  %46 = vset.pattern.permute.xlu0 0
  %47 = vperm.xlu0 %46, %v27
  %v48 = vpop.permute.xlu0 %47
  %51 = vset.pattern.permute.xlu0 0
  %52 = vperm.xlu0 %51, %v28
  %v53 = vpop.permute.xlu0 %52
  %56 = vset.pattern.permute.xlu0 0
  %57 = vperm.xlu0 %56, %v29
  %v58 = vpop.permute.xlu0 %57
  %61 = vset.pattern.permute.xlu0 0
  %62 = vperm.xlu0 %61, %v30
  %v63 = vpop.permute.xlu0 %62
  %66 = vset.pattern.permute.xlu0 0
  %67 = vperm.xlu0 %66, %v31
  %v68 = vpop.permute.xlu0 %67
  %71 = vset.pattern.permute.xlu0 0
  %72 = vperm.xlu0 %71, %v32
  %v73 = vpop.permute.xlu0 %72
  %76 = vset.pattern.permute.xlu0 0
  %77 = vperm.xlu0 %76, %v33
  %v78 = vpop.permute.xlu0 %77
  %81 = vset.pattern.permute.xlu0 0
  %82 = vperm.xlu0 %81, %v34
  %v83 = vpop.permute.xlu0 %82
  %86 = vset.pattern.permute.xlu0 0
  %87 = vperm.xlu0 %86, %v35
  %v88 = vpop.permute.xlu0 %87
  %91 = vset.pattern.permute.xlu0 0
  %92 = vperm.xlu0 %91, %v36
  %v93 = vpop.permute.xlu0 %92
  %96 = vset.pattern.permute.xlu0 0
  %97 = vperm.xlu0 %96, %v37
  %v98 = vpop.permute.xlu0 %97
  %101 = vset.pattern.permute.xlu0 0
  %102 = vperm.xlu0 %101, %v38
  %v103 = vpop.permute.xlu0 %102
  %106 = vset.pattern.permute.xlu0 0
  %107 = vperm.xlu0 %106, %v39
  %v108 = vpop.permute.xlu0 %107
  %111 = vset.pattern.permute.xlu0 0
  %112 = vperm.xlu0 %111, %v40
  %v113 = vpop.permute.xlu0 %112
  %116 = vset.pattern.permute.xlu0 0
  %117 = vperm.xlu0 %116, %v41
  %v118 = vpop.permute.xlu0 %117
  %121 = vset.pattern.permute.xlu0 0
  %122 = vperm.xlu0 %121, %v42
  %v123 = vpop.permute.xlu0 %122
  %v127 = vlaneseq
  %v128 = vshrl.u32 %v127, 7
  %v129 = vsub.s32 0, %v128
  %v130 = vrot.slane %v43, %v129
  %v131 = vlaneseq
  %v132 = vshrl.u32 %v131, 7
  %v133 = vsub.s32 0, %v132
  %v134 = vrot.slane %v44, %v133
  %v137 = vmul.f32 %v48, %v130
  %v138 = vmul.f32 %v53, %v130
  %v139 = vmul.f32 %v58, %v130
  %v140 = vmul.f32 %v63, %v130
  %v141 = vmul.f32 %v68, %v130
  %v142 = vmul.f32 %v73, %v130
  %v143 = vmul.f32 %v78, %v130
  %v144 = vmul.f32 %v83, %v130
  %v145 = vmul.f32 %v88, %v134
  %v146 = vmul.f32 %v93, %v134
  %v147 = vmul.f32 %v98, %v134
  %v148 = vmul.f32 %v103, %v134
  %v149 = vmul.f32 %v108, %v134
  %v150 = vmul.f32 %v113, %v134
  %v151 = vmul.f32 %v118, %v134
  %v152 = vmul.f32 %v123, %v134
  %v153 = vpack.c.bf16 %v137, %v137
  %v154 = vpack.c.bf16 %v138, %v138
  %v155 = vpack.c.bf16 %v139, %v139
  %v156 = vpack.c.bf16 %v140, %v140
  %v157 = vpack.c.bf16 %v141, %v141
  %v158 = vpack.c.bf16 %v142, %v142
  %v159 = vpack.c.bf16 %v143, %v143
  %v160 = vpack.c.bf16 %v144, %v144
  %v161 = vpack.c.bf16 %v145, %v145
  %v162 = vpack.c.bf16 %v146, %v146
  %v163 = vpack.c.bf16 %v147, %v147
  %v164 = vpack.c.bf16 %v148, %v148
  %v165 = vpack.c.bf16 %v149, %v149
  %v166 = vpack.c.bf16 %v150, %v150
  %v167 = vpack.c.bf16 %v151, %v151
  %v168 = vpack.c.bf16 %v152, %v152
  %vm169 = vcmask 781312
  %170 = vst.msk [vmem:[#allocation2] sm:$0xf] %vm169, 0
  %vm171 = vcmask 778240
  %172 = vst.msk [vmem:[#allocation2 + $0x4] sm:$0x1] %vm171, 0
  %173 = vst.msk [vmem:[#allocation2 + $0x8] sm:$0xf] %vm169, 0
  %174 = vst.msk [vmem:[#allocation2 + $0xc] sm:$0x1] %vm171, 0
  %175 = vst.msk [vmem:[#allocation2 + $0x10] sm:$0xf] %vm169, 0
  %176 = vst.msk [vmem:[#allocation2 + $0x14] sm:$0x1] %vm171, 0
  %177 = vst.msk [vmem:[#allocation2 + $0x18] sm:$0xf] %vm169, 0
  %178 = vst.msk [vmem:[#allocation2 + $0x1c] sm:$0x1] %vm171, 0
  %179 = vst.msk [vmem:[#allocation2 + $0x20] sm:$0xf] %vm169, 0
  %180 = vst.msk [vmem:[#allocation2 + $0x24] sm:$0x1] %vm171, 0
  %181 = vst.msk [vmem:[#allocation2 + $0x28] sm:$0xf] %vm169, 0
  %182 = vst.msk [vmem:[#allocation2 + $0x2c] sm:$0x1] %vm171, 0
  %183 = vst.msk [vmem:[#allocation2 + $0x30] sm:$0xf] %vm169, 0
  %184 = vst.msk [vmem:[#allocation2 + $0x34] sm:$0x1] %vm171, 0
  %185 = vst.msk [vmem:[#allocation2 + $0x38] sm:$0xf] %vm169, 0
  %186 = vst.msk [vmem:[#allocation2 + $0x3c] sm:$0x1] %vm171, 0
  %187 = vst.msk [vmem:[#allocation2 + $0x40] sm:$0xf] %vm169, 0
  %188 = vst.msk [vmem:[#allocation2 + $0x44] sm:$0x1] %vm171, 0
  %189 = vst.msk [vmem:[#allocation2 + $0x48] sm:$0xf] %vm169, 0
  %190 = vst.msk [vmem:[#allocation2 + $0x4c] sm:$0x1] %vm171, 0
  %191 = vst.msk [vmem:[#allocation2 + $0x50] sm:$0xf] %vm169, 0
  %192 = vst.msk [vmem:[#allocation2 + $0x54] sm:$0x1] %vm171, 0
  %193 = vst.msk [vmem:[#allocation2 + $0x58] sm:$0xf] %vm169, 0
  %194 = vst.msk [vmem:[#allocation2 + $0x5c] sm:$0x1] %vm171, 0
  %195 = vst.msk [vmem:[#allocation2 + $0x60] sm:$0xf] %vm169, 0
  %196 = vst.msk [vmem:[#allocation2 + $0x64] sm:$0x1] %vm171, 0
  %197 = vst.msk [vmem:[#allocation2 + $0x68] sm:$0xf] %vm169, 0
  %198 = vst.msk [vmem:[#allocation2 + $0x6c] sm:$0x1] %vm171, 0
  %199 = vst.msk [vmem:[#allocation2 + $0x70] sm:$0xf] %vm169, 0
  %200 = vst.msk [vmem:[#allocation2 + $0x74] sm:$0x1] %vm171, 0
  %201 = vst.msk [vmem:[#allocation2 + $0x78] sm:$0xf] %vm169, 0
  %202 = vst.msk [vmem:[#allocation2 + $0x7c] sm:$0x1] %vm171, 0
  %203 = vst.msk [vmem:[#allocation2 + $0x80] sm:$0xf] %vm169, 0
  %204 = vst.msk [vmem:[#allocation2 + $0x84] sm:$0x1] %vm171, 0
  %205 = vst.msk [vmem:[#allocation2 + $0x88] sm:$0xf] %vm169, 0
  %206 = vst.msk [vmem:[#allocation2 + $0x8c] sm:$0x1] %vm171, 0
  %207 = vst.msk [vmem:[#allocation2 + $0x90] sm:$0xf] %vm169, 0
  %208 = vst.msk [vmem:[#allocation2 + $0x94] sm:$0x1] %vm171, 0
  %209 = vst.msk [vmem:[#allocation2 + $0x98] sm:$0xf] %vm169, 0
  %210 = vst.msk [vmem:[#allocation2 + $0x9c] sm:$0x1] %vm171, 0
  %v211 = vld [vmem:[%s0] sm:$0xf]
  %v212 = vld [vmem:[%s0 + $0x4] sm:$0xf]
  %v213 = vld [vmem:[%s0 + $0x8] sm:$0xf]
  %v214 = vld [vmem:[%s0 + $0xc] sm:$0xf]
  %v215 = vld [vmem:[%s0 + $0x10] sm:$0xf]
  %v216 = vld [vmem:[%s0 + $0x14] sm:$0xf]
  %v217 = vld [vmem:[%s0 + $0x18] sm:$0xf]
  %v218 = vld [vmem:[%s0 + $0x1c] sm:$0xf]
  %v219 = vld [vmem:[%s0 + $0x20] sm:$0xf]
  %v220 = vld [vmem:[%s0 + $0x24] sm:$0xf]
  %v221 = vld [vmem:[%s0 + $0x28] sm:$0xf]
  %v222 = vld [vmem:[%s0 + $0x2c] sm:$0xf]
  %v223 = vld [vmem:[%s0 + $0x30] sm:$0xf]
  %v224 = vld [vmem:[%s0 + $0x34] sm:$0xf]
  %v225 = vld [vmem:[%s0 + $0x38] sm:$0xf]
  %v226 = vld [vmem:[%s0 + $0x3c] sm:$0xf]
  %v227 = vld [vmem:[%s1] sm:$0xf]
  %v228 = vld [vmem:[%s1 + $0x4] sm:$0xf]
  %v229 = vld [vmem:[%s1 + $0x8] sm:$0xf]
  %v230 = vld [vmem:[%s1 + $0xc] sm:$0xf]
  %v231 = vld [vmem:[%s1 + $0x10] sm:$0xf]
  %v232 = vld [vmem:[%s1 + $0x14] sm:$0xf]
  %v233 = vld [vmem:[%s1 + $0x18] sm:$0xf]
  %v234 = vld [vmem:[%s1 + $0x1c] sm:$0xf]
  %v235 = vld [vmem:[%s1 + $0x20] sm:$0xf]
  %v236 = vld [vmem:[%s1 + $0x24] sm:$0xf]
  %v237 = vld [vmem:[%s1 + $0x28] sm:$0xf]
  %v238 = vld [vmem:[%s1 + $0x2c] sm:$0xf]
  %v239 = vld [vmem:[%s1 + $0x30] sm:$0xf]
  %v240 = vld [vmem:[%s1 + $0x34] sm:$0xf]
  %v241 = vld [vmem:[%s1 + $0x38] sm:$0xf]
  %v242 = vld [vmem:[%s1 + $0x3c] sm:$0xf]
  %v259 = vunpack.c.l.b16 %v227
  %v260 = vunpack.c.l.b16 %v228
  %v261 = vunpack.c.l.b16 %v229
  %v262 = vunpack.c.l.b16 %v230
  %v263 = vunpack.c.l.b16 %v231
  %v264 = vunpack.c.l.b16 %v232
  %v265 = vunpack.c.l.b16 %v233
  %v266 = vunpack.c.l.b16 %v234
  %v267 = vunpack.c.l.b16 %v235
  %v268 = vunpack.c.l.b16 %v236
  %v269 = vunpack.c.l.b16 %v237
  %v270 = vunpack.c.l.b16 %v238
  %v271 = vunpack.c.l.b16 %v239
  %v272 = vunpack.c.l.b16 %v240
  %v273 = vunpack.c.l.b16 %v241
  %v274 = vunpack.c.l.b16 %v242
  %v275 = vpack.c.b16 %v259, %v259
  %v276 = vpack.c.b16 %v260, %v260
  %v277 = vpack.c.b16 %v261, %v261
  %v278 = vpack.c.b16 %v262, %v262
  %v279 = vpack.c.b16 %v263, %v263
  %v280 = vpack.c.b16 %v264, %v264
  %v281 = vpack.c.b16 %v265, %v265
  %v282 = vpack.c.b16 %v266, %v266
  %v283 = vpack.c.b16 %v267, %v267
  %v284 = vpack.c.b16 %v268, %v268
  %v285 = vpack.c.b16 %v269, %v269
  %v286 = vpack.c.b16 %v270, %v270
  %v287 = vpack.c.b16 %v271, %v271
  %v288 = vpack.c.b16 %v272, %v272
  %v289 = vpack.c.b16 %v273, %v273
  %v290 = vpack.c.b16 %v274, %v274
  %291 = vrot.lane.b32.xlu0 %v275, 32
  %v292 = vpop.permute.xlu0 %291
  %293 = vrot.lane.b32.xlu0 %v276, 32
  %v294 = vpop.permute.xlu0 %293
  %295 = vrot.lane.b32.xlu0 %v277, 32
  %v296 = vpop.permute.xlu0 %295
  %297 = vrot.lane.b32.xlu0 %v278, 32
  %v298 = vpop.permute.xlu0 %297
  %299 = vrot.lane.b32.xlu0 %v279, 32
  %v300 = vpop.permute.xlu0 %299
  %301 = vrot.lane.b32.xlu0 %v280, 32
  %v302 = vpop.permute.xlu0 %301
  %303 = vrot.lane.b32.xlu0 %v281, 32
  %v304 = vpop.permute.xlu0 %303
  %305 = vrot.lane.b32.xlu0 %v282, 32
  %v306 = vpop.permute.xlu0 %305
  %307 = vrot.lane.b32.xlu0 %v283, 32
  %v308 = vpop.permute.xlu0 %307
  %309 = vrot.lane.b32.xlu0 %v284, 32
  %v310 = vpop.permute.xlu0 %309
  %311 = vrot.lane.b32.xlu0 %v285, 32
  %v312 = vpop.permute.xlu0 %311
  %313 = vrot.lane.b32.xlu0 %v286, 32
  %v314 = vpop.permute.xlu0 %313
  %315 = vrot.lane.b32.xlu0 %v287, 32
  %v316 = vpop.permute.xlu0 %315
  %317 = vrot.lane.b32.xlu0 %v288, 32
  %v318 = vpop.permute.xlu0 %317
  %319 = vrot.lane.b32.xlu0 %v289, 32
  %v320 = vpop.permute.xlu0 %319
  %321 = vrot.lane.b32.xlu0 %v290, 32
  %v322 = vpop.permute.xlu0 %321
  %339 = vrot.lane.b32.xlu0 %v153, 64
  %v340 = vpop.permute.xlu0 %339
  %341 = vrot.lane.b32.xlu0 %v154, 64
  %v342 = vpop.permute.xlu0 %341
  %343 = vrot.lane.b32.xlu0 %v155, 64
  %v344 = vpop.permute.xlu0 %343
  %345 = vrot.lane.b32.xlu0 %v156, 64
  %v346 = vpop.permute.xlu0 %345
  %347 = vrot.lane.b32.xlu0 %v157, 64
  %v348 = vpop.permute.xlu0 %347
  %349 = vrot.lane.b32.xlu0 %v158, 64
  %v350 = vpop.permute.xlu0 %349
  %351 = vrot.lane.b32.xlu0 %v159, 64
  %v352 = vpop.permute.xlu0 %351
  %353 = vrot.lane.b32.xlu0 %v160, 64
  %v354 = vpop.permute.xlu0 %353
  %355 = vrot.lane.b32.xlu0 %v161, 64
  %v356 = vpop.permute.xlu0 %355
  %357 = vrot.lane.b32.xlu0 %v162, 64
  %v358 = vpop.permute.xlu0 %357
  %359 = vrot.lane.b32.xlu0 %v163, 64
  %v360 = vpop.permute.xlu0 %359
  %361 = vrot.lane.b32.xlu0 %v164, 64
  %v362 = vpop.permute.xlu0 %361
  %363 = vrot.lane.b32.xlu0 %v165, 64
  %v364 = vpop.permute.xlu0 %363
  %365 = vrot.lane.b32.xlu0 %v166, 64
  %v366 = vpop.permute.xlu0 %365
  %367 = vrot.lane.b32.xlu0 %v167, 64
  %v368 = vpop.permute.xlu0 %367
  %369 = vrot.lane.b32.xlu0 %v168, 64
  %v370 = vpop.permute.xlu0 %369
  %vm371 = vcmask 261120
  %v374 = vsel %vm371, %v211, %v292
  %v377 = vsel %vm371, %v212, %v294
  %v380 = vsel %vm371, %v213, %v296
  %v383 = vsel %vm371, %v214, %v298
  %v386 = vsel %vm371, %v215, %v300
  %v389 = vsel %vm371, %v216, %v302
  %v392 = vsel %vm371, %v217, %v304
  %v395 = vsel %vm371, %v218, %v306
  %v398 = vsel %vm371, %v219, %v308
  %v401 = vsel %vm371, %v220, %v310
  %v404 = vsel %vm371, %v221, %v312
  %v407 = vsel %vm371, %v222, %v314
  %v410 = vsel %vm371, %v223, %v316
  %v413 = vsel %vm371, %v224, %v318
  %v416 = vsel %vm371, %v225, %v320
  %v419 = vsel %vm371, %v226, %v322
  %vm420 = vcmask 523264
  %v422 = vsel %vm420, %v374, %v340
  %v424 = vsel %vm420, %v377, %v342
  %v426 = vsel %vm420, %v380, %v344
  %v428 = vsel %vm420, %v383, %v346
  %v430 = vsel %vm420, %v386, %v348
  %v432 = vsel %vm420, %v389, %v350
  %v434 = vsel %vm420, %v392, %v352
  %v436 = vsel %vm420, %v395, %v354
  %v438 = vsel %vm420, %v398, %v356
  %v440 = vsel %vm420, %v401, %v358
  %v442 = vsel %vm420, %v404, %v360
  %v444 = vsel %vm420, %v407, %v362
  %v446 = vsel %vm420, %v410, %v364
  %v448 = vsel %vm420, %v413, %v366
  %v450 = vsel %vm420, %v416, %v368
  %v452 = vsel %vm420, %v419, %v370
  %v469 = vunpack.c.l.b16 %v422
  %v470 = vunpack.c.l.b16 %v424
  %v471 = vunpack.c.l.b16 %v426
  %v472 = vunpack.c.l.b16 %v428
  %v473 = vunpack.c.l.b16 %v430
  %v474 = vunpack.c.l.b16 %v432
  %v475 = vunpack.c.l.b16 %v434
  %v476 = vunpack.c.l.b16 %v436
  %v477 = vunpack.c.l.b16 %v438
  %v478 = vunpack.c.l.b16 %v440
  %v479 = vunpack.c.l.b16 %v442
  %v480 = vunpack.c.l.b16 %v444
  %v481 = vunpack.c.l.b16 %v446
  %v482 = vunpack.c.l.b16 %v448
  %v483 = vunpack.c.l.b16 %v450
  %v484 = vunpack.c.l.b16 %v452
  %v485 = vpack.c.b16 %v469, %v469
  %v486 = vpack.c.b16 %v470, %v470
  %v487 = vpack.c.b16 %v471, %v471
  %v488 = vpack.c.b16 %v472, %v472
  %v489 = vpack.c.b16 %v473, %v473
  %v490 = vpack.c.b16 %v474, %v474
  %v491 = vpack.c.b16 %v475, %v475
  %v492 = vpack.c.b16 %v476, %v476
  %v493 = vpack.c.b16 %v477, %v477
  %v494 = vpack.c.b16 %v478, %v478
  %v495 = vpack.c.b16 %v479, %v479
  %v496 = vpack.c.b16 %v480, %v480
  %v497 = vpack.c.b16 %v481, %v481
  %v498 = vpack.c.b16 %v482, %v482
  %v499 = vpack.c.b16 %v483, %v483
  %v500 = vpack.c.b16 %v484, %v484
  %v502 = vshrl.u32 %v485, 16
  %v504 = vrot.slane %v502, 7
  %v505 = vshll.u32 %v485, 16
  %v507 = vor.u32 %v504, %v505
  %v508 = vrot.slane %v504, 4
  %v510 = vshrl.u32 %v486, 16
  %v512 = vrot.slane %v510, 7
  %v513 = vshll.u32 %v486, 16
  %v515 = vor.u32 %v512, %v513
  %v516 = vrot.slane %v512, 4
  %v518 = vshrl.u32 %v487, 16
  %v520 = vrot.slane %v518, 7
  %v521 = vshll.u32 %v487, 16
  %v523 = vor.u32 %v520, %v521
  %v524 = vrot.slane %v520, 4
  %v526 = vshrl.u32 %v488, 16
  %v528 = vrot.slane %v526, 7
  %v529 = vshll.u32 %v488, 16
  %v531 = vor.u32 %v528, %v529
  %v532 = vrot.slane %v528, 4
  %v534 = vshrl.u32 %v489, 16
  %v536 = vrot.slane %v534, 7
  %v537 = vshll.u32 %v489, 16
  %v539 = vor.u32 %v536, %v537
  %v540 = vrot.slane %v536, 4
  %v542 = vshrl.u32 %v490, 16
  %v544 = vrot.slane %v542, 7
  %v545 = vshll.u32 %v490, 16
  %v547 = vor.u32 %v544, %v545
  %v548 = vrot.slane %v544, 4
  %v550 = vshrl.u32 %v491, 16
  %v552 = vrot.slane %v550, 7
  %v553 = vshll.u32 %v491, 16
  %v555 = vor.u32 %v552, %v553
  %v556 = vrot.slane %v552, 4
  %v558 = vshrl.u32 %v492, 16
  %v560 = vrot.slane %v558, 7
  %v561 = vshll.u32 %v492, 16
  %v563 = vor.u32 %v560, %v561
  %v564 = vrot.slane %v560, 4
  %v566 = vshrl.u32 %v493, 16
  %v568 = vrot.slane %v566, 7
  %v569 = vshll.u32 %v493, 16
  %v571 = vor.u32 %v568, %v569
  %v572 = vrot.slane %v568, 4
  %v574 = vshrl.u32 %v494, 16
  %v576 = vrot.slane %v574, 7
  %v577 = vshll.u32 %v494, 16
  %v579 = vor.u32 %v576, %v577
  %v580 = vrot.slane %v576, 4
  %v582 = vshrl.u32 %v495, 16
  %v584 = vrot.slane %v582, 7
  %v585 = vshll.u32 %v495, 16
  %v587 = vor.u32 %v584, %v585
  %v588 = vrot.slane %v584, 4
  %v590 = vshrl.u32 %v496, 16
  %v592 = vrot.slane %v590, 7
  %v593 = vshll.u32 %v496, 16
  %v595 = vor.u32 %v592, %v593
  %v596 = vrot.slane %v592, 4
  %v598 = vshrl.u32 %v497, 16
  %v600 = vrot.slane %v598, 7
  %v601 = vshll.u32 %v497, 16
  %v603 = vor.u32 %v600, %v601
  %v604 = vrot.slane %v600, 4
  %v606 = vshrl.u32 %v498, 16
  %v608 = vrot.slane %v606, 7
  %v609 = vshll.u32 %v498, 16
  %v611 = vor.u32 %v608, %v609
  %v612 = vrot.slane %v608, 4
  %v614 = vshrl.u32 %v499, 16
  %v616 = vrot.slane %v614, 7
  %v617 = vshll.u32 %v499, 16
  %v619 = vor.u32 %v616, %v617
  %v620 = vrot.slane %v616, 4
  %v622 = vshrl.u32 %v500, 16
  %v624 = vrot.slane %v622, 7
  %v625 = vshll.u32 %v500, 16
  %v627 = vor.u32 %v624, %v625
  %v628 = vrot.slane %v624, 4
  %s661 = scalar_lea.vmem [#allocation2], 8
  %vm662 = vcmask 781312
  %vm663 = vsmask.f32 7938
  %vm664 = vmand %vm662, %vm663
  %v665 = vld [vmem:[%s661] sm:$0xf]
  %v666 = vsel %vm664, %v507, %v665
  %667 = vst [vmem:[%s661] sm:$0xf] %v666
  %vm668 = vcmask 778240
  %vm669 = vsmask.f32 256
  %vm670 = vmand %vm668, %vm669
  %v671 = vld [vmem:[%s661 + $0x4] sm:$0x1]
  %v672 = vsel %vm670, %v508, %v671
  %673 = vst [vmem:[%s661 + $0x4] sm:$0x1] %v672
  %v674 = vld [vmem:[%s661 + $0x8] sm:$0xf]
  %v675 = vsel %vm664, %v515, %v674
  %676 = vst [vmem:[%s661 + $0x8] sm:$0xf] %v675
  %v677 = vld [vmem:[%s661 + $0xc] sm:$0x1]
  %v678 = vsel %vm670, %v516, %v677
  %679 = vst [vmem:[%s661 + $0xc] sm:$0x1] %v678
  %v680 = vld [vmem:[%s661 + $0x10] sm:$0xf]
  %v681 = vsel %vm664, %v523, %v680
  %682 = vst [vmem:[%s661 + $0x10] sm:$0xf] %v681
  %v683 = vld [vmem:[%s661 + $0x14] sm:$0x1]
  %v684 = vsel %vm670, %v524, %v683
  %685 = vst [vmem:[%s661 + $0x14] sm:$0x1] %v684
  %v686 = vld [vmem:[%s661 + $0x18] sm:$0xf]
  %v687 = vsel %vm664, %v531, %v686
  %688 = vst [vmem:[%s661 + $0x18] sm:$0xf] %v687
  %v689 = vld [vmem:[%s661 + $0x1c] sm:$0x1]
  %v690 = vsel %vm670, %v532, %v689
  %691 = vst [vmem:[%s661 + $0x1c] sm:$0x1] %v690
  %v692 = vld [vmem:[%s661 + $0x20] sm:$0xf]
  %v693 = vsel %vm664, %v539, %v692
  %694 = vst [vmem:[%s661 + $0x20] sm:$0xf] %v693
  %v695 = vld [vmem:[%s661 + $0x24] sm:$0x1]
  %v696 = vsel %vm670, %v540, %v695
  %697 = vst [vmem:[%s661 + $0x24] sm:$0x1] %v696
  %v698 = vld [vmem:[%s661 + $0x28] sm:$0xf]
  %v699 = vsel %vm664, %v547, %v698
  %700 = vst [vmem:[%s661 + $0x28] sm:$0xf] %v699
  %v701 = vld [vmem:[%s661 + $0x2c] sm:$0x1]
  %v702 = vsel %vm670, %v548, %v701
  %703 = vst [vmem:[%s661 + $0x2c] sm:$0x1] %v702
  %v704 = vld [vmem:[%s661 + $0x30] sm:$0xf]
  %v705 = vsel %vm664, %v555, %v704
  %706 = vst [vmem:[%s661 + $0x30] sm:$0xf] %v705
  %v707 = vld [vmem:[%s661 + $0x34] sm:$0x1]
  %v708 = vsel %vm670, %v556, %v707
  %709 = vst [vmem:[%s661 + $0x34] sm:$0x1] %v708
  %v710 = vld [vmem:[%s661 + $0x38] sm:$0xf]
  %v711 = vsel %vm664, %v563, %v710
  %712 = vst [vmem:[%s661 + $0x38] sm:$0xf] %v711
  %v713 = vld [vmem:[%s661 + $0x3c] sm:$0x1]
  %v714 = vsel %vm670, %v564, %v713
  %715 = vst [vmem:[%s661 + $0x3c] sm:$0x1] %v714
  %v716 = vld [vmem:[%s661 + $0x50] sm:$0xf]
  %v717 = vsel %vm664, %v571, %v716
  %718 = vst [vmem:[%s661 + $0x50] sm:$0xf] %v717
  %v719 = vld [vmem:[%s661 + $0x54] sm:$0x1]
  %v720 = vsel %vm670, %v572, %v719
  %721 = vst [vmem:[%s661 + $0x54] sm:$0x1] %v720
  %v722 = vld [vmem:[%s661 + $0x58] sm:$0xf]
  %v723 = vsel %vm664, %v579, %v722
  %724 = vst [vmem:[%s661 + $0x58] sm:$0xf] %v723
  %v725 = vld [vmem:[%s661 + $0x5c] sm:$0x1]
  %v726 = vsel %vm670, %v580, %v725
  %727 = vst [vmem:[%s661 + $0x5c] sm:$0x1] %v726
  %v728 = vld [vmem:[%s661 + $0x60] sm:$0xf]
  %v729 = vsel %vm664, %v587, %v728
  %730 = vst [vmem:[%s661 + $0x60] sm:$0xf] %v729
  %v731 = vld [vmem:[%s661 + $0x64] sm:$0x1]
  %v732 = vsel %vm670, %v588, %v731
  %733 = vst [vmem:[%s661 + $0x64] sm:$0x1] %v732
  %v734 = vld [vmem:[%s661 + $0x68] sm:$0xf]
  %v735 = vsel %vm664, %v595, %v734
  %736 = vst [vmem:[%s661 + $0x68] sm:$0xf] %v735
  %v737 = vld [vmem:[%s661 + $0x6c] sm:$0x1]
  %v738 = vsel %vm670, %v596, %v737
  %739 = vst [vmem:[%s661 + $0x6c] sm:$0x1] %v738
  %v740 = vld [vmem:[%s661 + $0x70] sm:$0xf]
  %v741 = vsel %vm664, %v603, %v740
  %742 = vst [vmem:[%s661 + $0x70] sm:$0xf] %v741
  %v743 = vld [vmem:[%s661 + $0x74] sm:$0x1]
  %v744 = vsel %vm670, %v604, %v743
  %745 = vst [vmem:[%s661 + $0x74] sm:$0x1] %v744
  %v746 = vld [vmem:[%s661 + $0x78] sm:$0xf]
  %v747 = vsel %vm664, %v611, %v746
  %748 = vst [vmem:[%s661 + $0x78] sm:$0xf] %v747
  %v749 = vld [vmem:[%s661 + $0x7c] sm:$0x1]
  %v750 = vsel %vm670, %v612, %v749
  %751 = vst [vmem:[%s661 + $0x7c] sm:$0x1] %v750
  %v752 = vld [vmem:[%s661 + $0x80] sm:$0xf]
  %v753 = vsel %vm664, %v619, %v752
  %754 = vst [vmem:[%s661 + $0x80] sm:$0xf] %v753
  %v755 = vld [vmem:[%s661 + $0x84] sm:$0x1]
  %v756 = vsel %vm670, %v620, %v755
  %757 = vst [vmem:[%s661 + $0x84] sm:$0x1] %v756
  %v758 = vld [vmem:[%s661 + $0x88] sm:$0xf]
  %v759 = vsel %vm664, %v627, %v758
  %760 = vst [vmem:[%s661 + $0x88] sm:$0xf] %v759
  %v761 = vld [vmem:[%s661 + $0x8c] sm:$0x1]
  %v762 = vsel %vm670, %v628, %v761
  %763 = vst [vmem:[%s661 + $0x8c] sm:$0x1] %v762
  %v764 = vld [vmem:[#allocation2] sm:$0xf]
  %v765 = vld [vmem:[#allocation2 + $0x8] sm:$0xf]
  %v766 = vld [vmem:[#allocation2 + $0x10] sm:$0xf]
  %v767 = vld [vmem:[#allocation2 + $0x18] sm:$0xf]
  %v768 = vld [vmem:[#allocation2 + $0x20] sm:$0xf]
  %v769 = vld [vmem:[#allocation2 + $0x28] sm:$0xf]
  %v770 = vld [vmem:[#allocation2 + $0x30] sm:$0xf]
  %v771 = vld [vmem:[#allocation2 + $0x38] sm:$0xf]
  %v772 = vld [vmem:[#allocation2 + $0x50] sm:$0xf]
  %v773 = vld [vmem:[#allocation2 + $0x58] sm:$0xf]
  %v774 = vld [vmem:[#allocation2 + $0x60] sm:$0xf]
  %v775 = vld [vmem:[#allocation2 + $0x68] sm:$0xf]
  %v776 = vld [vmem:[#allocation2 + $0x70] sm:$0xf]
  %v777 = vld [vmem:[#allocation2 + $0x78] sm:$0xf]
  %v778 = vld [vmem:[#allocation2 + $0x80] sm:$0xf]
  %v779 = vld [vmem:[#allocation2 + $0x88] sm:$0xf]
  %v780 = vld [vmem:[%s5] sm:$0xf]
  %v781 = vld [vmem:[%s5 + $0x4] sm:$0xf]
  %v782 = vld [vmem:[%s5 + $0x8] sm:$0xf]
  %v783 = vld [vmem:[%s5 + $0xc] sm:$0xf]
  %v784 = vld [vmem:[%s5 + $0x10] sm:$0xf]
  %v785 = vld [vmem:[%s5 + $0x14] sm:$0xf]
  %v786 = vld [vmem:[%s5 + $0x18] sm:$0xf]
  %v787 = vld [vmem:[%s5 + $0x1c] sm:$0xf]
  %v788 = vld [vmem:[%s5 + $0x20] sm:$0xf]
  %v789 = vld [vmem:[%s5 + $0x24] sm:$0xf]
  %v790 = vld [vmem:[%s5 + $0x28] sm:$0xf]
  %v791 = vld [vmem:[%s5 + $0x2c] sm:$0xf]
  %v792 = vld [vmem:[#allocation2 + $0x4] sm:$0x1]
  %v793 = vld [vmem:[#allocation2 + $0xc] sm:$0x1]
  %v794 = vld [vmem:[#allocation2 + $0x14] sm:$0x1]
  %v795 = vld [vmem:[#allocation2 + $0x1c] sm:$0x1]
  %v796 = vld [vmem:[#allocation2 + $0x24] sm:$0x1]
  %v797 = vld [vmem:[#allocation2 + $0x2c] sm:$0x1]
  %v798 = vld [vmem:[#allocation2 + $0x34] sm:$0x1]
  %v799 = vld [vmem:[#allocation2 + $0x3c] sm:$0x1]
  %v800 = vld [vmem:[#allocation2 + $0x54] sm:$0x1]
  %v801 = vld [vmem:[#allocation2 + $0x5c] sm:$0x1]
  %v802 = vld [vmem:[#allocation2 + $0x64] sm:$0x1]
  %v803 = vld [vmem:[#allocation2 + $0x6c] sm:$0x1]
  %v804 = vld [vmem:[#allocation2 + $0x74] sm:$0x1]
  %v805 = vld [vmem:[#allocation2 + $0x7c] sm:$0x1]
  %v806 = vld [vmem:[#allocation2 + $0x84] sm:$0x1]
  %v807 = vld [vmem:[#allocation2 + $0x8c] sm:$0x1]
  %vm808 = vsmask.f32 3328
  %vm809 = vsmask.f32 7440
  %vm810 = vmor %vm808, %vm809
  %v812 = vshrl.u32 %v764, 16
  %v814 = vrot.slane %v812, 4
  %v815 = vshll.u32 %v764, 16
  %v817 = vrot.slane %v815, 5
  %v818 = vor.u32 %v814, %v817
  %v819 = vrot.slane %v818, 4
  %v821 = vshll.u32 %v792, 16
  %v823 = vrot.slane %v821, 5
  %v824 = vsel %vm810, %v819, %v823
  %v826 = vshrl.u32 %v765, 16
  %v828 = vrot.slane %v826, 4
  %v829 = vshll.u32 %v765, 16
  %v831 = vrot.slane %v829, 5
  %v832 = vor.u32 %v828, %v831
  %v833 = vrot.slane %v832, 4
  %v835 = vshll.u32 %v793, 16
  %v837 = vrot.slane %v835, 5
  %v838 = vsel %vm810, %v833, %v837
  %v840 = vshrl.u32 %v766, 16
  %v842 = vrot.slane %v840, 4
  %v843 = vshll.u32 %v766, 16
  %v845 = vrot.slane %v843, 5
  %v846 = vor.u32 %v842, %v845
  %v847 = vrot.slane %v846, 4
  %v849 = vshll.u32 %v794, 16
  %v851 = vrot.slane %v849, 5
  %v852 = vsel %vm810, %v847, %v851
  %v854 = vshrl.u32 %v767, 16
  %v856 = vrot.slane %v854, 4
  %v857 = vshll.u32 %v767, 16
  %v859 = vrot.slane %v857, 5
  %v860 = vor.u32 %v856, %v859
  %v861 = vrot.slane %v860, 4
  %v863 = vshll.u32 %v795, 16
  %v865 = vrot.slane %v863, 5
  %v866 = vsel %vm810, %v861, %v865
  %v868 = vshrl.u32 %v768, 16
  %v870 = vrot.slane %v868, 4
  %v871 = vshll.u32 %v768, 16
  %v873 = vrot.slane %v871, 5
  %v874 = vor.u32 %v870, %v873
  %v875 = vrot.slane %v874, 4
  %v877 = vshll.u32 %v796, 16
  %v879 = vrot.slane %v877, 5
  %v880 = vsel %vm810, %v875, %v879
  %v882 = vshrl.u32 %v769, 16
  %v884 = vrot.slane %v882, 4
  %v885 = vshll.u32 %v769, 16
  %v887 = vrot.slane %v885, 5
  %v888 = vor.u32 %v884, %v887
  %v889 = vrot.slane %v888, 4
  %v891 = vshll.u32 %v797, 16
  %v893 = vrot.slane %v891, 5
  %v894 = vsel %vm810, %v889, %v893
  %v896 = vshrl.u32 %v770, 16
  %v898 = vrot.slane %v896, 4
  %v899 = vshll.u32 %v770, 16
  %v901 = vrot.slane %v899, 5
  %v902 = vor.u32 %v898, %v901
  %v903 = vrot.slane %v902, 4
  %v905 = vshll.u32 %v798, 16
  %v907 = vrot.slane %v905, 5
  %v908 = vsel %vm810, %v903, %v907
  %v910 = vshrl.u32 %v771, 16
  %v912 = vrot.slane %v910, 4
  %v913 = vshll.u32 %v771, 16
  %v915 = vrot.slane %v913, 5
  %v916 = vor.u32 %v912, %v915
  %v917 = vrot.slane %v916, 4
  %v919 = vshll.u32 %v799, 16
  %v921 = vrot.slane %v919, 5
  %v922 = vsel %vm810, %v917, %v921
  %v924 = vshrl.u32 %v772, 16
  %v926 = vrot.slane %v924, 4
  %v927 = vshll.u32 %v772, 16
  %v929 = vrot.slane %v927, 5
  %v930 = vor.u32 %v926, %v929
  %v931 = vrot.slane %v930, 4
  %v933 = vshll.u32 %v800, 16
  %v935 = vrot.slane %v933, 5
  %v936 = vsel %vm810, %v931, %v935
  %v938 = vshrl.u32 %v773, 16
  %v940 = vrot.slane %v938, 4
  %v941 = vshll.u32 %v773, 16
  %v943 = vrot.slane %v941, 5
  %v944 = vor.u32 %v940, %v943
  %v945 = vrot.slane %v944, 4
  %v947 = vshll.u32 %v801, 16
  %v949 = vrot.slane %v947, 5
  %v950 = vsel %vm810, %v945, %v949
  %v952 = vshrl.u32 %v774, 16
  %v954 = vrot.slane %v952, 4
  %v955 = vshll.u32 %v774, 16
  %v957 = vrot.slane %v955, 5
  %v958 = vor.u32 %v954, %v957
  %v959 = vrot.slane %v958, 4
  %v961 = vshll.u32 %v802, 16
  %v963 = vrot.slane %v961, 5
  %v964 = vsel %vm810, %v959, %v963
  %v966 = vshrl.u32 %v775, 16
  %v968 = vrot.slane %v966, 4
  %v969 = vshll.u32 %v775, 16
  %v971 = vrot.slane %v969, 5
  %v972 = vor.u32 %v968, %v971
  %v973 = vrot.slane %v972, 4
  %v975 = vshll.u32 %v803, 16
  %v977 = vrot.slane %v975, 5
  %v978 = vsel %vm810, %v973, %v977
  %v980 = vshrl.u32 %v776, 16
  %v982 = vrot.slane %v980, 4
  %v983 = vshll.u32 %v776, 16
  %v985 = vrot.slane %v983, 5
  %v986 = vor.u32 %v982, %v985
  %v987 = vrot.slane %v986, 4
  %v989 = vshll.u32 %v804, 16
  %v991 = vrot.slane %v989, 5
  %v992 = vsel %vm810, %v987, %v991
  %v994 = vshrl.u32 %v777, 16
  %v996 = vrot.slane %v994, 4
  %v997 = vshll.u32 %v777, 16
  %v999 = vrot.slane %v997, 5
  %v1000 = vor.u32 %v996, %v999
  %v1001 = vrot.slane %v1000, 4
  %v1003 = vshll.u32 %v805, 16
  %v1005 = vrot.slane %v1003, 5
  %v1006 = vsel %vm810, %v1001, %v1005
  %v1008 = vshrl.u32 %v778, 16
  %v1010 = vrot.slane %v1008, 4
  %v1011 = vshll.u32 %v778, 16
  %v1013 = vrot.slane %v1011, 5
  %v1014 = vor.u32 %v1010, %v1013
  %v1015 = vrot.slane %v1014, 4
  %v1017 = vshll.u32 %v806, 16
  %v1019 = vrot.slane %v1017, 5
  %v1020 = vsel %vm810, %v1015, %v1019
  %v1022 = vshrl.u32 %v779, 16
  %v1024 = vrot.slane %v1022, 4
  %v1025 = vshll.u32 %v779, 16
  %v1027 = vrot.slane %v1025, 5
  %v1028 = vor.u32 %v1024, %v1027
  %v1029 = vrot.slane %v1028, 4
  %v1031 = vshll.u32 %v807, 16
  %v1033 = vrot.slane %v1031, 5
  %v1034 = vsel %vm810, %v1029, %v1033
  %v1035 = vld [vmem:[%s5 + $0x30] sm:$0xf]
  %v1036 = vld [vmem:[%s5 + $0x34] sm:$0xf]
  %v1037 = vld [vmem:[%s5 + $0x38] sm:$0xf]
  %v1038 = vld [vmem:[%s5 + $0x3c] sm:$0xf]
  %v1039 = vld [vmem:[%s5 + $0x40] sm:$0xf]
  %v1040 = vld [vmem:[%s5 + $0x44] sm:$0xf]
  %v1041 = vld [vmem:[%s5 + $0x48] sm:$0xf]
  %v1042 = vld [vmem:[%s5 + $0x4c] sm:$0xf]
  %v1043 = vld [vmem:[%s5 + $0x50] sm:$0xf]
  %v1044 = vld [vmem:[%s5 + $0x54] sm:$0xf]
  %v1045 = vld [vmem:[%s5 + $0x58] sm:$0xf]
  %v1046 = vld [vmem:[%s5 + $0x5c] sm:$0xf]
  %v1047 = vunpack.c.l.b16 %v824
  %v1048 = vunpack.c.l.b16 %v838
  %v1049 = vunpack.c.l.b16 %v852
  %v1050 = vunpack.c.l.b16 %v866
  %v1051 = vunpack.c.l.b16 %v880
  %v1052 = vunpack.c.l.b16 %v894
  %v1053 = vunpack.c.l.b16 %v908
  %v1054 = vunpack.c.l.b16 %v922
  %v1055 = vunpack.c.l.b16 %v936
  %v1056 = vunpack.c.l.b16 %v950
  %v1057 = vunpack.c.l.b16 %v964
  %v1058 = vunpack.c.l.b16 %v978
  %v1059 = vunpack.c.l.b16 %v992
  %v1060 = vunpack.c.l.b16 %v1006
  %v1061 = vunpack.c.l.b16 %v1020
  %v1062 = vunpack.c.l.b16 %v1034
  %v1063 = vpack.c.b16 %v1048, %v1047
  %v1064 = vpack.c.b16 %v1050, %v1049
  %v1065 = vpack.c.b16 %v1052, %v1051
  %v1066 = vpack.c.b16 %v1054, %v1053
  %v1067 = vpack.c.b16 %v1056, %v1055
  %v1068 = vpack.c.b16 %v1058, %v1057
  %v1069 = vpack.c.b16 %v1060, %v1059
  %v1070 = vpack.c.b16 %v1062, %v1061
  %v1083 = vunpack.c.l.b16 %v1035
  %v1084 = vunpack.c.l.b16 %v1036
  %v1085 = vunpack.c.l.b16 %v1037
  %v1086 = vunpack.c.l.b16 %v1038
  %v1087 = vunpack.c.l.b16 %v1039
  %v1088 = vunpack.c.l.b16 %v1040
  %v1089 = vunpack.c.l.b16 %v1041
  %v1090 = vunpack.c.l.b16 %v1042
  %v1091 = vunpack.c.l.b16 %v1043
  %v1092 = vunpack.c.l.b16 %v1044
  %v1093 = vunpack.c.l.b16 %v1045
  %v1094 = vunpack.c.l.b16 %v1046
  %v1095 = vpack.c.b16 %v1084, %v1083
  %v1096 = vpack.c.b16 %v1086, %v1085
  %v1097 = vpack.c.b16 %v1088, %v1087
  %v1098 = vpack.c.b16 %v1090, %v1089
  %v1099 = vpack.c.b16 %v1092, %v1091
  %v1100 = vpack.c.b16 %v1094, %v1093
  %vm1107 = vcmask 785408
  %v1109 = vsel %vm1107, %v1063, 0
  %v1112 = vsel %vm1107, %v1064, 0
  %v1115 = vsel %vm1107, %v1065, 0
  %v1118 = vsel %vm1107, %v1066, 0
  %v1121 = vsel %vm1107, %v1067, 0
  %v1124 = vsel %vm1107, %v1068, 0
  %v1127 = vsel %vm1107, %v1069, 0
  %v1130 = vsel %vm1107, %v1070, 0
  %1132 = vmatprep.subr.bf16.mxu0 0
  %1133 = vmatpush1.bf16.msra.mxu0 %v1095
  %1134 = vmatprep.subr.bf16.mxu0 0
  %1135 = vmatpush1.bf16.msra.mxu0 %v1096
  %1136 = vmatprep.subr.bf16.mxu0 0
  %1137 = vmatpush1.bf16.msra.mxu0 %v1097
  %1138 = vmatprep.subr.bf16.mxu0 0
  %1139 = vmatpush1.bf16.msra.mxu0 %v1098
  %1140 = vmatprep.subr.bf16.mxu0 0
  %1141 = vmatpush1.bf16.msra.mxu0 %v1099
  %1142 = vmatprep.subr.bf16.mxu0 0
  %1143 = vmatpush1.bf16.msra.mxu0 %v1100
  %1144 = vmatprep.subr.bf16.mxu0 0
  %1145 = vmatpush1.bf16.msra.mxu0 0
  %1146 = vmatprep.subr.bf16.mxu0 0
  %1147 = vmatpush1.bf16.msra.mxu0 0
  %1148 = vmatprep.subr.bf16.mxu0 0
  %1149 = vmatpush1.bf16.msra.mxu0 0
  %1150 = vmatprep.subr.bf16.mxu0 0
  %1151 = vmatpush1.bf16.msra.mxu0 0
  %1152 = vmatprep.subr.bf16.mxu0 0
  %1153 = vmatpush1.bf16.msra.mxu0 0
  %1154 = vmatprep.subr.bf16.mxu0 0
  %1155 = vmatpush1.bf16.msra.mxu0 0
  %1156 = vmatprep.subr.bf16.mxu0 0
  %1157 = vmatpush1.bf16.msra.mxu0 0
  %1158 = vmatprep.subr.bf16.mxu0 0
  %1159 = vmatpush1.bf16.msra.mxu0 0
  %1160 = vmatprep.subr.bf16.mxu0 0
  %1161 = vmatpush1.bf16.msra.mxu0 0
  %1162 = vmatprep.subr.bf16.mxu0 0
  %1163 = vmatpush1.bf16.msra.mxu0 0
  %1164 = vmatprep.mubr.bf16.mxu0 0
  %1165 = vmatmul.mubr.bf16.gmra.mrb[0].mxu0 %v1109
  %v1166 = vpop.f32.mrb[0].mxu0
  %v1167 = vadd.f32 0.0, %v1166
  %v1168 = vpop.f32.mrb[0].mxu0
  %v1169 = vpop.f32.mrb[0].mxu0
  %v1170 = vadd.f32 0.0, %v1169
  %v1171 = vpop.f32.mrb[0].mxu0
  %1172 = vmatprep.mubr.bf16.mxu0 0
  %1173 = vmatmul.mubr.bf16.gmra.mrb[0].mxu0 %v1112
  %v1174 = vpop.f32.mrb[0].mxu0
  %v1175 = vadd.f32 0.0, %v1174
  %v1176 = vpop.f32.mrb[0].mxu0
  %v1177 = vpop.f32.mrb[0].mxu0
  %v1178 = vadd.f32 0.0, %v1177
  %v1179 = vpop.f32.mrb[0].mxu0
  %1180 = vmatprep.mubr.bf16.mxu0 0
  %1181 = vmatmul.mubr.bf16.gmra.mrb[0].mxu0 %v1115
  %v1182 = vpop.f32.mrb[0].mxu0
  %v1183 = vadd.f32 0.0, %v1182
  %v1184 = vpop.f32.mrb[0].mxu0
  %v1185 = vpop.f32.mrb[0].mxu0
  %v1186 = vadd.f32 0.0, %v1185
  %v1187 = vpop.f32.mrb[0].mxu0
  %1188 = vmatprep.mubr.bf16.mxu0 0
  %1189 = vmatmul.mubr.bf16.gmra.mrb[0].mxu0 %v1118
  %v1190 = vpop.f32.mrb[0].mxu0
  %v1191 = vadd.f32 0.0, %v1190
  %v1192 = vpop.f32.mrb[0].mxu0
  %v1193 = vpop.f32.mrb[0].mxu0
  %v1194 = vadd.f32 0.0, %v1193
  %v1195 = vpop.f32.mrb[0].mxu0
  %1196 = vmatprep.mubr.bf16.mxu0 0
  %1197 = vmatmul.mubr.bf16.gmra.mrb[0].mxu0 %v1121
  %v1198 = vpop.f32.mrb[0].mxu0
  %v1199 = vadd.f32 0.0, %v1198
  %v1200 = vpop.f32.mrb[0].mxu0
  %v1201 = vpop.f32.mrb[0].mxu0
  %v1202 = vadd.f32 0.0, %v1201
  %v1203 = vpop.f32.mrb[0].mxu0
  %1204 = vmatprep.mubr.bf16.mxu0 0
  %1205 = vmatmul.mubr.bf16.gmra.mrb[0].mxu0 %v1124
  %v1206 = vpop.f32.mrb[0].mxu0
  %v1207 = vadd.f32 0.0, %v1206
  %v1208 = vpop.f32.mrb[0].mxu0
  %v1209 = vpop.f32.mrb[0].mxu0
  %v1210 = vadd.f32 0.0, %v1209
  %v1211 = vpop.f32.mrb[0].mxu0
  %1212 = vmatprep.mubr.bf16.mxu0 0
  %1213 = vmatmul.mubr.bf16.gmra.mrb[0].mxu0 %v1127
  %v1214 = vpop.f32.mrb[0].mxu0
  %v1215 = vadd.f32 0.0, %v1214
  %v1216 = vpop.f32.mrb[0].mxu0
  %v1217 = vpop.f32.mrb[0].mxu0
  %v1218 = vadd.f32 0.0, %v1217
  %v1219 = vpop.f32.mrb[0].mxu0
  %1220 = vmatprep.mubr.bf16.mxu0 0
  %1221 = vmatmul.mubr.bf16.gmra.mrb[0].mxu0 %v1130
  %v1222 = vpop.f32.mrb[0].mxu0
  %v1223 = vadd.f32 0.0, %v1222
  %v1224 = vpop.f32.mrb[0].mxu0
  %v1225 = vpop.f32.mrb[0].mxu0
  %v1226 = vadd.f32 0.0, %v1225
  %v1227 = vpop.f32.mrb[0].mxu0
  %1228 = vdwg.mxu0
  %v1245 = vunpack.c.l.b16 %v764
  %v1246 = vunpack.c.l.b16 %v765
  %v1247 = vunpack.c.l.b16 %v766
  %v1248 = vunpack.c.l.b16 %v767
  %v1249 = vunpack.c.l.b16 %v768
  %v1250 = vunpack.c.l.b16 %v769
  %v1251 = vunpack.c.l.b16 %v770
  %v1252 = vunpack.c.l.b16 %v771
  %v1253 = vunpack.c.l.b16 %v772
  %v1254 = vunpack.c.l.b16 %v773
  %v1255 = vunpack.c.l.b16 %v774
  %v1256 = vunpack.c.l.b16 %v775
  %v1257 = vunpack.c.l.b16 %v776
  %v1258 = vunpack.c.l.b16 %v777
  %v1259 = vunpack.c.l.b16 %v778
  %v1260 = vunpack.c.l.b16 %v779
  %v1261 = vpack.c.b16 %v1246, %v1245
  %v1262 = vpack.c.b16 %v1248, %v1247
  %v1263 = vpack.c.b16 %v1250, %v1249
  %v1264 = vpack.c.b16 %v1252, %v1251
  %v1265 = vpack.c.b16 %v1254, %v1253
  %v1266 = vpack.c.b16 %v1256, %v1255
  %v1267 = vpack.c.b16 %v1258, %v1257
  %v1268 = vpack.c.b16 %v1260, %v1259
  %v1281 = vunpack.c.l.b16 %v780
  %v1282 = vunpack.c.l.b16 %v781
  %v1283 = vunpack.c.l.b16 %v782
  %v1284 = vunpack.c.l.b16 %v783
  %v1285 = vunpack.c.l.b16 %v784
  %v1286 = vunpack.c.l.b16 %v785
  %v1287 = vunpack.c.l.b16 %v786
  %v1288 = vunpack.c.l.b16 %v787
  %v1289 = vunpack.c.l.b16 %v788
  %v1290 = vunpack.c.l.b16 %v789
  %v1291 = vunpack.c.l.b16 %v790
  %v1292 = vunpack.c.l.b16 %v791
  %v1293 = vpack.c.b16 %v1282, %v1281
  %v1294 = vpack.c.b16 %v1284, %v1283
  %v1295 = vpack.c.b16 %v1286, %v1285
  %v1296 = vpack.c.b16 %v1288, %v1287
  %v1297 = vpack.c.b16 %v1290, %v1289
  %v1298 = vpack.c.b16 %v1292, %v1291
  %v1306 = vsel %vm1107, %v1261, 0
  %v1309 = vsel %vm1107, %v1262, 0
  %v1312 = vsel %vm1107, %v1263, 0
  %v1315 = vsel %vm1107, %v1264, 0
  %v1318 = vsel %vm1107, %v1265, 0
  %v1321 = vsel %vm1107, %v1266, 0
  %v1324 = vsel %vm1107, %v1267, 0
  %v1327 = vsel %vm1107, %v1268, 0
  %1329 = vmatprep.subr.bf16.mxu0 0
  %1330 = vmatpush1.bf16.msra.mxu0 %v1293
  %1331 = vmatprep.subr.bf16.mxu0 0
  %1332 = vmatpush1.bf16.msra.mxu0 %v1294
  %1333 = vmatprep.subr.bf16.mxu0 0
  %1334 = vmatpush1.bf16.msra.mxu0 %v1295
  %1335 = vmatprep.subr.bf16.mxu0 0
  %1336 = vmatpush1.bf16.msra.mxu0 %v1296
  %1337 = vmatprep.subr.bf16.mxu0 0
  %1338 = vmatpush1.bf16.msra.mxu0 %v1297
  %1339 = vmatprep.subr.bf16.mxu0 0
  %1340 = vmatpush1.bf16.msra.mxu0 %v1298
  %1341 = vmatprep.subr.bf16.mxu0 0
  %1342 = vmatpush1.bf16.msra.mxu0 0
  %1343 = vmatprep.subr.bf16.mxu0 0
  %1344 = vmatpush1.bf16.msra.mxu0 0
  %1345 = vmatprep.subr.bf16.mxu0 0
  %1346 = vmatpush1.bf16.msra.mxu0 0
  %1347 = vmatprep.subr.bf16.mxu0 0
  %1348 = vmatpush1.bf16.msra.mxu0 0
  %1349 = vmatprep.subr.bf16.mxu0 0
  %1350 = vmatpush1.bf16.msra.mxu0 0
  %1351 = vmatprep.subr.bf16.mxu0 0
  %1352 = vmatpush1.bf16.msra.mxu0 0
  %1353 = vmatprep.subr.bf16.mxu0 0
  %1354 = vmatpush1.bf16.msra.mxu0 0
  %1355 = vmatprep.subr.bf16.mxu0 0
  %1356 = vmatpush1.bf16.msra.mxu0 0
  %1357 = vmatprep.subr.bf16.mxu0 0
  %1358 = vmatpush1.bf16.msra.mxu0 0
  %1359 = vmatprep.subr.bf16.mxu0 0
  %1360 = vmatpush1.bf16.msra.mxu0 0
  %1361 = vmatprep.mubr.bf16.mxu0 0
  %1362 = vmatmul.mubr.bf16.gmra.mrb[0].mxu0 %v1306
  %v1363 = vpop.f32.mrb[0].mxu0
  %v1364 = vadd.f32 %v1167, %v1363
  %v1365 = vpop.f32.mrb[0].mxu0
  %v1366 = vpop.f32.mrb[0].mxu0
  %v1367 = vadd.f32 %v1170, %v1366
  %v1368 = vpop.f32.mrb[0].mxu0
  %1369 = vmatprep.mubr.bf16.mxu0 0
  %1370 = vmatmul.mubr.bf16.gmra.mrb[0].mxu0 %v1309
  %v1371 = vpop.f32.mrb[0].mxu0
  %v1372 = vadd.f32 %v1175, %v1371
  %v1373 = vpop.f32.mrb[0].mxu0
  %v1374 = vpop.f32.mrb[0].mxu0
  %v1375 = vadd.f32 %v1178, %v1374
  %v1376 = vpop.f32.mrb[0].mxu0
  %1377 = vmatprep.mubr.bf16.mxu0 0
  %1378 = vmatmul.mubr.bf16.gmra.mrb[0].mxu0 %v1312
  %v1379 = vpop.f32.mrb[0].mxu0
  %v1380 = vadd.f32 %v1183, %v1379
  %v1381 = vpop.f32.mrb[0].mxu0
  %v1382 = vpop.f32.mrb[0].mxu0
  %v1383 = vadd.f32 %v1186, %v1382
  %v1384 = vpop.f32.mrb[0].mxu0
  %1385 = vmatprep.mubr.bf16.mxu0 0
  %1386 = vmatmul.mubr.bf16.gmra.mrb[0].mxu0 %v1315
  %v1387 = vpop.f32.mrb[0].mxu0
  %v1388 = vadd.f32 %v1191, %v1387
  %v1389 = vpop.f32.mrb[0].mxu0
  %v1390 = vpop.f32.mrb[0].mxu0
  %v1391 = vadd.f32 %v1194, %v1390
  %v1392 = vpop.f32.mrb[0].mxu0
  %1393 = vmatprep.mubr.bf16.mxu0 0
  %1394 = vmatmul.mubr.bf16.gmra.mrb[0].mxu0 %v1318
  %v1395 = vpop.f32.mrb[0].mxu0
  %v1396 = vadd.f32 %v1199, %v1395
  %v1397 = vpop.f32.mrb[0].mxu0
  %v1398 = vpop.f32.mrb[0].mxu0
  %v1399 = vadd.f32 %v1202, %v1398
  %v1400 = vpop.f32.mrb[0].mxu0
  %1401 = vmatprep.mubr.bf16.mxu0 0
  %1402 = vmatmul.mubr.bf16.gmra.mrb[0].mxu0 %v1321
  %v1403 = vpop.f32.mrb[0].mxu0
  %v1404 = vadd.f32 %v1207, %v1403
  %v1405 = vpop.f32.mrb[0].mxu0
  %v1406 = vpop.f32.mrb[0].mxu0
  %v1407 = vadd.f32 %v1210, %v1406
  %v1408 = vpop.f32.mrb[0].mxu0
  %1409 = vmatprep.mubr.bf16.mxu0 0
  %1410 = vmatmul.mubr.bf16.gmra.mrb[0].mxu0 %v1324
  %v1411 = vpop.f32.mrb[0].mxu0
  %v1412 = vadd.f32 %v1215, %v1411
  %v1413 = vpop.f32.mrb[0].mxu0
  %v1414 = vpop.f32.mrb[0].mxu0
  %v1415 = vadd.f32 %v1218, %v1414
  %v1416 = vpop.f32.mrb[0].mxu0
  %1417 = vmatprep.mubr.bf16.mxu0 0
  %1418 = vmatmul.mubr.bf16.gmra.mrb[0].mxu0 %v1327
  %v1419 = vpop.f32.mrb[0].mxu0
  %v1420 = vadd.f32 %v1223, %v1419
  %v1421 = vpop.f32.mrb[0].mxu0
  %v1422 = vpop.f32.mrb[0].mxu0
  %v1423 = vadd.f32 %v1226, %v1422
  %v1424 = vpop.f32.mrb[0].mxu0
  %1425 = vdwg.mxu0
  %v1426 = vld [vmem:[#allocation2] sm:$0xe]
  %v1427 = vld [vmem:[#allocation2 + $0x8] sm:$0xe]
  %v1428 = vld [vmem:[#allocation2 + $0x10] sm:$0xe]
  %v1429 = vld [vmem:[#allocation2 + $0x18] sm:$0xe]
  %v1430 = vld [vmem:[#allocation2 + $0x20] sm:$0xe]
  %v1431 = vld [vmem:[#allocation2 + $0x28] sm:$0xe]
  %v1432 = vld [vmem:[#allocation2 + $0x30] sm:$0xe]
  %v1433 = vld [vmem:[#allocation2 + $0x38] sm:$0xe]
  %v1434 = vld [vmem:[#allocation2 + $0x50] sm:$0xe]
  %v1435 = vld [vmem:[#allocation2 + $0x58] sm:$0xe]
  %v1436 = vld [vmem:[#allocation2 + $0x60] sm:$0xe]
  %v1437 = vld [vmem:[#allocation2 + $0x68] sm:$0xe]
  %v1438 = vld [vmem:[#allocation2 + $0x70] sm:$0xe]
  %v1439 = vld [vmem:[#allocation2 + $0x78] sm:$0xe]
  %v1440 = vld [vmem:[#allocation2 + $0x80] sm:$0xe]
  %v1441 = vld [vmem:[#allocation2 + $0x88] sm:$0xe]
  %vm1474 = vcmask 1042432
  %vm1475 = vcmask 1046532
  %vm1476 = vmor %vm1474, %vm1475
  %v1477 = vrot.slane %v1426, 5
  %v1478 = vrot.slane %v1477, 4
  %v1479 = vrot.slane %v792, 5
  %v1480 = vsel %vm1476, %v1478, %v1479
  %v1481 = vrot.slane %v1427, 5
  %v1482 = vrot.slane %v1481, 4
  %v1483 = vrot.slane %v793, 5
  %v1484 = vsel %vm1476, %v1482, %v1483
  %v1485 = vrot.slane %v1428, 5
  %v1486 = vrot.slane %v1485, 4
  %v1487 = vrot.slane %v794, 5
  %v1488 = vsel %vm1476, %v1486, %v1487
  %v1489 = vrot.slane %v1429, 5
  %v1490 = vrot.slane %v1489, 4
  %v1491 = vrot.slane %v795, 5
  %v1492 = vsel %vm1476, %v1490, %v1491
  %v1493 = vrot.slane %v1430, 5
  %v1494 = vrot.slane %v1493, 4
  %v1495 = vrot.slane %v796, 5
  %v1496 = vsel %vm1476, %v1494, %v1495
  %v1497 = vrot.slane %v1431, 5
  %v1498 = vrot.slane %v1497, 4
  %v1499 = vrot.slane %v797, 5
  %v1500 = vsel %vm1476, %v1498, %v1499
  %v1501 = vrot.slane %v1432, 5
  %v1502 = vrot.slane %v1501, 4
  %v1503 = vrot.slane %v798, 5
  %v1504 = vsel %vm1476, %v1502, %v1503
  %v1505 = vrot.slane %v1433, 5
  %v1506 = vrot.slane %v1505, 4
  %v1507 = vrot.slane %v799, 5
  %v1508 = vsel %vm1476, %v1506, %v1507
  %v1509 = vrot.slane %v1434, 5
  %v1510 = vrot.slane %v1509, 4
  %v1511 = vrot.slane %v800, 5
  %v1512 = vsel %vm1476, %v1510, %v1511
  %v1513 = vrot.slane %v1435, 5
  %v1514 = vrot.slane %v1513, 4
  %v1515 = vrot.slane %v801, 5
  %v1516 = vsel %vm1476, %v1514, %v1515
  %v1517 = vrot.slane %v1436, 5
  %v1518 = vrot.slane %v1517, 4
  %v1519 = vrot.slane %v802, 5
  %v1520 = vsel %vm1476, %v1518, %v1519
  %v1521 = vrot.slane %v1437, 5
  %v1522 = vrot.slane %v1521, 4
  %v1523 = vrot.slane %v803, 5
  %v1524 = vsel %vm1476, %v1522, %v1523
  %v1525 = vrot.slane %v1438, 5
  %v1526 = vrot.slane %v1525, 4
  %v1527 = vrot.slane %v804, 5
  %v1528 = vsel %vm1476, %v1526, %v1527
  %v1529 = vrot.slane %v1439, 5
  %v1530 = vrot.slane %v1529, 4
  %v1531 = vrot.slane %v805, 5
  %v1532 = vsel %vm1476, %v1530, %v1531
  %v1533 = vrot.slane %v1440, 5
  %v1534 = vrot.slane %v1533, 4
  %v1535 = vrot.slane %v806, 5
  %v1536 = vsel %vm1476, %v1534, %v1535
  %v1537 = vrot.slane %v1441, 5
  %v1538 = vrot.slane %v1537, 4
  %v1539 = vrot.slane %v807, 5
  %v1540 = vsel %vm1476, %v1538, %v1539
  %v1541 = vld [vmem:[%s5 + $0x60] sm:$0xf]
  %v1542 = vld [vmem:[%s5 + $0x64] sm:$0xf]
  %v1543 = vld [vmem:[%s5 + $0x68] sm:$0xf]
  %v1544 = vld [vmem:[%s5 + $0x6c] sm:$0xf]
  %v1545 = vld [vmem:[%s5 + $0x70] sm:$0xf]
  %v1546 = vld [vmem:[%s5 + $0x74] sm:$0xf]
  %v1547 = vld [vmem:[%s5 + $0x78] sm:$0xf]
  %v1548 = vld [vmem:[%s5 + $0x7c] sm:$0xf]
  %v1549 = vld [vmem:[%s5 + $0x80] sm:$0xf]
  %v1550 = vld [vmem:[%s5 + $0x84] sm:$0xf]
  %v1551 = vld [vmem:[%s5 + $0x88] sm:$0xf]
  %v1552 = vld [vmem:[%s5 + $0x8c] sm:$0xf]
  %v1553 = vunpack.c.l.b16 %v1480
  %v1554 = vunpack.c.l.b16 %v1484
  %v1555 = vunpack.c.l.b16 %v1488
  %v1556 = vunpack.c.l.b16 %v1492
  %v1557 = vunpack.c.l.b16 %v1496
  %v1558 = vunpack.c.l.b16 %v1500
  %v1559 = vunpack.c.l.b16 %v1504
  %v1560 = vunpack.c.l.b16 %v1508
  %v1561 = vunpack.c.l.b16 %v1512
  %v1562 = vunpack.c.l.b16 %v1516
  %v1563 = vunpack.c.l.b16 %v1520
  %v1564 = vunpack.c.l.b16 %v1524
  %v1565 = vunpack.c.l.b16 %v1528
  %v1566 = vunpack.c.l.b16 %v1532
  %v1567 = vunpack.c.l.b16 %v1536
  %v1568 = vunpack.c.l.b16 %v1540
  %v1569 = vpack.c.b16 %v1554, %v1553
  %v1570 = vpack.c.b16 %v1556, %v1555
  %v1571 = vpack.c.b16 %v1558, %v1557
  %v1572 = vpack.c.b16 %v1560, %v1559
  %v1573 = vpack.c.b16 %v1562, %v1561
  %v1574 = vpack.c.b16 %v1564, %v1563
  %v1575 = vpack.c.b16 %v1566, %v1565
  %v1576 = vpack.c.b16 %v1568, %v1567
  %v1589 = vunpack.c.l.b16 %v1541
  %v1590 = vunpack.c.l.b16 %v1542
  %v1591 = vunpack.c.l.b16 %v1543
  %v1592 = vunpack.c.l.b16 %v1544
  %v1593 = vunpack.c.l.b16 %v1545
  %v1594 = vunpack.c.l.b16 %v1546
  %v1595 = vunpack.c.l.b16 %v1547
  %v1596 = vunpack.c.l.b16 %v1548
  %v1597 = vunpack.c.l.b16 %v1549
  %v1598 = vunpack.c.l.b16 %v1550
  %v1599 = vunpack.c.l.b16 %v1551
  %v1600 = vunpack.c.l.b16 %v1552
  %v1601 = vpack.c.b16 %v1590, %v1589
  %v1602 = vpack.c.b16 %v1592, %v1591
  %v1603 = vpack.c.b16 %v1594, %v1593
  %v1604 = vpack.c.b16 %v1596, %v1595
  %v1605 = vpack.c.b16 %v1598, %v1597
  %v1606 = vpack.c.b16 %v1600, %v1599
  %v1614 = vsel %vm1107, %v1569, 0
  %v1617 = vsel %vm1107, %v1570, 0
  %v1620 = vsel %vm1107, %v1571, 0
  %v1623 = vsel %vm1107, %v1572, 0
  %v1626 = vsel %vm1107, %v1573, 0
  %v1629 = vsel %vm1107, %v1574, 0
  %v1632 = vsel %vm1107, %v1575, 0
  %v1635 = vsel %vm1107, %v1576, 0
  %1637 = vmatprep.subr.bf16.mxu0 0
  %1638 = vmatpush1.bf16.msra.mxu0 %v1601
  %1639 = vmatprep.subr.bf16.mxu0 0
  %1640 = vmatpush1.bf16.msra.mxu0 %v1602
  %1641 = vmatprep.subr.bf16.mxu0 0
  %1642 = vmatpush1.bf16.msra.mxu0 %v1603
  %1643 = vmatprep.subr.bf16.mxu0 0
  %1644 = vmatpush1.bf16.msra.mxu0 %v1604
  %1645 = vmatprep.subr.bf16.mxu0 0
  %1646 = vmatpush1.bf16.msra.mxu0 %v1605
  %1647 = vmatprep.subr.bf16.mxu0 0
  %1648 = vmatpush1.bf16.msra.mxu0 %v1606
  %1649 = vmatprep.subr.bf16.mxu0 0
  %1650 = vmatpush1.bf16.msra.mxu0 0
  %1651 = vmatprep.subr.bf16.mxu0 0
  %1652 = vmatpush1.bf16.msra.mxu0 0
  %1653 = vmatprep.subr.bf16.mxu0 0
  %1654 = vmatpush1.bf16.msra.mxu0 0
  %1655 = vmatprep.subr.bf16.mxu0 0
  %1656 = vmatpush1.bf16.msra.mxu0 0
  %1657 = vmatprep.subr.bf16.mxu0 0
  %1658 = vmatpush1.bf16.msra.mxu0 0
  %1659 = vmatprep.subr.bf16.mxu0 0
  %1660 = vmatpush1.bf16.msra.mxu0 0
  %1661 = vmatprep.subr.bf16.mxu0 0
  %1662 = vmatpush1.bf16.msra.mxu0 0
  %1663 = vmatprep.subr.bf16.mxu0 0
  %1664 = vmatpush1.bf16.msra.mxu0 0
  %1665 = vmatprep.subr.bf16.mxu0 0
  %1666 = vmatpush1.bf16.msra.mxu0 0
  %1667 = vmatprep.subr.bf16.mxu0 0
  %1668 = vmatpush1.bf16.msra.mxu0 0
  %1669 = vmatprep.mubr.bf16.mxu0 0
  %1670 = vmatmul.mubr.bf16.gmra.mrb[0].mxu0 %v1614
  %v1671 = vpop.f32.mrb[0].mxu0
  %v1672 = vadd.f32 0.0, %v1671
  %v1673 = vpop.f32.mrb[0].mxu0
  %v1674 = vpop.f32.mrb[0].mxu0
  %v1675 = vadd.f32 0.0, %v1674
  %v1676 = vpop.f32.mrb[0].mxu0
  %1677 = vmatprep.mubr.bf16.mxu0 0
  %1678 = vmatmul.mubr.bf16.gmra.mrb[0].mxu0 %v1617
  %v1679 = vpop.f32.mrb[0].mxu0
  %v1680 = vadd.f32 0.0, %v1679
  %v1681 = vpop.f32.mrb[0].mxu0
  %v1682 = vpop.f32.mrb[0].mxu0
  %v1683 = vadd.f32 0.0, %v1682
  %v1684 = vpop.f32.mrb[0].mxu0
  %1685 = vmatprep.mubr.bf16.mxu0 0
  %1686 = vmatmul.mubr.bf16.gmra.mrb[0].mxu0 %v1620
  %v1687 = vpop.f32.mrb[0].mxu0
  %v1688 = vadd.f32 0.0, %v1687
  %v1689 = vpop.f32.mrb[0].mxu0
  %v1690 = vpop.f32.mrb[0].mxu0
  %v1691 = vadd.f32 0.0, %v1690
  %v1692 = vpop.f32.mrb[0].mxu0
  %1693 = vmatprep.mubr.bf16.mxu0 0
  %1694 = vmatmul.mubr.bf16.gmra.mrb[0].mxu0 %v1623
  %v1695 = vpop.f32.mrb[0].mxu0
  %v1696 = vadd.f32 0.0, %v1695
  %v1697 = vpop.f32.mrb[0].mxu0
  %v1698 = vpop.f32.mrb[0].mxu0
  %v1699 = vadd.f32 0.0, %v1698
  %v1700 = vpop.f32.mrb[0].mxu0
  %1701 = vmatprep.mubr.bf16.mxu0 0
  %1702 = vmatmul.mubr.bf16.gmra.mrb[0].mxu0 %v1626
  %v1703 = vpop.f32.mrb[0].mxu0
  %v1704 = vadd.f32 0.0, %v1703
  %v1705 = vpop.f32.mrb[0].mxu0
  %v1706 = vpop.f32.mrb[0].mxu0
  %v1707 = vadd.f32 0.0, %v1706
  %v1708 = vpop.f32.mrb[0].mxu0
  %1709 = vmatprep.mubr.bf16.mxu0 0
  %1710 = vmatmul.mubr.bf16.gmra.mrb[0].mxu0 %v1629
  %v1711 = vpop.f32.mrb[0].mxu0
  %v1712 = vadd.f32 0.0, %v1711
  %v1713 = vpop.f32.mrb[0].mxu0
  %v1714 = vpop.f32.mrb[0].mxu0
  %v1715 = vadd.f32 0.0, %v1714
  %v1716 = vpop.f32.mrb[0].mxu0
  %1717 = vmatprep.mubr.bf16.mxu0 0
  %1718 = vmatmul.mubr.bf16.gmra.mrb[0].mxu0 %v1632
  %v1719 = vpop.f32.mrb[0].mxu0
  %v1720 = vadd.f32 0.0, %v1719
  %v1721 = vpop.f32.mrb[0].mxu0
  %v1722 = vpop.f32.mrb[0].mxu0
  %v1723 = vadd.f32 0.0, %v1722
  %v1724 = vpop.f32.mrb[0].mxu0
  %1725 = vmatprep.mubr.bf16.mxu0 0
  %1726 = vmatmul.mubr.bf16.gmra.mrb[0].mxu0 %v1635
  %v1727 = vpop.f32.mrb[0].mxu0
  %v1728 = vadd.f32 0.0, %v1727
  %v1729 = vpop.f32.mrb[0].mxu0
  %v1730 = vpop.f32.mrb[0].mxu0
  %v1731 = vadd.f32 0.0, %v1730
  %v1732 = vpop.f32.mrb[0].mxu0
  %1733 = vdwg.mxu0
  %v1734 = vadd.f32 %v1364, %v1672
  %v1735 = vadd.f32 %v1367, %v1675
  %v1736 = vadd.f32 %v1372, %v1680
  %v1737 = vadd.f32 %v1375, %v1683
  %v1738 = vadd.f32 %v1380, %v1688
  %v1739 = vadd.f32 %v1383, %v1691
  %v1740 = vadd.f32 %v1388, %v1696
  %v1741 = vadd.f32 %v1391, %v1699
  %v1742 = vadd.f32 %v1396, %v1704
  %v1743 = vadd.f32 %v1399, %v1707
  %v1744 = vadd.f32 %v1404, %v1712
  %v1745 = vadd.f32 %v1407, %v1715
  %v1746 = vadd.f32 %v1412, %v1720
  %v1747 = vadd.f32 %v1415, %v1723
  %v1748 = vadd.f32 %v1420, %v1728
  %v1749 = vadd.f32 %v1423, %v1731
  %v1750 = vld [vmem:[%s661] sm:$0xf]
  %v1751 = vld [vmem:[%s661 + $0x8] sm:$0xf]
  %v1752 = vld [vmem:[%s661 + $0x10] sm:$0xf]
  %v1753 = vld [vmem:[%s661 + $0x18] sm:$0xf]
  %v1754 = vld [vmem:[%s661 + $0x20] sm:$0xf]
  %v1755 = vld [vmem:[%s661 + $0x28] sm:$0xf]
  %v1756 = vld [vmem:[%s661 + $0x30] sm:$0xf]
  %v1757 = vld [vmem:[%s661 + $0x38] sm:$0xf]
  %v1758 = vld [vmem:[%s661 + $0x50] sm:$0xf]
  %v1759 = vld [vmem:[%s661 + $0x58] sm:$0xf]
  %v1760 = vld [vmem:[%s661 + $0x60] sm:$0xf]
  %v1761 = vld [vmem:[%s661 + $0x68] sm:$0xf]
  %v1762 = vld [vmem:[%s661 + $0x70] sm:$0xf]
  %v1763 = vld [vmem:[%s661 + $0x78] sm:$0xf]
  %v1764 = vld [vmem:[%s661 + $0x80] sm:$0xf]
  %v1765 = vld [vmem:[%s661 + $0x88] sm:$0xf]
  %v1766 = vld [vmem:[%s5 + $0x90] sm:$0xf]
  %v1767 = vld [vmem:[%s5 + $0x94] sm:$0xf]
  %v1768 = vld [vmem:[%s5 + $0x98] sm:$0xf]
  %v1769 = vld [vmem:[%s5 + $0x9c] sm:$0xf]
  %v1770 = vld [vmem:[%s5 + $0xa0] sm:$0xf]
  %v1771 = vld [vmem:[%s5 + $0xa4] sm:$0xf]
  %v1772 = vld [vmem:[%s5 + $0xa8] sm:$0xf]
  %v1773 = vld [vmem:[%s5 + $0xac] sm:$0xf]
  %v1774 = vld [vmem:[%s5 + $0xb0] sm:$0xf]
  %v1775 = vld [vmem:[%s5 + $0xb4] sm:$0xf]
  %v1776 = vld [vmem:[%s5 + $0xb8] sm:$0xf]
  %v1777 = vld [vmem:[%s5 + $0xbc] sm:$0xf]
  %v1794 = vunpack.c.l.b16 %v1750
  %v1795 = vunpack.c.l.b16 %v1751
  %v1796 = vunpack.c.l.b16 %v1752
  %v1797 = vunpack.c.l.b16 %v1753
  %v1798 = vunpack.c.l.b16 %v1754
  %v1799 = vunpack.c.l.b16 %v1755
  %v1800 = vunpack.c.l.b16 %v1756
  %v1801 = vunpack.c.l.b16 %v1757
  %v1802 = vunpack.c.l.b16 %v1758
  %v1803 = vunpack.c.l.b16 %v1759
  %v1804 = vunpack.c.l.b16 %v1760
  %v1805 = vunpack.c.l.b16 %v1761
  %v1806 = vunpack.c.l.b16 %v1762
  %v1807 = vunpack.c.l.b16 %v1763
  %v1808 = vunpack.c.l.b16 %v1764
  %v1809 = vunpack.c.l.b16 %v1765
  %v1810 = vpack.c.b16 %v1795, %v1794
  %v1811 = vpack.c.b16 %v1797, %v1796
  %v1812 = vpack.c.b16 %v1799, %v1798
  %v1813 = vpack.c.b16 %v1801, %v1800
  %v1814 = vpack.c.b16 %v1803, %v1802
  %v1815 = vpack.c.b16 %v1805, %v1804
  %v1816 = vpack.c.b16 %v1807, %v1806
  %v1817 = vpack.c.b16 %v1809, %v1808
  %v1830 = vunpack.c.l.b16 %v1766
  %v1831 = vunpack.c.l.b16 %v1767
  %v1832 = vunpack.c.l.b16 %v1768
  %v1833 = vunpack.c.l.b16 %v1769
  %v1834 = vunpack.c.l.b16 %v1770
  %v1835 = vunpack.c.l.b16 %v1771
  %v1836 = vunpack.c.l.b16 %v1772
  %v1837 = vunpack.c.l.b16 %v1773
  %v1838 = vunpack.c.l.b16 %v1774
  %v1839 = vunpack.c.l.b16 %v1775
  %v1840 = vunpack.c.l.b16 %v1776
  %v1841 = vunpack.c.l.b16 %v1777
  %v1842 = vpack.c.b16 %v1831, %v1830
  %v1843 = vpack.c.b16 %v1833, %v1832
  %v1844 = vpack.c.b16 %v1835, %v1834
  %v1845 = vpack.c.b16 %v1837, %v1836
  %v1846 = vpack.c.b16 %v1839, %v1838
  %v1847 = vpack.c.b16 %v1841, %v1840
  %v1855 = vsel %vm1107, %v1810, 0
  %v1858 = vsel %vm1107, %v1811, 0
  %v1861 = vsel %vm1107, %v1812, 0
  %v1864 = vsel %vm1107, %v1813, 0
  %v1867 = vsel %vm1107, %v1814, 0
  %v1870 = vsel %vm1107, %v1815, 0
  %v1873 = vsel %vm1107, %v1816, 0
  %v1876 = vsel %vm1107, %v1817, 0
  %1878 = vmatprep.subr.bf16.mxu0 0
  %1879 = vmatpush1.bf16.msra.mxu0 %v1842
  %1880 = vmatprep.subr.bf16.mxu0 0
  %1881 = vmatpush1.bf16.msra.mxu0 %v1843
  %1882 = vmatprep.subr.bf16.mxu0 0
  %1883 = vmatpush1.bf16.msra.mxu0 %v1844
  %1884 = vmatprep.subr.bf16.mxu0 0
  %1885 = vmatpush1.bf16.msra.mxu0 %v1845
  %1886 = vmatprep.subr.bf16.mxu0 0
  %1887 = vmatpush1.bf16.msra.mxu0 %v1846
  %1888 = vmatprep.subr.bf16.mxu0 0
  %1889 = vmatpush1.bf16.msra.mxu0 %v1847
  %1890 = vmatprep.subr.bf16.mxu0 0
  %1891 = vmatpush1.bf16.msra.mxu0 0
  %1892 = vmatprep.subr.bf16.mxu0 0
  %1893 = vmatpush1.bf16.msra.mxu0 0
  %1894 = vmatprep.subr.bf16.mxu0 0
  %1895 = vmatpush1.bf16.msra.mxu0 0
  %1896 = vmatprep.subr.bf16.mxu0 0
  %1897 = vmatpush1.bf16.msra.mxu0 0
  %1898 = vmatprep.subr.bf16.mxu0 0
  %1899 = vmatpush1.bf16.msra.mxu0 0
  %1900 = vmatprep.subr.bf16.mxu0 0
  %1901 = vmatpush1.bf16.msra.mxu0 0
  %1902 = vmatprep.subr.bf16.mxu0 0
  %1903 = vmatpush1.bf16.msra.mxu0 0
  %1904 = vmatprep.subr.bf16.mxu0 0
  %1905 = vmatpush1.bf16.msra.mxu0 0
  %1906 = vmatprep.subr.bf16.mxu0 0
  %1907 = vmatpush1.bf16.msra.mxu0 0
  %1908 = vmatprep.subr.bf16.mxu0 0
  %1909 = vmatpush1.bf16.msra.mxu0 0
  %1910 = vmatprep.mubr.bf16.mxu0 0
  %1911 = vmatmul.mubr.bf16.gmra.mrb[0].mxu0 %v1855
  %v1912 = vpop.f32.mrb[0].mxu0
  %v1913 = vadd.f32 0.0, %v1912
  %v1914 = vpop.f32.mrb[0].mxu0
  %v1915 = vpop.f32.mrb[0].mxu0
  %v1916 = vadd.f32 0.0, %v1915
  %v1917 = vpop.f32.mrb[0].mxu0
  %1918 = vmatprep.mubr.bf16.mxu0 0
  %1919 = vmatmul.mubr.bf16.gmra.mrb[0].mxu0 %v1858
  %v1920 = vpop.f32.mrb[0].mxu0
  %v1921 = vadd.f32 0.0, %v1920
  %v1922 = vpop.f32.mrb[0].mxu0
  %v1923 = vpop.f32.mrb[0].mxu0
  %v1924 = vadd.f32 0.0, %v1923
  %v1925 = vpop.f32.mrb[0].mxu0
  %1926 = vmatprep.mubr.bf16.mxu0 0
  %1927 = vmatmul.mubr.bf16.gmra.mrb[0].mxu0 %v1861
  %v1928 = vpop.f32.mrb[0].mxu0
  %v1929 = vadd.f32 0.0, %v1928
  %v1930 = vpop.f32.mrb[0].mxu0
  %v1931 = vpop.f32.mrb[0].mxu0
  %v1932 = vadd.f32 0.0, %v1931
  %v1933 = vpop.f32.mrb[0].mxu0
  %1934 = vmatprep.mubr.bf16.mxu0 0
  %1935 = vmatmul.mubr.bf16.gmra.mrb[0].mxu0 %v1864
  %v1936 = vpop.f32.mrb[0].mxu0
  %v1937 = vadd.f32 0.0, %v1936
  %v1938 = vpop.f32.mrb[0].mxu0
  %v1939 = vpop.f32.mrb[0].mxu0
  %v1940 = vadd.f32 0.0, %v1939
  %v1941 = vpop.f32.mrb[0].mxu0
  %1942 = vmatprep.mubr.bf16.mxu0 0
  %1943 = vmatmul.mubr.bf16.gmra.mrb[0].mxu0 %v1867
  %v1944 = vpop.f32.mrb[0].mxu0
  %v1945 = vadd.f32 0.0, %v1944
  %v1946 = vpop.f32.mrb[0].mxu0
  %v1947 = vpop.f32.mrb[0].mxu0
  %v1948 = vadd.f32 0.0, %v1947
  %v1949 = vpop.f32.mrb[0].mxu0
  %1950 = vmatprep.mubr.bf16.mxu0 0
  %1951 = vmatmul.mubr.bf16.gmra.mrb[0].mxu0 %v1870
  %v1952 = vpop.f32.mrb[0].mxu0
  %v1953 = vadd.f32 0.0, %v1952
  %v1954 = vpop.f32.mrb[0].mxu0
  %v1955 = vpop.f32.mrb[0].mxu0
  %v1956 = vadd.f32 0.0, %v1955
  %v1957 = vpop.f32.mrb[0].mxu0
  %1958 = vmatprep.mubr.bf16.mxu0 0
  %1959 = vmatmul.mubr.bf16.gmra.mrb[0].mxu0 %v1873
  %v1960 = vpop.f32.mrb[0].mxu0
  %v1961 = vadd.f32 0.0, %v1960
  %v1962 = vpop.f32.mrb[0].mxu0
  %v1963 = vpop.f32.mrb[0].mxu0
  %v1964 = vadd.f32 0.0, %v1963
  %v1965 = vpop.f32.mrb[0].mxu0
  %1966 = vmatprep.mubr.bf16.mxu0 0
  %1967 = vmatmul.mubr.bf16.gmra.mrb[0].mxu0 %v1876
  %v1968 = vpop.f32.mrb[0].mxu0
  %v1969 = vadd.f32 0.0, %v1968
  %v1970 = vpop.f32.mrb[0].mxu0
  %v1971 = vpop.f32.mrb[0].mxu0
  %v1972 = vadd.f32 0.0, %v1971
  %v1973 = vpop.f32.mrb[0].mxu0
  %1974 = vdwg.mxu0
  %v1975 = vadd.f32 %v1734, %v1913
  %v1976 = vadd.f32 %v1735, %v1916
  %v1977 = vadd.f32 %v1736, %v1921
  %v1978 = vadd.f32 %v1737, %v1924
  %v1979 = vadd.f32 %v1738, %v1929
  %v1980 = vadd.f32 %v1739, %v1932
  %v1981 = vadd.f32 %v1740, %v1937
  %v1982 = vadd.f32 %v1741, %v1940
  %v1983 = vadd.f32 %v1742, %v1945
  %v1984 = vadd.f32 %v1743, %v1948
  %v1985 = vadd.f32 %v1744, %v1953
  %v1986 = vadd.f32 %v1745, %v1956
  %v1987 = vadd.f32 %v1746, %v1961
  %v1988 = vadd.f32 %v1747, %v1964
  %v1989 = vadd.f32 %v1748, %v1969
  %v1990 = vadd.f32 %v1749, %v1972
  %v1991 = vld [vmem:[%s661] sm:$0xf]
  %v1992 = vld [vmem:[%s661 + $0x4] sm:$0x1]
  %v1993 = vld [vmem:[%s661 + $0x8] sm:$0xf]
  %v1994 = vld [vmem:[%s661 + $0xc] sm:$0x1]
  %v1995 = vld [vmem:[%s661 + $0x10] sm:$0xf]
  %v1996 = vld [vmem:[%s661 + $0x14] sm:$0x1]
  %v1997 = vld [vmem:[%s661 + $0x18] sm:$0xf]
  %v1998 = vld [vmem:[%s661 + $0x1c] sm:$0x1]
  %v1999 = vld [vmem:[%s661 + $0x20] sm:$0xf]
  %v2000 = vld [vmem:[%s661 + $0x24] sm:$0x1]
  %v2001 = vld [vmem:[%s661 + $0x28] sm:$0xf]
  %v2002 = vld [vmem:[%s661 + $0x2c] sm:$0x1]
  %v2003 = vld [vmem:[%s661 + $0x30] sm:$0xf]
  %v2004 = vld [vmem:[%s661 + $0x34] sm:$0x1]
  %v2005 = vld [vmem:[%s661 + $0x38] sm:$0xf]
  %v2006 = vld [vmem:[%s661 + $0x3c] sm:$0x1]
  %v2007 = vld [vmem:[%s661 + $0x50] sm:$0xf]
  %v2008 = vld [vmem:[%s661 + $0x54] sm:$0x1]
  %v2009 = vld [vmem:[%s661 + $0x58] sm:$0xf]
  %v2010 = vld [vmem:[%s661 + $0x5c] sm:$0x1]
  %v2011 = vld [vmem:[%s661 + $0x60] sm:$0xf]
  %v2012 = vld [vmem:[%s661 + $0x64] sm:$0x1]
  %v2013 = vld [vmem:[%s661 + $0x68] sm:$0xf]
  %v2014 = vld [vmem:[%s661 + $0x6c] sm:$0x1]
  %v2015 = vld [vmem:[%s661 + $0x70] sm:$0xf]
  %v2016 = vld [vmem:[%s661 + $0x74] sm:$0x1]
  %v2017 = vld [vmem:[%s661 + $0x78] sm:$0xf]
  %v2018 = vld [vmem:[%s661 + $0x7c] sm:$0x1]
  %v2019 = vld [vmem:[%s661 + $0x80] sm:$0xf]
  %v2020 = vld [vmem:[%s661 + $0x84] sm:$0x1]
  %v2021 = vld [vmem:[%s661 + $0x88] sm:$0xf]
  %v2022 = vld [vmem:[%s661 + $0x8c] sm:$0x1]
  %v2024 = vshrl.u32 %v1991, 16
  %v2026 = vrot.slane %v2024, 4
  %v2027 = vshll.u32 %v1991, 16
  %v2029 = vrot.slane %v2027, 5
  %v2030 = vor.u32 %v2026, %v2029
  %v2031 = vrot.slane %v2030, 4
  %v2033 = vshll.u32 %v1992, 16
  %v2035 = vrot.slane %v2033, 5
  %v2036 = vsel %vm810, %v2031, %v2035
  %v2038 = vshrl.u32 %v1993, 16
  %v2040 = vrot.slane %v2038, 4
  %v2041 = vshll.u32 %v1993, 16
  %v2043 = vrot.slane %v2041, 5
  %v2044 = vor.u32 %v2040, %v2043
  %v2045 = vrot.slane %v2044, 4
  %v2047 = vshll.u32 %v1994, 16
  %v2049 = vrot.slane %v2047, 5
  %v2050 = vsel %vm810, %v2045, %v2049
  %v2052 = vshrl.u32 %v1995, 16
  %v2054 = vrot.slane %v2052, 4
  %v2055 = vshll.u32 %v1995, 16
  %v2057 = vrot.slane %v2055, 5
  %v2058 = vor.u32 %v2054, %v2057
  %v2059 = vrot.slane %v2058, 4
  %v2061 = vshll.u32 %v1996, 16
  %v2063 = vrot.slane %v2061, 5
  %v2064 = vsel %vm810, %v2059, %v2063
  %v2066 = vshrl.u32 %v1997, 16
  %v2068 = vrot.slane %v2066, 4
  %v2069 = vshll.u32 %v1997, 16
  %v2071 = vrot.slane %v2069, 5
  %v2072 = vor.u32 %v2068, %v2071
  %v2073 = vrot.slane %v2072, 4
  %v2075 = vshll.u32 %v1998, 16
  %v2077 = vrot.slane %v2075, 5
  %v2078 = vsel %vm810, %v2073, %v2077
  %v2080 = vshrl.u32 %v1999, 16
  %v2082 = vrot.slane %v2080, 4
  %v2083 = vshll.u32 %v1999, 16
  %v2085 = vrot.slane %v2083, 5
  %v2086 = vor.u32 %v2082, %v2085
  %v2087 = vrot.slane %v2086, 4
  %v2089 = vshll.u32 %v2000, 16
  %v2091 = vrot.slane %v2089, 5
  %v2092 = vsel %vm810, %v2087, %v2091
  %v2094 = vshrl.u32 %v2001, 16
  %v2096 = vrot.slane %v2094, 4
  %v2097 = vshll.u32 %v2001, 16
  %v2099 = vrot.slane %v2097, 5
  %v2100 = vor.u32 %v2096, %v2099
  %v2101 = vrot.slane %v2100, 4
  %v2103 = vshll.u32 %v2002, 16
  %v2105 = vrot.slane %v2103, 5
  %v2106 = vsel %vm810, %v2101, %v2105
  %v2108 = vshrl.u32 %v2003, 16
  %v2110 = vrot.slane %v2108, 4
  %v2111 = vshll.u32 %v2003, 16
  %v2113 = vrot.slane %v2111, 5
  %v2114 = vor.u32 %v2110, %v2113
  %v2115 = vrot.slane %v2114, 4
  %v2117 = vshll.u32 %v2004, 16
  %v2119 = vrot.slane %v2117, 5
  %v2120 = vsel %vm810, %v2115, %v2119
  %v2122 = vshrl.u32 %v2005, 16
  %v2124 = vrot.slane %v2122, 4
  %v2125 = vshll.u32 %v2005, 16
  %v2127 = vrot.slane %v2125, 5
  %v2128 = vor.u32 %v2124, %v2127
  %v2129 = vrot.slane %v2128, 4
  %v2131 = vshll.u32 %v2006, 16
  %v2133 = vrot.slane %v2131, 5
  %v2134 = vsel %vm810, %v2129, %v2133
  %v2136 = vshrl.u32 %v2007, 16
  %v2138 = vrot.slane %v2136, 4
  %v2139 = vshll.u32 %v2007, 16
  %v2141 = vrot.slane %v2139, 5
  %v2142 = vor.u32 %v2138, %v2141
  %v2143 = vrot.slane %v2142, 4
  %v2145 = vshll.u32 %v2008, 16
  %v2147 = vrot.slane %v2145, 5
  %v2148 = vsel %vm810, %v2143, %v2147
  %v2150 = vshrl.u32 %v2009, 16
  %v2152 = vrot.slane %v2150, 4
  %v2153 = vshll.u32 %v2009, 16
  %v2155 = vrot.slane %v2153, 5
  %v2156 = vor.u32 %v2152, %v2155
  %v2157 = vrot.slane %v2156, 4
  %v2159 = vshll.u32 %v2010, 16
  %v2161 = vrot.slane %v2159, 5
  %v2162 = vsel %vm810, %v2157, %v2161
  %v2164 = vshrl.u32 %v2011, 16
  %v2166 = vrot.slane %v2164, 4
  %v2167 = vshll.u32 %v2011, 16
  %v2169 = vrot.slane %v2167, 5
  %v2170 = vor.u32 %v2166, %v2169
  %v2171 = vrot.slane %v2170, 4
  %v2173 = vshll.u32 %v2012, 16
  %v2175 = vrot.slane %v2173, 5
  %v2176 = vsel %vm810, %v2171, %v2175
  %v2178 = vshrl.u32 %v2013, 16
  %v2180 = vrot.slane %v2178, 4
  %v2181 = vshll.u32 %v2013, 16
  %v2183 = vrot.slane %v2181, 5
  %v2184 = vor.u32 %v2180, %v2183
  %v2185 = vrot.slane %v2184, 4
  %v2187 = vshll.u32 %v2014, 16
  %v2189 = vrot.slane %v2187, 5
  %v2190 = vsel %vm810, %v2185, %v2189
  %v2192 = vshrl.u32 %v2015, 16
  %v2194 = vrot.slane %v2192, 4
  %v2195 = vshll.u32 %v2015, 16
  %v2197 = vrot.slane %v2195, 5
  %v2198 = vor.u32 %v2194, %v2197
  %v2199 = vrot.slane %v2198, 4
  %v2201 = vshll.u32 %v2016, 16
  %v2203 = vrot.slane %v2201, 5
  %v2204 = vsel %vm810, %v2199, %v2203
  %v2206 = vshrl.u32 %v2017, 16
  %v2208 = vrot.slane %v2206, 4
  %v2209 = vshll.u32 %v2017, 16
  %v2211 = vrot.slane %v2209, 5
  %v2212 = vor.u32 %v2208, %v2211
  %v2213 = vrot.slane %v2212, 4
  %v2215 = vshll.u32 %v2018, 16
  %v2217 = vrot.slane %v2215, 5
  %v2218 = vsel %vm810, %v2213, %v2217
  %v2220 = vshrl.u32 %v2019, 16
  %v2222 = vrot.slane %v2220, 4
  %v2223 = vshll.u32 %v2019, 16
  %v2225 = vrot.slane %v2223, 5
  %v2226 = vor.u32 %v2222, %v2225
  %v2227 = vrot.slane %v2226, 4
  %v2229 = vshll.u32 %v2020, 16
  %v2231 = vrot.slane %v2229, 5
  %v2232 = vsel %vm810, %v2227, %v2231
  %v2234 = vshrl.u32 %v2021, 16
  %v2236 = vrot.slane %v2234, 4
  %v2237 = vshll.u32 %v2021, 16
  %v2239 = vrot.slane %v2237, 5
  %v2240 = vor.u32 %v2236, %v2239
  %v2241 = vrot.slane %v2240, 4
  %v2243 = vshll.u32 %v2022, 16
  %v2245 = vrot.slane %v2243, 5
  %v2246 = vsel %vm810, %v2241, %v2245
  %v2247 = vld [vmem:[%s5 + $0xc0] sm:$0xf]
  %v2248 = vld [vmem:[%s5 + $0xc4] sm:$0xf]
  %v2249 = vld [vmem:[%s5 + $0xc8] sm:$0xf]
  %v2250 = vld [vmem:[%s5 + $0xcc] sm:$0xf]
  %v2251 = vld [vmem:[%s5 + $0xd0] sm:$0xf]
  %v2252 = vld [vmem:[%s5 + $0xd4] sm:$0xf]
  %v2253 = vld [vmem:[%s5 + $0xd8] sm:$0xf]
  %v2254 = vld [vmem:[%s5 + $0xdc] sm:$0xf]
  %v2255 = vld [vmem:[%s5 + $0xe0] sm:$0xf]
  %v2256 = vld [vmem:[%s5 + $0xe4] sm:$0xf]
  %v2257 = vld [vmem:[%s5 + $0xe8] sm:$0xf]
  %v2258 = vld [vmem:[%s5 + $0xec] sm:$0xf]
  %v2259 = vunpack.c.l.b16 %v2036
  %v2260 = vunpack.c.l.b16 %v2050
  %v2261 = vunpack.c.l.b16 %v2064
  %v2262 = vunpack.c.l.b16 %v2078
  %v2263 = vunpack.c.l.b16 %v2092
  %v2264 = vunpack.c.l.b16 %v2106
  %v2265 = vunpack.c.l.b16 %v2120
  %v2266 = vunpack.c.l.b16 %v2134
  %v2267 = vunpack.c.l.b16 %v2148
  %v2268 = vunpack.c.l.b16 %v2162
  %v2269 = vunpack.c.l.b16 %v2176
  %v2270 = vunpack.c.l.b16 %v2190
  %v2271 = vunpack.c.l.b16 %v2204
  %v2272 = vunpack.c.l.b16 %v2218
  %v2273 = vunpack.c.l.b16 %v2232
  %v2274 = vunpack.c.l.b16 %v2246
  %v2275 = vpack.c.b16 %v2260, %v2259
  %v2276 = vpack.c.b16 %v2262, %v2261
  %v2277 = vpack.c.b16 %v2264, %v2263
  %v2278 = vpack.c.b16 %v2266, %v2265
  %v2279 = vpack.c.b16 %v2268, %v2267
  %v2280 = vpack.c.b16 %v2270, %v2269
  %v2281 = vpack.c.b16 %v2272, %v2271
  %v2282 = vpack.c.b16 %v2274, %v2273
  %v2295 = vunpack.c.l.b16 %v2247
  %v2296 = vunpack.c.l.b16 %v2248
  %v2297 = vunpack.c.l.b16 %v2249
  %v2298 = vunpack.c.l.b16 %v2250
  %v2299 = vunpack.c.l.b16 %v2251
  %v2300 = vunpack.c.l.b16 %v2252
  %v2301 = vunpack.c.l.b16 %v2253
  %v2302 = vunpack.c.l.b16 %v2254
  %v2303 = vunpack.c.l.b16 %v2255
  %v2304 = vunpack.c.l.b16 %v2256
  %v2305 = vunpack.c.l.b16 %v2257
  %v2306 = vunpack.c.l.b16 %v2258
  %v2307 = vpack.c.b16 %v2296, %v2295
  %v2308 = vpack.c.b16 %v2298, %v2297
  %v2309 = vpack.c.b16 %v2300, %v2299
  %v2310 = vpack.c.b16 %v2302, %v2301
  %v2311 = vpack.c.b16 %v2304, %v2303
  %v2312 = vpack.c.b16 %v2306, %v2305
  %v2320 = vsel %vm1107, %v2275, 0
  %v2323 = vsel %vm1107, %v2276, 0
  %v2326 = vsel %vm1107, %v2277, 0
  %v2329 = vsel %vm1107, %v2278, 0
  %v2332 = vsel %vm1107, %v2279, 0
  %v2335 = vsel %vm1107, %v2280, 0
  %v2338 = vsel %vm1107, %v2281, 0
  %v2341 = vsel %vm1107, %v2282, 0
  %2343 = vmatprep.subr.bf16.mxu0 0
  %2344 = vmatpush1.bf16.msra.mxu0 %v2307
  %2345 = vmatprep.subr.bf16.mxu0 0
  %2346 = vmatpush1.bf16.msra.mxu0 %v2308
  %2347 = vmatprep.subr.bf16.mxu0 0
  %2348 = vmatpush1.bf16.msra.mxu0 %v2309
  %2349 = vmatprep.subr.bf16.mxu0 0
  %2350 = vmatpush1.bf16.msra.mxu0 %v2310
  %2351 = vmatprep.subr.bf16.mxu0 0
  %2352 = vmatpush1.bf16.msra.mxu0 %v2311
  %2353 = vmatprep.subr.bf16.mxu0 0
  %2354 = vmatpush1.bf16.msra.mxu0 %v2312
  %2355 = vmatprep.subr.bf16.mxu0 0
  %2356 = vmatpush1.bf16.msra.mxu0 0
  %2357 = vmatprep.subr.bf16.mxu0 0
  %2358 = vmatpush1.bf16.msra.mxu0 0
  %2359 = vmatprep.subr.bf16.mxu0 0
  %2360 = vmatpush1.bf16.msra.mxu0 0
  %2361 = vmatprep.subr.bf16.mxu0 0
  %2362 = vmatpush1.bf16.msra.mxu0 0
  %2363 = vmatprep.subr.bf16.mxu0 0
  %2364 = vmatpush1.bf16.msra.mxu0 0
  %2365 = vmatprep.subr.bf16.mxu0 0
  %2366 = vmatpush1.bf16.msra.mxu0 0
  %2367 = vmatprep.subr.bf16.mxu0 0
  %2368 = vmatpush1.bf16.msra.mxu0 0
  %2369 = vmatprep.subr.bf16.mxu0 0
  %2370 = vmatpush1.bf16.msra.mxu0 0
  %2371 = vmatprep.subr.bf16.mxu0 0
  %2372 = vmatpush1.bf16.msra.mxu0 0
  %2373 = vmatprep.subr.bf16.mxu0 0
  %2374 = vmatpush1.bf16.msra.mxu0 0
  %2375 = vmatprep.mubr.bf16.mxu0 0
  %2376 = vmatmul.mubr.bf16.gmra.mrb[0].mxu0 %v2320
  %v2377 = vpop.f32.mrb[0].mxu0
  %v2378 = vadd.f32 0.0, %v2377
  %v2379 = vpop.f32.mrb[0].mxu0
  %v2380 = vpop.f32.mrb[0].mxu0
  %v2381 = vadd.f32 0.0, %v2380
  %v2382 = vpop.f32.mrb[0].mxu0
  %2383 = vmatprep.mubr.bf16.mxu0 0
  %2384 = vmatmul.mubr.bf16.gmra.mrb[0].mxu0 %v2323
  %v2385 = vpop.f32.mrb[0].mxu0
  %v2386 = vadd.f32 0.0, %v2385
  %v2387 = vpop.f32.mrb[0].mxu0
  %v2388 = vpop.f32.mrb[0].mxu0
  %v2389 = vadd.f32 0.0, %v2388
  %v2390 = vpop.f32.mrb[0].mxu0
  %2391 = vmatprep.mubr.bf16.mxu0 0
  %2392 = vmatmul.mubr.bf16.gmra.mrb[0].mxu0 %v2326
  %v2393 = vpop.f32.mrb[0].mxu0
  %v2394 = vadd.f32 0.0, %v2393
  %v2395 = vpop.f32.mrb[0].mxu0
  %v2396 = vpop.f32.mrb[0].mxu0
  %v2397 = vadd.f32 0.0, %v2396
  %v2398 = vpop.f32.mrb[0].mxu0
  %2399 = vmatprep.mubr.bf16.mxu0 0
  %2400 = vmatmul.mubr.bf16.gmra.mrb[0].mxu0 %v2329
  %v2401 = vpop.f32.mrb[0].mxu0
  %v2402 = vadd.f32 0.0, %v2401
  %v2403 = vpop.f32.mrb[0].mxu0
  %v2404 = vpop.f32.mrb[0].mxu0
  %v2405 = vadd.f32 0.0, %v2404
  %v2406 = vpop.f32.mrb[0].mxu0
  %2407 = vmatprep.mubr.bf16.mxu0 0
  %2408 = vmatmul.mubr.bf16.gmra.mrb[0].mxu0 %v2332
  %v2409 = vpop.f32.mrb[0].mxu0
  %v2410 = vadd.f32 0.0, %v2409
  %v2411 = vpop.f32.mrb[0].mxu0
  %v2412 = vpop.f32.mrb[0].mxu0
  %v2413 = vadd.f32 0.0, %v2412
  %v2414 = vpop.f32.mrb[0].mxu0
  %2415 = vmatprep.mubr.bf16.mxu0 0
  %2416 = vmatmul.mubr.bf16.gmra.mrb[0].mxu0 %v2335
  %v2417 = vpop.f32.mrb[0].mxu0
  %v2418 = vadd.f32 0.0, %v2417
  %v2419 = vpop.f32.mrb[0].mxu0
  %v2420 = vpop.f32.mrb[0].mxu0
  %v2421 = vadd.f32 0.0, %v2420
  %v2422 = vpop.f32.mrb[0].mxu0
  %2423 = vmatprep.mubr.bf16.mxu0 0
  %2424 = vmatmul.mubr.bf16.gmra.mrb[0].mxu0 %v2338
  %v2425 = vpop.f32.mrb[0].mxu0
  %v2426 = vadd.f32 0.0, %v2425
  %v2427 = vpop.f32.mrb[0].mxu0
  %v2428 = vpop.f32.mrb[0].mxu0
  %v2429 = vadd.f32 0.0, %v2428
  %v2430 = vpop.f32.mrb[0].mxu0
  %2431 = vmatprep.mubr.bf16.mxu0 0
  %2432 = vmatmul.mubr.bf16.gmra.mrb[0].mxu0 %v2341
  %v2433 = vpop.f32.mrb[0].mxu0
  %v2434 = vadd.f32 0.0, %v2433
  %v2435 = vpop.f32.mrb[0].mxu0
  %v2436 = vpop.f32.mrb[0].mxu0
  %v2437 = vadd.f32 0.0, %v2436
  %v2438 = vpop.f32.mrb[0].mxu0
  %2439 = vdwg.mxu0
  %v2440 = vadd.f32 %v1975, %v2378
  %v2441 = vadd.f32 %v1976, %v2381
  %v2442 = vadd.f32 %v1977, %v2386
  %v2443 = vadd.f32 %v1978, %v2389
  %v2444 = vadd.f32 %v1979, %v2394
  %v2445 = vadd.f32 %v1980, %v2397
  %v2446 = vadd.f32 %v1981, %v2402
  %v2447 = vadd.f32 %v1982, %v2405
  %v2448 = vadd.f32 %v1983, %v2410
  %v2449 = vadd.f32 %v1984, %v2413
  %v2450 = vadd.f32 %v1985, %v2418
  %v2451 = vadd.f32 %v1986, %v2421
  %v2452 = vadd.f32 %v1987, %v2426
  %v2453 = vadd.f32 %v1988, %v2429
  %v2454 = vadd.f32 %v1989, %v2434
  %v2455 = vadd.f32 %v1990, %v2437
  %v2456 = vld [vmem:[%s661] sm:$0xe]
  %v2457 = vld [vmem:[%s661 + $0x8] sm:$0xe]
  %v2458 = vld [vmem:[%s661 + $0x10] sm:$0xe]
  %v2459 = vld [vmem:[%s661 + $0x18] sm:$0xe]
  %v2460 = vld [vmem:[%s661 + $0x20] sm:$0xe]
  %v2461 = vld [vmem:[%s661 + $0x28] sm:$0xe]
  %v2462 = vld [vmem:[%s661 + $0x30] sm:$0xe]
  %v2463 = vld [vmem:[%s661 + $0x38] sm:$0xe]
  %v2464 = vld [vmem:[%s661 + $0x50] sm:$0xe]
  %v2465 = vld [vmem:[%s661 + $0x58] sm:$0xe]
  %v2466 = vld [vmem:[%s661 + $0x60] sm:$0xe]
  %v2467 = vld [vmem:[%s661 + $0x68] sm:$0xe]
  %v2468 = vld [vmem:[%s661 + $0x70] sm:$0xe]
  %v2469 = vld [vmem:[%s661 + $0x78] sm:$0xe]
  %v2470 = vld [vmem:[%s661 + $0x80] sm:$0xe]
  %v2471 = vld [vmem:[%s661 + $0x88] sm:$0xe]
  %v2504 = vrot.slane %v2456, 5
  %v2505 = vrot.slane %v2504, 4
  %v2506 = vrot.slane %v1992, 5
  %v2507 = vsel %vm1476, %v2505, %v2506
  %v2508 = vrot.slane %v2457, 5
  %v2509 = vrot.slane %v2508, 4
  %v2510 = vrot.slane %v1994, 5
  %v2511 = vsel %vm1476, %v2509, %v2510
  %v2512 = vrot.slane %v2458, 5
  %v2513 = vrot.slane %v2512, 4
  %v2514 = vrot.slane %v1996, 5
  %v2515 = vsel %vm1476, %v2513, %v2514
  %v2516 = vrot.slane %v2459, 5
  %v2517 = vrot.slane %v2516, 4
  %v2518 = vrot.slane %v1998, 5
  %v2519 = vsel %vm1476, %v2517, %v2518
  %v2520 = vrot.slane %v2460, 5
  %v2521 = vrot.slane %v2520, 4
  %v2522 = vrot.slane %v2000, 5
  %v2523 = vsel %vm1476, %v2521, %v2522
  %v2524 = vrot.slane %v2461, 5
  %v2525 = vrot.slane %v2524, 4
  %v2526 = vrot.slane %v2002, 5
  %v2527 = vsel %vm1476, %v2525, %v2526
  %v2528 = vrot.slane %v2462, 5
  %v2529 = vrot.slane %v2528, 4
  %v2530 = vrot.slane %v2004, 5
  %v2531 = vsel %vm1476, %v2529, %v2530
  %v2532 = vrot.slane %v2463, 5
  %v2533 = vrot.slane %v2532, 4
  %v2534 = vrot.slane %v2006, 5
  %v2535 = vsel %vm1476, %v2533, %v2534
  %v2536 = vrot.slane %v2464, 5
  %v2537 = vrot.slane %v2536, 4
  %v2538 = vrot.slane %v2008, 5
  %v2539 = vsel %vm1476, %v2537, %v2538
  %v2540 = vrot.slane %v2465, 5
  %v2541 = vrot.slane %v2540, 4
  %v2542 = vrot.slane %v2010, 5
  %v2543 = vsel %vm1476, %v2541, %v2542
  %v2544 = vrot.slane %v2466, 5
  %v2545 = vrot.slane %v2544, 4
  %v2546 = vrot.slane %v2012, 5
  %v2547 = vsel %vm1476, %v2545, %v2546
  %v2548 = vrot.slane %v2467, 5
  %v2549 = vrot.slane %v2548, 4
  %v2550 = vrot.slane %v2014, 5
  %v2551 = vsel %vm1476, %v2549, %v2550
  %v2552 = vrot.slane %v2468, 5
  %v2553 = vrot.slane %v2552, 4
  %v2554 = vrot.slane %v2016, 5
  %v2555 = vsel %vm1476, %v2553, %v2554
  %v2556 = vrot.slane %v2469, 5
  %v2557 = vrot.slane %v2556, 4
  %v2558 = vrot.slane %v2018, 5
  %v2559 = vsel %vm1476, %v2557, %v2558
  %v2560 = vrot.slane %v2470, 5
  %v2561 = vrot.slane %v2560, 4
  %v2562 = vrot.slane %v2020, 5
  %v2563 = vsel %vm1476, %v2561, %v2562
  %v2564 = vrot.slane %v2471, 5
  %v2565 = vrot.slane %v2564, 4
  %v2566 = vrot.slane %v2022, 5
  %v2567 = vsel %vm1476, %v2565, %v2566
  %v2568 = vld [vmem:[%s5 + $0xf0] sm:$0xf]
  %v2569 = vld [vmem:[%s5 + $0xf4] sm:$0xf]
  %v2570 = vld [vmem:[%s5 + $0xf8] sm:$0xf]
  %v2571 = vld [vmem:[%s5 + $0xfc] sm:$0xf]
  %v2572 = vld [vmem:[%s5 + $0x100] sm:$0xf]
  %v2573 = vld [vmem:[%s5 + $0x104] sm:$0xf]
  %v2574 = vld [vmem:[%s5 + $0x108] sm:$0xf]
  %v2575 = vld [vmem:[%s5 + $0x10c] sm:$0xf]
  %v2576 = vld [vmem:[%s5 + $0x110] sm:$0xf]
  %v2577 = vld [vmem:[%s5 + $0x114] sm:$0xf]
  %v2578 = vld [vmem:[%s5 + $0x118] sm:$0xf]
  %v2579 = vld [vmem:[%s5 + $0x11c] sm:$0xf]
  %v2580 = vunpack.c.l.b16 %v2507
  %v2581 = vunpack.c.l.b16 %v2511
  %v2582 = vunpack.c.l.b16 %v2515
  %v2583 = vunpack.c.l.b16 %v2519
  %v2584 = vunpack.c.l.b16 %v2523
  %v2585 = vunpack.c.l.b16 %v2527
  %v2586 = vunpack.c.l.b16 %v2531
  %v2587 = vunpack.c.l.b16 %v2535
  %v2588 = vunpack.c.l.b16 %v2539
  %v2589 = vunpack.c.l.b16 %v2543
  %v2590 = vunpack.c.l.b16 %v2547
  %v2591 = vunpack.c.l.b16 %v2551
  %v2592 = vunpack.c.l.b16 %v2555
  %v2593 = vunpack.c.l.b16 %v2559
  %v2594 = vunpack.c.l.b16 %v2563
  %v2595 = vunpack.c.l.b16 %v2567
  %v2596 = vpack.c.b16 %v2581, %v2580
  %v2597 = vpack.c.b16 %v2583, %v2582
  %v2598 = vpack.c.b16 %v2585, %v2584
  %v2599 = vpack.c.b16 %v2587, %v2586
  %v2600 = vpack.c.b16 %v2589, %v2588
  %v2601 = vpack.c.b16 %v2591, %v2590
  %v2602 = vpack.c.b16 %v2593, %v2592
  %v2603 = vpack.c.b16 %v2595, %v2594
  %v2616 = vunpack.c.l.b16 %v2568
  %v2617 = vunpack.c.l.b16 %v2569
  %v2618 = vunpack.c.l.b16 %v2570
  %v2619 = vunpack.c.l.b16 %v2571
  %v2620 = vunpack.c.l.b16 %v2572
  %v2621 = vunpack.c.l.b16 %v2573
  %v2622 = vunpack.c.l.b16 %v2574
  %v2623 = vunpack.c.l.b16 %v2575
  %v2624 = vunpack.c.l.b16 %v2576
  %v2625 = vunpack.c.l.b16 %v2577
  %v2626 = vunpack.c.l.b16 %v2578
  %v2627 = vunpack.c.l.b16 %v2579
  %v2628 = vpack.c.b16 %v2617, %v2616
  %v2629 = vpack.c.b16 %v2619, %v2618
  %v2630 = vpack.c.b16 %v2621, %v2620
  %v2631 = vpack.c.b16 %v2623, %v2622
  %v2632 = vpack.c.b16 %v2625, %v2624
  %v2633 = vpack.c.b16 %v2627, %v2626
  %v2641 = vsel %vm1107, %v2596, 0
  %v2644 = vsel %vm1107, %v2597, 0
  %v2647 = vsel %vm1107, %v2598, 0
  %v2650 = vsel %vm1107, %v2599, 0
  %v2653 = vsel %vm1107, %v2600, 0
  %v2656 = vsel %vm1107, %v2601, 0
  %v2659 = vsel %vm1107, %v2602, 0
  %v2662 = vsel %vm1107, %v2603, 0
  %2664 = vmatprep.subr.bf16.mxu0 0
  %2665 = vmatpush1.bf16.msra.mxu0 %v2628
  %2666 = vmatprep.subr.bf16.mxu0 0
  %2667 = vmatpush1.bf16.msra.mxu0 %v2629
  %2668 = vmatprep.subr.bf16.mxu0 0
  %2669 = vmatpush1.bf16.msra.mxu0 %v2630
  %2670 = vmatprep.subr.bf16.mxu0 0
  %2671 = vmatpush1.bf16.msra.mxu0 %v2631
  %2672 = vmatprep.subr.bf16.mxu0 0
  %2673 = vmatpush1.bf16.msra.mxu0 %v2632
  %2674 = vmatprep.subr.bf16.mxu0 0
  %2675 = vmatpush1.bf16.msra.mxu0 %v2633
  %2676 = vmatprep.subr.bf16.mxu0 0
  %2677 = vmatpush1.bf16.msra.mxu0 0
  %2678 = vmatprep.subr.bf16.mxu0 0
  %2679 = vmatpush1.bf16.msra.mxu0 0
  %2680 = vmatprep.subr.bf16.mxu0 0
  %2681 = vmatpush1.bf16.msra.mxu0 0
  %2682 = vmatprep.subr.bf16.mxu0 0
  %2683 = vmatpush1.bf16.msra.mxu0 0
  %2684 = vmatprep.subr.bf16.mxu0 0
  %2685 = vmatpush1.bf16.msra.mxu0 0
  %2686 = vmatprep.subr.bf16.mxu0 0
  %2687 = vmatpush1.bf16.msra.mxu0 0
  %2688 = vmatprep.subr.bf16.mxu0 0
  %2689 = vmatpush1.bf16.msra.mxu0 0
  %2690 = vmatprep.subr.bf16.mxu0 0
  %2691 = vmatpush1.bf16.msra.mxu0 0
  %2692 = vmatprep.subr.bf16.mxu0 0
  %2693 = vmatpush1.bf16.msra.mxu0 0
  %2694 = vmatprep.subr.bf16.mxu0 0
  %2695 = vmatpush1.bf16.msra.mxu0 0
  %2696 = vmatprep.mubr.bf16.mxu0 0
  %2697 = vmatmul.mubr.bf16.gmra.mrb[0].mxu0 %v2641
  %v2698 = vpop.f32.mrb[0].mxu0
  %v2699 = vadd.f32 0.0, %v2698
  %v2700 = vpop.f32.mrb[0].mxu0
  %v2701 = vpop.f32.mrb[0].mxu0
  %v2702 = vadd.f32 0.0, %v2701
  %v2703 = vpop.f32.mrb[0].mxu0
  %2704 = vmatprep.mubr.bf16.mxu0 0
  %2705 = vmatmul.mubr.bf16.gmra.mrb[0].mxu0 %v2644
  %v2706 = vpop.f32.mrb[0].mxu0
  %v2707 = vadd.f32 0.0, %v2706
  %v2708 = vpop.f32.mrb[0].mxu0
  %v2709 = vpop.f32.mrb[0].mxu0
  %v2710 = vadd.f32 0.0, %v2709
  %v2711 = vpop.f32.mrb[0].mxu0
  %2712 = vmatprep.mubr.bf16.mxu0 0
  %2713 = vmatmul.mubr.bf16.gmra.mrb[0].mxu0 %v2647
  %v2714 = vpop.f32.mrb[0].mxu0
  %v2715 = vadd.f32 0.0, %v2714
  %v2716 = vpop.f32.mrb[0].mxu0
  %v2717 = vpop.f32.mrb[0].mxu0
  %v2718 = vadd.f32 0.0, %v2717
  %v2719 = vpop.f32.mrb[0].mxu0
  %2720 = vmatprep.mubr.bf16.mxu0 0
  %2721 = vmatmul.mubr.bf16.gmra.mrb[0].mxu0 %v2650
  %v2722 = vpop.f32.mrb[0].mxu0
  %v2723 = vadd.f32 0.0, %v2722
  %v2724 = vpop.f32.mrb[0].mxu0
  %v2725 = vpop.f32.mrb[0].mxu0
  %v2726 = vadd.f32 0.0, %v2725
  %v2727 = vpop.f32.mrb[0].mxu0
  %2728 = vmatprep.mubr.bf16.mxu0 0
  %2729 = vmatmul.mubr.bf16.gmra.mrb[0].mxu0 %v2653
  %v2730 = vpop.f32.mrb[0].mxu0
  %v2731 = vadd.f32 0.0, %v2730
  %v2732 = vpop.f32.mrb[0].mxu0
  %v2733 = vpop.f32.mrb[0].mxu0
  %v2734 = vadd.f32 0.0, %v2733
  %v2735 = vpop.f32.mrb[0].mxu0
  %2736 = vmatprep.mubr.bf16.mxu0 0
  %2737 = vmatmul.mubr.bf16.gmra.mrb[0].mxu0 %v2656
  %v2738 = vpop.f32.mrb[0].mxu0
  %v2739 = vadd.f32 0.0, %v2738
  %v2740 = vpop.f32.mrb[0].mxu0
  %v2741 = vpop.f32.mrb[0].mxu0
  %v2742 = vadd.f32 0.0, %v2741
  %v2743 = vpop.f32.mrb[0].mxu0
  %2744 = vmatprep.mubr.bf16.mxu0 0
  %2745 = vmatmul.mubr.bf16.gmra.mrb[0].mxu0 %v2659
  %v2746 = vpop.f32.mrb[0].mxu0
  %v2747 = vadd.f32 0.0, %v2746
  %v2748 = vpop.f32.mrb[0].mxu0
  %v2749 = vpop.f32.mrb[0].mxu0
  %v2750 = vadd.f32 0.0, %v2749
  %v2751 = vpop.f32.mrb[0].mxu0
  %2752 = vmatprep.mubr.bf16.mxu0 0
  %2753 = vmatmul.mubr.bf16.gmra.mrb[0].mxu0 %v2662
  %v2754 = vpop.f32.mrb[0].mxu0
  %v2755 = vadd.f32 0.0, %v2754
  %v2756 = vpop.f32.mrb[0].mxu0
  %v2757 = vpop.f32.mrb[0].mxu0
  %v2758 = vadd.f32 0.0, %v2757
  %v2759 = vpop.f32.mrb[0].mxu0
  %2760 = vdwg.mxu0
  %v2761 = vadd.f32 %v2440, %v2699
  %v2762 = vadd.f32 %v2441, %v2702
  %v2763 = vadd.f32 %v2442, %v2707
  %v2764 = vadd.f32 %v2443, %v2710
  %v2765 = vadd.f32 %v2444, %v2715
  %v2766 = vadd.f32 %v2445, %v2718
  %v2767 = vadd.f32 %v2446, %v2723
  %v2768 = vadd.f32 %v2447, %v2726
  %v2769 = vadd.f32 %v2448, %v2731
  %v2770 = vadd.f32 %v2449, %v2734
  %v2771 = vadd.f32 %v2450, %v2739
  %v2772 = vadd.f32 %v2451, %v2742
  %v2773 = vadd.f32 %v2452, %v2747
  %v2774 = vadd.f32 %v2453, %v2750
  %v2775 = vadd.f32 %v2454, %v2755
  %v2776 = vadd.f32 %v2455, %v2758
  %s2777 = scalar_lea.vmem [#allocation2], 16
  %v2778 = vld [vmem:[%s2777] sm:$0xf]
  %v2779 = vld [vmem:[%s2777 + $0x8] sm:$0xf]
  %v2780 = vld [vmem:[%s2777 + $0x10] sm:$0xf]
  %v2781 = vld [vmem:[%s2777 + $0x18] sm:$0xf]
  %v2782 = vld [vmem:[%s2777 + $0x20] sm:$0xf]
  %v2783 = vld [vmem:[%s2777 + $0x28] sm:$0xf]
  %v2784 = vld [vmem:[%s2777 + $0x30] sm:$0xf]
  %v2785 = vld [vmem:[%s2777 + $0x38] sm:$0xf]
  %v2786 = vld [vmem:[%s2777 + $0x50] sm:$0xf]
  %v2787 = vld [vmem:[%s2777 + $0x58] sm:$0xf]
  %v2788 = vld [vmem:[%s2777 + $0x60] sm:$0xf]
  %v2789 = vld [vmem:[%s2777 + $0x68] sm:$0xf]
  %v2790 = vld [vmem:[%s2777 + $0x70] sm:$0xf]
  %v2791 = vld [vmem:[%s2777 + $0x78] sm:$0xf]
  %v2792 = vld [vmem:[%s2777 + $0x80] sm:$0xf]
  %v2793 = vld [vmem:[%s2777 + $0x88] sm:$0xf]
  %v2794 = vld [vmem:[%s5 + $0x120] sm:$0xf]
  %v2795 = vld [vmem:[%s5 + $0x124] sm:$0xf]
  %v2796 = vld [vmem:[%s5 + $0x128] sm:$0xf]
  %v2797 = vld [vmem:[%s5 + $0x12c] sm:$0xf]
  %v2798 = vld [vmem:[%s5 + $0x130] sm:$0xf]
  %v2799 = vld [vmem:[%s5 + $0x134] sm:$0xf]
  %v2800 = vld [vmem:[%s5 + $0x138] sm:$0xf]
  %v2801 = vld [vmem:[%s5 + $0x13c] sm:$0xf]
  %v2802 = vld [vmem:[%s5 + $0x140] sm:$0xf]
  %v2803 = vld [vmem:[%s5 + $0x144] sm:$0xf]
  %v2804 = vld [vmem:[%s5 + $0x148] sm:$0xf]
  %v2805 = vld [vmem:[%s5 + $0x14c] sm:$0xf]
  %v2822 = vunpack.c.l.b16 %v2778
  %v2823 = vunpack.c.l.b16 %v2779
  %v2824 = vunpack.c.l.b16 %v2780
  %v2825 = vunpack.c.l.b16 %v2781
  %v2826 = vunpack.c.l.b16 %v2782
  %v2827 = vunpack.c.l.b16 %v2783
  %v2828 = vunpack.c.l.b16 %v2784
  %v2829 = vunpack.c.l.b16 %v2785
  %v2830 = vunpack.c.l.b16 %v2786
  %v2831 = vunpack.c.l.b16 %v2787
  %v2832 = vunpack.c.l.b16 %v2788
  %v2833 = vunpack.c.l.b16 %v2789
  %v2834 = vunpack.c.l.b16 %v2790
  %v2835 = vunpack.c.l.b16 %v2791
  %v2836 = vunpack.c.l.b16 %v2792
  %v2837 = vunpack.c.l.b16 %v2793
  %v2838 = vpack.c.b16 %v2823, %v2822
  %v2839 = vpack.c.b16 %v2825, %v2824
  %v2840 = vpack.c.b16 %v2827, %v2826
  %v2841 = vpack.c.b16 %v2829, %v2828
  %v2842 = vpack.c.b16 %v2831, %v2830
  %v2843 = vpack.c.b16 %v2833, %v2832
  %v2844 = vpack.c.b16 %v2835, %v2834
  %v2845 = vpack.c.b16 %v2837, %v2836
  %v2858 = vunpack.c.l.b16 %v2794
  %v2859 = vunpack.c.l.b16 %v2795
  %v2860 = vunpack.c.l.b16 %v2796
  %v2861 = vunpack.c.l.b16 %v2797
  %v2862 = vunpack.c.l.b16 %v2798
  %v2863 = vunpack.c.l.b16 %v2799
  %v2864 = vunpack.c.l.b16 %v2800
  %v2865 = vunpack.c.l.b16 %v2801
  %v2866 = vunpack.c.l.b16 %v2802
  %v2867 = vunpack.c.l.b16 %v2803
  %v2868 = vunpack.c.l.b16 %v2804
  %v2869 = vunpack.c.l.b16 %v2805
  %v2870 = vpack.c.b16 %v2859, %v2858
  %v2871 = vpack.c.b16 %v2861, %v2860
  %v2872 = vpack.c.b16 %v2863, %v2862
  %v2873 = vpack.c.b16 %v2865, %v2864
  %v2874 = vpack.c.b16 %v2867, %v2866
  %v2875 = vpack.c.b16 %v2869, %v2868
  %v2883 = vsel %vm1107, %v2838, 0
  %v2886 = vsel %vm1107, %v2839, 0
  %v2889 = vsel %vm1107, %v2840, 0
  %v2892 = vsel %vm1107, %v2841, 0
  %v2895 = vsel %vm1107, %v2842, 0
  %v2898 = vsel %vm1107, %v2843, 0
  %v2901 = vsel %vm1107, %v2844, 0
  %v2904 = vsel %vm1107, %v2845, 0
  %2906 = vmatprep.subr.bf16.mxu0 0
  %2907 = vmatpush1.bf16.msra.mxu0 %v2870
  %2908 = vmatprep.subr.bf16.mxu0 0
  %2909 = vmatpush1.bf16.msra.mxu0 %v2871
  %2910 = vmatprep.subr.bf16.mxu0 0
  %2911 = vmatpush1.bf16.msra.mxu0 %v2872
  %2912 = vmatprep.subr.bf16.mxu0 0
  %2913 = vmatpush1.bf16.msra.mxu0 %v2873
  %2914 = vmatprep.subr.bf16.mxu0 0
  %2915 = vmatpush1.bf16.msra.mxu0 %v2874
  %2916 = vmatprep.subr.bf16.mxu0 0
  %2917 = vmatpush1.bf16.msra.mxu0 %v2875
  %2918 = vmatprep.subr.bf16.mxu0 0
  %2919 = vmatpush1.bf16.msra.mxu0 0
  %2920 = vmatprep.subr.bf16.mxu0 0
  %2921 = vmatpush1.bf16.msra.mxu0 0
  %2922 = vmatprep.subr.bf16.mxu0 0
  %2923 = vmatpush1.bf16.msra.mxu0 0
  %2924 = vmatprep.subr.bf16.mxu0 0
  %2925 = vmatpush1.bf16.msra.mxu0 0
  %2926 = vmatprep.subr.bf16.mxu0 0
  %2927 = vmatpush1.bf16.msra.mxu0 0
  %2928 = vmatprep.subr.bf16.mxu0 0
  %2929 = vmatpush1.bf16.msra.mxu0 0
  %2930 = vmatprep.subr.bf16.mxu0 0
  %2931 = vmatpush1.bf16.msra.mxu0 0
  %2932 = vmatprep.subr.bf16.mxu0 0
  %2933 = vmatpush1.bf16.msra.mxu0 0
  %2934 = vmatprep.subr.bf16.mxu0 0
  %2935 = vmatpush1.bf16.msra.mxu0 0
  %2936 = vmatprep.subr.bf16.mxu0 0
  %2937 = vmatpush1.bf16.msra.mxu0 0
  %2938 = vmatprep.mubr.bf16.mxu0 0
  %2939 = vmatmul.mubr.bf16.gmra.mrb[0].mxu0 %v2883
  %v2940 = vpop.f32.mrb[0].mxu0
  %v2941 = vadd.f32 0.0, %v2940
  %v2942 = vpop.f32.mrb[0].mxu0
  %v2943 = vpop.f32.mrb[0].mxu0
  %v2944 = vadd.f32 0.0, %v2943
  %v2945 = vpop.f32.mrb[0].mxu0
  %2946 = vmatprep.mubr.bf16.mxu0 0
  %2947 = vmatmul.mubr.bf16.gmra.mrb[0].mxu0 %v2886
  %v2948 = vpop.f32.mrb[0].mxu0
  %v2949 = vadd.f32 0.0, %v2948
  %v2950 = vpop.f32.mrb[0].mxu0
  %v2951 = vpop.f32.mrb[0].mxu0
  %v2952 = vadd.f32 0.0, %v2951
  %v2953 = vpop.f32.mrb[0].mxu0
  %2954 = vmatprep.mubr.bf16.mxu0 0
  %2955 = vmatmul.mubr.bf16.gmra.mrb[0].mxu0 %v2889
  %v2956 = vpop.f32.mrb[0].mxu0
  %v2957 = vadd.f32 0.0, %v2956
  %v2958 = vpop.f32.mrb[0].mxu0
  %v2959 = vpop.f32.mrb[0].mxu0
  %v2960 = vadd.f32 0.0, %v2959
  %v2961 = vpop.f32.mrb[0].mxu0
  %2962 = vmatprep.mubr.bf16.mxu0 0
  %2963 = vmatmul.mubr.bf16.gmra.mrb[0].mxu0 %v2892
  %v2964 = vpop.f32.mrb[0].mxu0
  %v2965 = vadd.f32 0.0, %v2964
  %v2966 = vpop.f32.mrb[0].mxu0
  %v2967 = vpop.f32.mrb[0].mxu0
  %v2968 = vadd.f32 0.0, %v2967
  %v2969 = vpop.f32.mrb[0].mxu0
  %2970 = vmatprep.mubr.bf16.mxu0 0
  %2971 = vmatmul.mubr.bf16.gmra.mrb[0].mxu0 %v2895
  %v2972 = vpop.f32.mrb[0].mxu0
  %v2973 = vadd.f32 0.0, %v2972
  %v2974 = vpop.f32.mrb[0].mxu0
  %v2975 = vpop.f32.mrb[0].mxu0
  %v2976 = vadd.f32 0.0, %v2975
  %v2977 = vpop.f32.mrb[0].mxu0
  %2978 = vmatprep.mubr.bf16.mxu0 0
  %2979 = vmatmul.mubr.bf16.gmra.mrb[0].mxu0 %v2898
  %v2980 = vpop.f32.mrb[0].mxu0
  %v2981 = vadd.f32 0.0, %v2980
  %v2982 = vpop.f32.mrb[0].mxu0
  %v2983 = vpop.f32.mrb[0].mxu0
  %v2984 = vadd.f32 0.0, %v2983
  %v2985 = vpop.f32.mrb[0].mxu0
  %2986 = vmatprep.mubr.bf16.mxu0 0
  %2987 = vmatmul.mubr.bf16.gmra.mrb[0].mxu0 %v2901
  %v2988 = vpop.f32.mrb[0].mxu0
  %v2989 = vadd.f32 0.0, %v2988
  %v2990 = vpop.f32.mrb[0].mxu0
  %v2991 = vpop.f32.mrb[0].mxu0
  %v2992 = vadd.f32 0.0, %v2991
  %v2993 = vpop.f32.mrb[0].mxu0
  %2994 = vmatprep.mubr.bf16.mxu0 0
  %2995 = vmatmul.mubr.bf16.gmra.mrb[0].mxu0 %v2904
  %v2996 = vpop.f32.mrb[0].mxu0
  %v2997 = vadd.f32 0.0, %v2996
  %v2998 = vpop.f32.mrb[0].mxu0
  %v2999 = vpop.f32.mrb[0].mxu0
  %v3000 = vadd.f32 0.0, %v2999
  %v3001 = vpop.f32.mrb[0].mxu0
  %3002 = vdwg.mxu0
  %v3003 = vadd.f32 %v2761, %v2941
  %v3004 = vadd.f32 %v2762, %v2944
  %v3005 = vadd.f32 %v2763, %v2949
  %v3006 = vadd.f32 %v2764, %v2952
  %v3007 = vadd.f32 %v2765, %v2957
  %v3008 = vadd.f32 %v2766, %v2960
  %v3009 = vadd.f32 %v2767, %v2965
  %v3010 = vadd.f32 %v2768, %v2968
  %v3011 = vadd.f32 %v2769, %v2973
  %v3012 = vadd.f32 %v2770, %v2976
  %v3013 = vadd.f32 %v2771, %v2981
  %v3014 = vadd.f32 %v2772, %v2984
  %v3015 = vadd.f32 %v2773, %v2989
  %v3016 = vadd.f32 %v2774, %v2992
  %v3017 = vadd.f32 %v2775, %v2997
  %v3018 = vadd.f32 %v2776, %v3000
  %v3019 = vld [vmem:[%s2777] sm:$0xf]
  %v3020 = vld [vmem:[%s2777 + $0x4] sm:$0x1]
  %v3021 = vld [vmem:[%s2777 + $0x8] sm:$0xf]
  %v3022 = vld [vmem:[%s2777 + $0xc] sm:$0x1]
  %v3023 = vld [vmem:[%s2777 + $0x10] sm:$0xf]
  %v3024 = vld [vmem:[%s2777 + $0x14] sm:$0x1]
  %v3025 = vld [vmem:[%s2777 + $0x18] sm:$0xf]
  %v3026 = vld [vmem:[%s2777 + $0x1c] sm:$0x1]
  %v3027 = vld [vmem:[%s2777 + $0x20] sm:$0xf]
  %v3028 = vld [vmem:[%s2777 + $0x24] sm:$0x1]
  %v3029 = vld [vmem:[%s2777 + $0x28] sm:$0xf]
  %v3030 = vld [vmem:[%s2777 + $0x2c] sm:$0x1]
  %v3031 = vld [vmem:[%s2777 + $0x30] sm:$0xf]
  %v3032 = vld [vmem:[%s2777 + $0x34] sm:$0x1]
  %v3033 = vld [vmem:[%s2777 + $0x38] sm:$0xf]
  %v3034 = vld [vmem:[%s2777 + $0x3c] sm:$0x1]
  %v3035 = vld [vmem:[%s2777 + $0x50] sm:$0xf]
  %v3036 = vld [vmem:[%s2777 + $0x54] sm:$0x1]
  %v3037 = vld [vmem:[%s2777 + $0x58] sm:$0xf]
  %v3038 = vld [vmem:[%s2777 + $0x5c] sm:$0x1]
  %v3039 = vld [vmem:[%s2777 + $0x60] sm:$0xf]
  %v3040 = vld [vmem:[%s2777 + $0x64] sm:$0x1]
  %v3041 = vld [vmem:[%s2777 + $0x68] sm:$0xf]
  %v3042 = vld [vmem:[%s2777 + $0x6c] sm:$0x1]
  %v3043 = vld [vmem:[%s2777 + $0x70] sm:$0xf]
  %v3044 = vld [vmem:[%s2777 + $0x74] sm:$0x1]
  %v3045 = vld [vmem:[%s2777 + $0x78] sm:$0xf]
  %v3046 = vld [vmem:[%s2777 + $0x7c] sm:$0x1]
  %v3047 = vld [vmem:[%s2777 + $0x80] sm:$0xf]
  %v3048 = vld [vmem:[%s2777 + $0x84] sm:$0x1]
  %v3049 = vld [vmem:[%s2777 + $0x88] sm:$0xf]
  %v3050 = vld [vmem:[%s2777 + $0x8c] sm:$0x1]
  %v3052 = vshrl.u32 %v3019, 16
  %v3054 = vrot.slane %v3052, 4
  %v3055 = vshll.u32 %v3019, 16
  %v3057 = vrot.slane %v3055, 5
  %v3058 = vor.u32 %v3054, %v3057
  %v3059 = vrot.slane %v3058, 4
  %v3061 = vshll.u32 %v3020, 16
  %v3063 = vrot.slane %v3061, 5
  %v3064 = vsel %vm810, %v3059, %v3063
  %v3066 = vshrl.u32 %v3021, 16
  %v3068 = vrot.slane %v3066, 4
  %v3069 = vshll.u32 %v3021, 16
  %v3071 = vrot.slane %v3069, 5
  %v3072 = vor.u32 %v3068, %v3071
  %v3073 = vrot.slane %v3072, 4
  %v3075 = vshll.u32 %v3022, 16
  %v3077 = vrot.slane %v3075, 5
  %v3078 = vsel %vm810, %v3073, %v3077
  %v3080 = vshrl.u32 %v3023, 16
  %v3082 = vrot.slane %v3080, 4
  %v3083 = vshll.u32 %v3023, 16
  %v3085 = vrot.slane %v3083, 5
  %v3086 = vor.u32 %v3082, %v3085
  %v3087 = vrot.slane %v3086, 4
  %v3089 = vshll.u32 %v3024, 16
  %v3091 = vrot.slane %v3089, 5
  %v3092 = vsel %vm810, %v3087, %v3091
  %v3094 = vshrl.u32 %v3025, 16
  %v3096 = vrot.slane %v3094, 4
  %v3097 = vshll.u32 %v3025, 16
  %v3099 = vrot.slane %v3097, 5
  %v3100 = vor.u32 %v3096, %v3099
  %v3101 = vrot.slane %v3100, 4
  %v3103 = vshll.u32 %v3026, 16
  %v3105 = vrot.slane %v3103, 5
  %v3106 = vsel %vm810, %v3101, %v3105
  %v3108 = vshrl.u32 %v3027, 16
  %v3110 = vrot.slane %v3108, 4
  %v3111 = vshll.u32 %v3027, 16
  %v3113 = vrot.slane %v3111, 5
  %v3114 = vor.u32 %v3110, %v3113
  %v3115 = vrot.slane %v3114, 4
  %v3117 = vshll.u32 %v3028, 16
  %v3119 = vrot.slane %v3117, 5
  %v3120 = vsel %vm810, %v3115, %v3119
  %v3122 = vshrl.u32 %v3029, 16
  %v3124 = vrot.slane %v3122, 4
  %v3125 = vshll.u32 %v3029, 16
  %v3127 = vrot.slane %v3125, 5
  %v3128 = vor.u32 %v3124, %v3127
  %v3129 = vrot.slane %v3128, 4
  %v3131 = vshll.u32 %v3030, 16
  %v3133 = vrot.slane %v3131, 5
  %v3134 = vsel %vm810, %v3129, %v3133
  %v3136 = vshrl.u32 %v3031, 16
  %v3138 = vrot.slane %v3136, 4
  %v3139 = vshll.u32 %v3031, 16
  %v3141 = vrot.slane %v3139, 5
  %v3142 = vor.u32 %v3138, %v3141
  %v3143 = vrot.slane %v3142, 4
  %v3145 = vshll.u32 %v3032, 16
  %v3147 = vrot.slane %v3145, 5
  %v3148 = vsel %vm810, %v3143, %v3147
  %v3150 = vshrl.u32 %v3033, 16
  %v3152 = vrot.slane %v3150, 4
  %v3153 = vshll.u32 %v3033, 16
  %v3155 = vrot.slane %v3153, 5
  %v3156 = vor.u32 %v3152, %v3155
  %v3157 = vrot.slane %v3156, 4
  %v3159 = vshll.u32 %v3034, 16
  %v3161 = vrot.slane %v3159, 5
  %v3162 = vsel %vm810, %v3157, %v3161
  %v3164 = vshrl.u32 %v3035, 16
  %v3166 = vrot.slane %v3164, 4
  %v3167 = vshll.u32 %v3035, 16
  %v3169 = vrot.slane %v3167, 5
  %v3170 = vor.u32 %v3166, %v3169
  %v3171 = vrot.slane %v3170, 4
  %v3173 = vshll.u32 %v3036, 16
  %v3175 = vrot.slane %v3173, 5
  %v3176 = vsel %vm810, %v3171, %v3175
  %v3178 = vshrl.u32 %v3037, 16
  %v3180 = vrot.slane %v3178, 4
  %v3181 = vshll.u32 %v3037, 16
  %v3183 = vrot.slane %v3181, 5
  %v3184 = vor.u32 %v3180, %v3183
  %v3185 = vrot.slane %v3184, 4
  %v3187 = vshll.u32 %v3038, 16
  %v3189 = vrot.slane %v3187, 5
  %v3190 = vsel %vm810, %v3185, %v3189
  %v3192 = vshrl.u32 %v3039, 16
  %v3194 = vrot.slane %v3192, 4
  %v3195 = vshll.u32 %v3039, 16
  %v3197 = vrot.slane %v3195, 5
  %v3198 = vor.u32 %v3194, %v3197
  %v3199 = vrot.slane %v3198, 4
  %v3201 = vshll.u32 %v3040, 16
  %v3203 = vrot.slane %v3201, 5
  %v3204 = vsel %vm810, %v3199, %v3203
  %v3206 = vshrl.u32 %v3041, 16
  %v3208 = vrot.slane %v3206, 4
  %v3209 = vshll.u32 %v3041, 16
  %v3211 = vrot.slane %v3209, 5
  %v3212 = vor.u32 %v3208, %v3211
  %v3213 = vrot.slane %v3212, 4
  %v3215 = vshll.u32 %v3042, 16
  %v3217 = vrot.slane %v3215, 5
  %v3218 = vsel %vm810, %v3213, %v3217
  %v3220 = vshrl.u32 %v3043, 16
  %v3222 = vrot.slane %v3220, 4
  %v3223 = vshll.u32 %v3043, 16
  %v3225 = vrot.slane %v3223, 5
  %v3226 = vor.u32 %v3222, %v3225
  %v3227 = vrot.slane %v3226, 4
  %v3229 = vshll.u32 %v3044, 16
  %v3231 = vrot.slane %v3229, 5
  %v3232 = vsel %vm810, %v3227, %v3231
  %v3234 = vshrl.u32 %v3045, 16
  %v3236 = vrot.slane %v3234, 4
  %v3237 = vshll.u32 %v3045, 16
  %v3239 = vrot.slane %v3237, 5
  %v3240 = vor.u32 %v3236, %v3239
  %v3241 = vrot.slane %v3240, 4
  %v3243 = vshll.u32 %v3046, 16
  %v3245 = vrot.slane %v3243, 5
  %v3246 = vsel %vm810, %v3241, %v3245
  %v3248 = vshrl.u32 %v3047, 16
  %v3250 = vrot.slane %v3248, 4
  %v3251 = vshll.u32 %v3047, 16
  %v3253 = vrot.slane %v3251, 5
  %v3254 = vor.u32 %v3250, %v3253
  %v3255 = vrot.slane %v3254, 4
  %v3257 = vshll.u32 %v3048, 16
  %v3259 = vrot.slane %v3257, 5
  %v3260 = vsel %vm810, %v3255, %v3259
  %v3262 = vshrl.u32 %v3049, 16
  %v3264 = vrot.slane %v3262, 4
  %v3265 = vshll.u32 %v3049, 16
  %v3267 = vrot.slane %v3265, 5
  %v3268 = vor.u32 %v3264, %v3267
  %v3269 = vrot.slane %v3268, 4
  %v3271 = vshll.u32 %v3050, 16
  %v3273 = vrot.slane %v3271, 5
  %v3274 = vsel %vm810, %v3269, %v3273
  %v3275 = vld [vmem:[%s5 + $0x150] sm:$0xf]
  %v3276 = vld [vmem:[%s5 + $0x154] sm:$0xf]
  %v3277 = vld [vmem:[%s5 + $0x158] sm:$0xf]
  %v3278 = vld [vmem:[%s5 + $0x15c] sm:$0xf]
  %v3279 = vld [vmem:[%s5 + $0x160] sm:$0xf]
  %v3280 = vld [vmem:[%s5 + $0x164] sm:$0xf]
  %v3281 = vld [vmem:[%s5 + $0x168] sm:$0xf]
  %v3282 = vld [vmem:[%s5 + $0x16c] sm:$0xf]
  %v3283 = vld [vmem:[%s5 + $0x170] sm:$0xf]
  %v3284 = vld [vmem:[%s5 + $0x174] sm:$0xf]
  %v3285 = vld [vmem:[%s5 + $0x178] sm:$0xf]
  %v3286 = vld [vmem:[%s5 + $0x17c] sm:$0xf]
  %v3287 = vunpack.c.l.b16 %v3064
  %v3288 = vunpack.c.l.b16 %v3078
  %v3289 = vunpack.c.l.b16 %v3092
  %v3290 = vunpack.c.l.b16 %v3106
  %v3291 = vunpack.c.l.b16 %v3120
  %v3292 = vunpack.c.l.b16 %v3134
  %v3293 = vunpack.c.l.b16 %v3148
  %v3294 = vunpack.c.l.b16 %v3162
  %v3295 = vunpack.c.l.b16 %v3176
  %v3296 = vunpack.c.l.b16 %v3190
  %v3297 = vunpack.c.l.b16 %v3204
  %v3298 = vunpack.c.l.b16 %v3218
  %v3299 = vunpack.c.l.b16 %v3232
  %v3300 = vunpack.c.l.b16 %v3246
  %v3301 = vunpack.c.l.b16 %v3260
  %v3302 = vunpack.c.l.b16 %v3274
  %v3303 = vpack.c.b16 %v3288, %v3287
  %v3304 = vpack.c.b16 %v3290, %v3289
  %v3305 = vpack.c.b16 %v3292, %v3291
  %v3306 = vpack.c.b16 %v3294, %v3293
  %v3307 = vpack.c.b16 %v3296, %v3295
  %v3308 = vpack.c.b16 %v3298, %v3297
  %v3309 = vpack.c.b16 %v3300, %v3299
  %v3310 = vpack.c.b16 %v3302, %v3301
  %v3323 = vunpack.c.l.b16 %v3275
  %v3324 = vunpack.c.l.b16 %v3276
  %v3325 = vunpack.c.l.b16 %v3277
  %v3326 = vunpack.c.l.b16 %v3278
  %v3327 = vunpack.c.l.b16 %v3279
  %v3328 = vunpack.c.l.b16 %v3280
  %v3329 = vunpack.c.l.b16 %v3281
  %v3330 = vunpack.c.l.b16 %v3282
  %v3331 = vunpack.c.l.b16 %v3283
  %v3332 = vunpack.c.l.b16 %v3284
  %v3333 = vunpack.c.l.b16 %v3285
  %v3334 = vunpack.c.l.b16 %v3286
  %v3335 = vpack.c.b16 %v3324, %v3323
  %v3336 = vpack.c.b16 %v3326, %v3325
  %v3337 = vpack.c.b16 %v3328, %v3327
  %v3338 = vpack.c.b16 %v3330, %v3329
  %v3339 = vpack.c.b16 %v3332, %v3331
  %v3340 = vpack.c.b16 %v3334, %v3333
  %v3348 = vsel %vm1107, %v3303, 0
  %v3351 = vsel %vm1107, %v3304, 0
  %v3354 = vsel %vm1107, %v3305, 0
  %v3357 = vsel %vm1107, %v3306, 0
  %v3360 = vsel %vm1107, %v3307, 0
  %v3363 = vsel %vm1107, %v3308, 0
  %v3366 = vsel %vm1107, %v3309, 0
  %v3369 = vsel %vm1107, %v3310, 0
  %3371 = vmatprep.subr.bf16.mxu0 0
  %3372 = vmatpush1.bf16.msra.mxu0 %v3335
  %3373 = vmatprep.subr.bf16.mxu0 0
  %3374 = vmatpush1.bf16.msra.mxu0 %v3336
  %3375 = vmatprep.subr.bf16.mxu0 0
  %3376 = vmatpush1.bf16.msra.mxu0 %v3337
  %3377 = vmatprep.subr.bf16.mxu0 0
  %3378 = vmatpush1.bf16.msra.mxu0 %v3338
  %3379 = vmatprep.subr.bf16.mxu0 0
  %3380 = vmatpush1.bf16.msra.mxu0 %v3339
  %3381 = vmatprep.subr.bf16.mxu0 0
  %3382 = vmatpush1.bf16.msra.mxu0 %v3340
  %3383 = vmatprep.subr.bf16.mxu0 0
  %3384 = vmatpush1.bf16.msra.mxu0 0
  %3385 = vmatprep.subr.bf16.mxu0 0
  %3386 = vmatpush1.bf16.msra.mxu0 0
  %3387 = vmatprep.subr.bf16.mxu0 0
  %3388 = vmatpush1.bf16.msra.mxu0 0
  %3389 = vmatprep.subr.bf16.mxu0 0
  %3390 = vmatpush1.bf16.msra.mxu0 0
  %3391 = vmatprep.subr.bf16.mxu0 0
  %3392 = vmatpush1.bf16.msra.mxu0 0
  %3393 = vmatprep.subr.bf16.mxu0 0
  %3394 = vmatpush1.bf16.msra.mxu0 0
  %3395 = vmatprep.subr.bf16.mxu0 0
  %3396 = vmatpush1.bf16.msra.mxu0 0
  %3397 = vmatprep.subr.bf16.mxu0 0
  %3398 = vmatpush1.bf16.msra.mxu0 0
  %3399 = vmatprep.subr.bf16.mxu0 0
  %3400 = vmatpush1.bf16.msra.mxu0 0
  %3401 = vmatprep.subr.bf16.mxu0 0
  %3402 = vmatpush1.bf16.msra.mxu0 0
  %3403 = vmatprep.mubr.bf16.mxu0 0
  %3404 = vmatmul.mubr.bf16.gmra.mrb[0].mxu0 %v3348
  %v3405 = vpop.f32.mrb[0].mxu0
  %v3406 = vadd.f32 0.0, %v3405
  %v3407 = vpop.f32.mrb[0].mxu0
  %v3408 = vpop.f32.mrb[0].mxu0
  %v3409 = vadd.f32 0.0, %v3408
  %v3410 = vpop.f32.mrb[0].mxu0
  %3411 = vmatprep.mubr.bf16.mxu0 0
  %3412 = vmatmul.mubr.bf16.gmra.mrb[0].mxu0 %v3351
  %v3413 = vpop.f32.mrb[0].mxu0
  %v3414 = vadd.f32 0.0, %v3413
  %v3415 = vpop.f32.mrb[0].mxu0
  %v3416 = vpop.f32.mrb[0].mxu0
  %v3417 = vadd.f32 0.0, %v3416
  %v3418 = vpop.f32.mrb[0].mxu0
  %3419 = vmatprep.mubr.bf16.mxu0 0
  %3420 = vmatmul.mubr.bf16.gmra.mrb[0].mxu0 %v3354
  %v3421 = vpop.f32.mrb[0].mxu0
  %v3422 = vadd.f32 0.0, %v3421
  %v3423 = vpop.f32.mrb[0].mxu0
  %v3424 = vpop.f32.mrb[0].mxu0
  %v3425 = vadd.f32 0.0, %v3424
  %v3426 = vpop.f32.mrb[0].mxu0
  %3427 = vmatprep.mubr.bf16.mxu0 0
  %3428 = vmatmul.mubr.bf16.gmra.mrb[0].mxu0 %v3357
  %v3429 = vpop.f32.mrb[0].mxu0
  %v3430 = vadd.f32 0.0, %v3429
  %v3431 = vpop.f32.mrb[0].mxu0
  %v3432 = vpop.f32.mrb[0].mxu0
  %v3433 = vadd.f32 0.0, %v3432
  %v3434 = vpop.f32.mrb[0].mxu0
  %3435 = vmatprep.mubr.bf16.mxu0 0
  %3436 = vmatmul.mubr.bf16.gmra.mrb[0].mxu0 %v3360
  %v3437 = vpop.f32.mrb[0].mxu0
  %v3438 = vadd.f32 0.0, %v3437
  %v3439 = vpop.f32.mrb[0].mxu0
  %v3440 = vpop.f32.mrb[0].mxu0
  %v3441 = vadd.f32 0.0, %v3440
  %v3442 = vpop.f32.mrb[0].mxu0
  %3443 = vmatprep.mubr.bf16.mxu0 0
  %3444 = vmatmul.mubr.bf16.gmra.mrb[0].mxu0 %v3363
  %v3445 = vpop.f32.mrb[0].mxu0
  %v3446 = vadd.f32 0.0, %v3445
  %v3447 = vpop.f32.mrb[0].mxu0
  %v3448 = vpop.f32.mrb[0].mxu0
  %v3449 = vadd.f32 0.0, %v3448
  %v3450 = vpop.f32.mrb[0].mxu0
  %3451 = vmatprep.mubr.bf16.mxu0 0
  %3452 = vmatmul.mubr.bf16.gmra.mrb[0].mxu0 %v3366
  %v3453 = vpop.f32.mrb[0].mxu0
  %v3454 = vadd.f32 0.0, %v3453
  %v3455 = vpop.f32.mrb[0].mxu0
  %v3456 = vpop.f32.mrb[0].mxu0
  %v3457 = vadd.f32 0.0, %v3456
  %v3458 = vpop.f32.mrb[0].mxu0
  %3459 = vmatprep.mubr.bf16.mxu0 0
  %3460 = vmatmul.mubr.bf16.gmra.mrb[0].mxu0 %v3369
  %v3461 = vpop.f32.mrb[0].mxu0
  %v3462 = vadd.f32 0.0, %v3461
  %v3463 = vpop.f32.mrb[0].mxu0
  %v3464 = vpop.f32.mrb[0].mxu0
  %v3465 = vadd.f32 0.0, %v3464
  %v3466 = vpop.f32.mrb[0].mxu0
  %3467 = vdwg.mxu0
  %v3468 = vadd.f32 %v3003, %v3406
  %v3469 = vadd.f32 %v3004, %v3409
  %v3470 = vadd.f32 %v3005, %v3414
  %v3471 = vadd.f32 %v3006, %v3417
  %v3472 = vadd.f32 %v3007, %v3422
  %v3473 = vadd.f32 %v3008, %v3425
  %v3474 = vadd.f32 %v3009, %v3430
  %v3475 = vadd.f32 %v3010, %v3433
  %v3476 = vadd.f32 %v3011, %v3438
  %v3477 = vadd.f32 %v3012, %v3441
  %v3478 = vadd.f32 %v3013, %v3446
  %v3479 = vadd.f32 %v3014, %v3449
  %v3480 = vadd.f32 %v3015, %v3454
  %v3481 = vadd.f32 %v3016, %v3457
  %v3482 = vadd.f32 %v3017, %v3462
  %v3483 = vadd.f32 %v3018, %v3465
  %v3484 = vld [vmem:[%s2777] sm:$0xe]
  %v3485 = vld [vmem:[%s2777 + $0x8] sm:$0xe]
  %v3486 = vld [vmem:[%s2777 + $0x10] sm:$0xe]
  %v3487 = vld [vmem:[%s2777 + $0x18] sm:$0xe]
  %v3488 = vld [vmem:[%s2777 + $0x20] sm:$0xe]
  %v3489 = vld [vmem:[%s2777 + $0x28] sm:$0xe]
  %v3490 = vld [vmem:[%s2777 + $0x30] sm:$0xe]
  %v3491 = vld [vmem:[%s2777 + $0x38] sm:$0xe]
  %v3492 = vld [vmem:[%s2777 + $0x50] sm:$0xe]
  %v3493 = vld [vmem:[%s2777 + $0x58] sm:$0xe]
  %v3494 = vld [vmem:[%s2777 + $0x60] sm:$0xe]
  %v3495 = vld [vmem:[%s2777 + $0x68] sm:$0xe]
  %v3496 = vld [vmem:[%s2777 + $0x70] sm:$0xe]
  %v3497 = vld [vmem:[%s2777 + $0x78] sm:$0xe]
  %v3498 = vld [vmem:[%s2777 + $0x80] sm:$0xe]
  %v3499 = vld [vmem:[%s2777 + $0x88] sm:$0xe]
  %v3532 = vrot.slane %v3484, 5
  %v3533 = vrot.slane %v3532, 4
  %v3534 = vrot.slane %v3020, 5
  %v3535 = vsel %vm1476, %v3533, %v3534
  %v3536 = vrot.slane %v3485, 5
  %v3537 = vrot.slane %v3536, 4
  %v3538 = vrot.slane %v3022, 5
  %v3539 = vsel %vm1476, %v3537, %v3538
  %v3540 = vrot.slane %v3486, 5
  %v3541 = vrot.slane %v3540, 4
  %v3542 = vrot.slane %v3024, 5
  %v3543 = vsel %vm1476, %v3541, %v3542
  %v3544 = vrot.slane %v3487, 5
  %v3545 = vrot.slane %v3544, 4
  %v3546 = vrot.slane %v3026, 5
  %v3547 = vsel %vm1476, %v3545, %v3546
  %v3548 = vrot.slane %v3488, 5
  %v3549 = vrot.slane %v3548, 4
  %v3550 = vrot.slane %v3028, 5
  %v3551 = vsel %vm1476, %v3549, %v3550
  %v3552 = vrot.slane %v3489, 5
  %v3553 = vrot.slane %v3552, 4
  %v3554 = vrot.slane %v3030, 5
  %v3555 = vsel %vm1476, %v3553, %v3554
  %v3556 = vrot.slane %v3490, 5
  %v3557 = vrot.slane %v3556, 4
  %v3558 = vrot.slane %v3032, 5
  %v3559 = vsel %vm1476, %v3557, %v3558
  %v3560 = vrot.slane %v3491, 5
  %v3561 = vrot.slane %v3560, 4
  %v3562 = vrot.slane %v3034, 5
  %v3563 = vsel %vm1476, %v3561, %v3562
  %v3564 = vrot.slane %v3492, 5
  %v3565 = vrot.slane %v3564, 4
  %v3566 = vrot.slane %v3036, 5
  %v3567 = vsel %vm1476, %v3565, %v3566
  %v3568 = vrot.slane %v3493, 5
  %v3569 = vrot.slane %v3568, 4
  %v3570 = vrot.slane %v3038, 5
  %v3571 = vsel %vm1476, %v3569, %v3570
  %v3572 = vrot.slane %v3494, 5
  %v3573 = vrot.slane %v3572, 4
  %v3574 = vrot.slane %v3040, 5
  %v3575 = vsel %vm1476, %v3573, %v3574
  %v3576 = vrot.slane %v3495, 5
  %v3577 = vrot.slane %v3576, 4
  %v3578 = vrot.slane %v3042, 5
  %v3579 = vsel %vm1476, %v3577, %v3578
  %v3580 = vrot.slane %v3496, 5
  %v3581 = vrot.slane %v3580, 4
  %v3582 = vrot.slane %v3044, 5
  %v3583 = vsel %vm1476, %v3581, %v3582
  %v3584 = vrot.slane %v3497, 5
  %v3585 = vrot.slane %v3584, 4
  %v3586 = vrot.slane %v3046, 5
  %v3587 = vsel %vm1476, %v3585, %v3586
  %v3588 = vrot.slane %v3498, 5
  %v3589 = vrot.slane %v3588, 4
  %v3590 = vrot.slane %v3048, 5
  %v3591 = vsel %vm1476, %v3589, %v3590
  %v3592 = vrot.slane %v3499, 5
  %v3593 = vrot.slane %v3592, 4
  %v3594 = vrot.slane %v3050, 5
  %v3595 = vsel %vm1476, %v3593, %v3594
  %v3596 = vld [vmem:[%s5 + $0x180] sm:$0xf]
  %v3597 = vld [vmem:[%s5 + $0x184] sm:$0xf]
  %v3598 = vld [vmem:[%s5 + $0x188] sm:$0xf]
  %v3599 = vld [vmem:[%s5 + $0x18c] sm:$0xf]
  %v3600 = vld [vmem:[%s5 + $0x190] sm:$0xf]
  %v3601 = vld [vmem:[%s5 + $0x194] sm:$0xf]
  %v3602 = vld [vmem:[%s5 + $0x198] sm:$0xf]
  %v3603 = vld [vmem:[%s5 + $0x19c] sm:$0xf]
  %v3604 = vld [vmem:[%s5 + $0x1a0] sm:$0xf]
  %v3605 = vld [vmem:[%s5 + $0x1a4] sm:$0xf]
  %v3606 = vld [vmem:[%s5 + $0x1a8] sm:$0xf]
  %v3607 = vld [vmem:[%s5 + $0x1ac] sm:$0xf]
  %v3608 = vunpack.c.l.b16 %v3535
  %v3609 = vunpack.c.l.b16 %v3539
  %v3610 = vunpack.c.l.b16 %v3543
  %v3611 = vunpack.c.l.b16 %v3547
  %v3612 = vunpack.c.l.b16 %v3551
  %v3613 = vunpack.c.l.b16 %v3555
  %v3614 = vunpack.c.l.b16 %v3559
  %v3615 = vunpack.c.l.b16 %v3563
  %v3616 = vunpack.c.l.b16 %v3567
  %v3617 = vunpack.c.l.b16 %v3571
  %v3618 = vunpack.c.l.b16 %v3575
  %v3619 = vunpack.c.l.b16 %v3579
  %v3620 = vunpack.c.l.b16 %v3583
  %v3621 = vunpack.c.l.b16 %v3587
  %v3622 = vunpack.c.l.b16 %v3591
  %v3623 = vunpack.c.l.b16 %v3595
  %v3624 = vpack.c.b16 %v3609, %v3608
  %v3625 = vpack.c.b16 %v3611, %v3610
  %v3626 = vpack.c.b16 %v3613, %v3612
  %v3627 = vpack.c.b16 %v3615, %v3614
  %v3628 = vpack.c.b16 %v3617, %v3616
  %v3629 = vpack.c.b16 %v3619, %v3618
  %v3630 = vpack.c.b16 %v3621, %v3620
  %v3631 = vpack.c.b16 %v3623, %v3622
  %v3644 = vunpack.c.l.b16 %v3596
  %v3645 = vunpack.c.l.b16 %v3597
  %v3646 = vunpack.c.l.b16 %v3598
  %v3647 = vunpack.c.l.b16 %v3599
  %v3648 = vunpack.c.l.b16 %v3600
  %v3649 = vunpack.c.l.b16 %v3601
  %v3650 = vunpack.c.l.b16 %v3602
  %v3651 = vunpack.c.l.b16 %v3603
  %v3652 = vunpack.c.l.b16 %v3604
  %v3653 = vunpack.c.l.b16 %v3605
  %v3654 = vunpack.c.l.b16 %v3606
  %v3655 = vunpack.c.l.b16 %v3607
  %v3656 = vpack.c.b16 %v3645, %v3644
  %v3657 = vpack.c.b16 %v3647, %v3646
  %v3658 = vpack.c.b16 %v3649, %v3648
  %v3659 = vpack.c.b16 %v3651, %v3650
  %v3660 = vpack.c.b16 %v3653, %v3652
  %v3661 = vpack.c.b16 %v3655, %v3654
  %v3669 = vsel %vm1107, %v3624, 0
  %v3672 = vsel %vm1107, %v3625, 0
  %v3675 = vsel %vm1107, %v3626, 0
  %v3678 = vsel %vm1107, %v3627, 0
  %v3681 = vsel %vm1107, %v3628, 0
  %v3684 = vsel %vm1107, %v3629, 0
  %v3687 = vsel %vm1107, %v3630, 0
  %v3690 = vsel %vm1107, %v3631, 0
  %3692 = vmatprep.subr.bf16.mxu0 0
  %3693 = vmatpush1.bf16.msra.mxu0 %v3656
  %3694 = vmatprep.subr.bf16.mxu0 0
  %3695 = vmatpush1.bf16.msra.mxu0 %v3657
  %3696 = vmatprep.subr.bf16.mxu0 0
  %3697 = vmatpush1.bf16.msra.mxu0 %v3658
  %3698 = vmatprep.subr.bf16.mxu0 0
  %3699 = vmatpush1.bf16.msra.mxu0 %v3659
  %3700 = vmatprep.subr.bf16.mxu0 0
  %3701 = vmatpush1.bf16.msra.mxu0 %v3660
  %3702 = vmatprep.subr.bf16.mxu0 0
  %3703 = vmatpush1.bf16.msra.mxu0 %v3661
  %3704 = vmatprep.subr.bf16.mxu0 0
  %3705 = vmatpush1.bf16.msra.mxu0 0
  %3706 = vmatprep.subr.bf16.mxu0 0
  %3707 = vmatpush1.bf16.msra.mxu0 0
  %3708 = vmatprep.subr.bf16.mxu0 0
  %3709 = vmatpush1.bf16.msra.mxu0 0
  %3710 = vmatprep.subr.bf16.mxu0 0
  %3711 = vmatpush1.bf16.msra.mxu0 0
  %3712 = vmatprep.subr.bf16.mxu0 0
  %3713 = vmatpush1.bf16.msra.mxu0 0
  %3714 = vmatprep.subr.bf16.mxu0 0
  %3715 = vmatpush1.bf16.msra.mxu0 0
  %3716 = vmatprep.subr.bf16.mxu0 0
  %3717 = vmatpush1.bf16.msra.mxu0 0
  %3718 = vmatprep.subr.bf16.mxu0 0
  %3719 = vmatpush1.bf16.msra.mxu0 0
  %3720 = vmatprep.subr.bf16.mxu0 0
  %3721 = vmatpush1.bf16.msra.mxu0 0
  %3722 = vmatprep.subr.bf16.mxu0 0
  %3723 = vmatpush1.bf16.msra.mxu0 0
  %3724 = vmatprep.mubr.bf16.mxu0 0
  %3725 = vmatmul.mubr.bf16.gmra.mrb[0].mxu0 %v3669
  %v3726 = vpop.f32.mrb[0].mxu0
  %v3727 = vadd.f32 0.0, %v3726
  %v3728 = vpop.f32.mrb[0].mxu0
  %v3729 = vpop.f32.mrb[0].mxu0
  %v3730 = vadd.f32 0.0, %v3729
  %v3731 = vpop.f32.mrb[0].mxu0
  %3732 = vmatprep.mubr.bf16.mxu0 0
  %3733 = vmatmul.mubr.bf16.gmra.mrb[0].mxu0 %v3672
  %v3734 = vpop.f32.mrb[0].mxu0
  %v3735 = vadd.f32 0.0, %v3734
  %v3736 = vpop.f32.mrb[0].mxu0
  %v3737 = vpop.f32.mrb[0].mxu0
  %v3738 = vadd.f32 0.0, %v3737
  %v3739 = vpop.f32.mrb[0].mxu0
  %3740 = vmatprep.mubr.bf16.mxu0 0
  %3741 = vmatmul.mubr.bf16.gmra.mrb[0].mxu0 %v3675
  %v3742 = vpop.f32.mrb[0].mxu0
  %v3743 = vadd.f32 0.0, %v3742
  %v3744 = vpop.f32.mrb[0].mxu0
  %v3745 = vpop.f32.mrb[0].mxu0
  %v3746 = vadd.f32 0.0, %v3745
  %v3747 = vpop.f32.mrb[0].mxu0
  %3748 = vmatprep.mubr.bf16.mxu0 0
  %3749 = vmatmul.mubr.bf16.gmra.mrb[0].mxu0 %v3678
  %v3750 = vpop.f32.mrb[0].mxu0
  %v3751 = vadd.f32 0.0, %v3750
  %v3752 = vpop.f32.mrb[0].mxu0
  %v3753 = vpop.f32.mrb[0].mxu0
  %v3754 = vadd.f32 0.0, %v3753
  %v3755 = vpop.f32.mrb[0].mxu0
  %3756 = vmatprep.mubr.bf16.mxu0 0
  %3757 = vmatmul.mubr.bf16.gmra.mrb[0].mxu0 %v3681
  %v3758 = vpop.f32.mrb[0].mxu0
  %v3759 = vadd.f32 0.0, %v3758
  %v3760 = vpop.f32.mrb[0].mxu0
  %v3761 = vpop.f32.mrb[0].mxu0
  %v3762 = vadd.f32 0.0, %v3761
  %v3763 = vpop.f32.mrb[0].mxu0
  %3764 = vmatprep.mubr.bf16.mxu0 0
  %3765 = vmatmul.mubr.bf16.gmra.mrb[0].mxu0 %v3684
  %v3766 = vpop.f32.mrb[0].mxu0
  %v3767 = vadd.f32 0.0, %v3766
  %v3768 = vpop.f32.mrb[0].mxu0
  %v3769 = vpop.f32.mrb[0].mxu0
  %v3770 = vadd.f32 0.0, %v3769
  %v3771 = vpop.f32.mrb[0].mxu0
  %3772 = vmatprep.mubr.bf16.mxu0 0
  %3773 = vmatmul.mubr.bf16.gmra.mrb[0].mxu0 %v3687
  %v3774 = vpop.f32.mrb[0].mxu0
  %v3775 = vadd.f32 0.0, %v3774
  %v3776 = vpop.f32.mrb[0].mxu0
  %v3777 = vpop.f32.mrb[0].mxu0
  %v3778 = vadd.f32 0.0, %v3777
  %v3779 = vpop.f32.mrb[0].mxu0
  %3780 = vmatprep.mubr.bf16.mxu0 0
  %3781 = vmatmul.mubr.bf16.gmra.mrb[0].mxu0 %v3690
  %v3782 = vpop.f32.mrb[0].mxu0
  %v3783 = vadd.f32 0.0, %v3782
  %v3784 = vpop.f32.mrb[0].mxu0
  %v3785 = vpop.f32.mrb[0].mxu0
  %v3786 = vadd.f32 0.0, %v3785
  %v3787 = vpop.f32.mrb[0].mxu0
  %3788 = vdwg.mxu0
  %v3789 = vadd.f32 %v3468, %v3727
  %v3790 = vadd.f32 %v3469, %v3730
  %v3791 = vadd.f32 %v3470, %v3735
  %v3792 = vadd.f32 %v3471, %v3738
  %v3793 = vadd.f32 %v3472, %v3743
  %v3794 = vadd.f32 %v3473, %v3746
  %v3795 = vadd.f32 %v3474, %v3751
  %v3796 = vadd.f32 %v3475, %v3754
  %v3797 = vadd.f32 %v3476, %v3759
  %v3798 = vadd.f32 %v3477, %v3762
  %v3799 = vadd.f32 %v3478, %v3767
  %v3800 = vadd.f32 %v3479, %v3770
  %v3801 = vadd.f32 %v3480, %v3775
  %v3802 = vadd.f32 %v3481, %v3778
  %v3803 = vadd.f32 %v3482, %v3783
  %v3804 = vadd.f32 %v3483, %v3786
  %v3805 = vld [vmem:[%s6] sm:$0x1]
  %v3807 = vlaneseq
  %v3808 = vshrl.u32 %v3807, 7
  %v3809 = vsub.s32 0, %v3808
  %v3810 = vrot.slane %v3805, %v3809
  %v3812 = vadd.f32 %v3789, %v3810
  %v3813 = vadd.f32 %v3790, %v3810
  %v3814 = vadd.f32 %v3791, %v3810
  %v3815 = vadd.f32 %v3792, %v3810
  %v3816 = vadd.f32 %v3793, %v3810
  %v3817 = vadd.f32 %v3794, %v3810
  %v3818 = vadd.f32 %v3795, %v3810
  %v3819 = vadd.f32 %v3796, %v3810
  %v3820 = vadd.f32 %v3797, %v3810
  %v3821 = vadd.f32 %v3798, %v3810
  %v3822 = vadd.f32 %v3799, %v3810
  %v3823 = vadd.f32 %v3800, %v3810
  %v3824 = vadd.f32 %v3801, %v3810
  %v3825 = vadd.f32 %v3802, %v3810
  %v3826 = vadd.f32 %v3803, %v3810
  %v3827 = vadd.f32 %v3804, %v3810
  %v3828 = vxor.u32 %v3812, 2147483648
  %v3829 = vxor.u32 %v3813, 2147483648
  %v3830 = vxor.u32 %v3814, 2147483648
  %v3831 = vxor.u32 %v3815, 2147483648
  %v3832 = vxor.u32 %v3816, 2147483648
  %v3833 = vxor.u32 %v3817, 2147483648
  %v3834 = vxor.u32 %v3818, 2147483648
  %v3835 = vxor.u32 %v3819, 2147483648
  %v3836 = vxor.u32 %v3820, 2147483648
  %v3837 = vxor.u32 %v3821, 2147483648
  %v3838 = vxor.u32 %v3822, 2147483648
  %v3839 = vxor.u32 %v3823, 2147483648
  %v3840 = vxor.u32 %v3824, 2147483648
  %v3841 = vxor.u32 %v3825, 2147483648
  %v3842 = vxor.u32 %v3826, 2147483648
  %v3843 = vxor.u32 %v3827, 2147483648
  %v3844 = vmul.f32 %v3828, 1.442695
  %v3845 = vpow.pop %v3844
  %v3846 = vmul.f32 %v3829, 1.442695
  %v3847 = vpow.pop %v3846
  %v3848 = vmul.f32 %v3830, 1.442695
  %v3849 = vpow.pop %v3848
  %v3850 = vmul.f32 %v3831, 1.442695
  %v3851 = vpow.pop %v3850
  %v3852 = vmul.f32 %v3832, 1.442695
  %v3853 = vpow.pop %v3852
  %v3854 = vmul.f32 %v3833, 1.442695
  %v3855 = vpow.pop %v3854
  %v3856 = vmul.f32 %v3834, 1.442695
  %v3857 = vpow.pop %v3856
  %v3858 = vmul.f32 %v3835, 1.442695
  %v3859 = vpow.pop %v3858
  %v3860 = vmul.f32 %v3836, 1.442695
  %v3861 = vpow.pop %v3860
  %v3862 = vmul.f32 %v3837, 1.442695
  %v3863 = vpow.pop %v3862
  %v3864 = vmul.f32 %v3838, 1.442695
  %v3865 = vpow.pop %v3864
  %v3866 = vmul.f32 %v3839, 1.442695
  %v3867 = vpow.pop %v3866
  %v3868 = vmul.f32 %v3840, 1.442695
  %v3869 = vpow.pop %v3868
  %v3870 = vmul.f32 %v3841, 1.442695
  %v3871 = vpow.pop %v3870
  %v3872 = vmul.f32 %v3842, 1.442695
  %v3873 = vpow.pop %v3872
  %v3874 = vmul.f32 %v3843, 1.442695
  %v3875 = vpow.pop %v3874
  %v3876 = vadd.f32 %v3845, 1.0
  %v3877 = vadd.f32 %v3847, 1.0
  %v3878 = vadd.f32 %v3849, 1.0
  %v3879 = vadd.f32 %v3851, 1.0
  %v3880 = vadd.f32 %v3853, 1.0
  %v3881 = vadd.f32 %v3855, 1.0
  %v3882 = vadd.f32 %v3857, 1.0
  %v3883 = vadd.f32 %v3859, 1.0
  %v3884 = vadd.f32 %v3861, 1.0
  %v3885 = vadd.f32 %v3863, 1.0
  %v3886 = vadd.f32 %v3865, 1.0
  %v3887 = vadd.f32 %v3867, 1.0
  %v3888 = vadd.f32 %v3869, 1.0
  %v3889 = vadd.f32 %v3871, 1.0
  %v3890 = vadd.f32 %v3873, 1.0
  %v3891 = vadd.f32 %v3875, 1.0
  %v3892 = vrcp.pop %v3876
  %v3893 = vmul.f32 1.0, %v3892
  %v3894 = vrcp.pop %v3877
  %v3895 = vmul.f32 1.0, %v3894
  %v3896 = vrcp.pop %v3878
  %v3897 = vmul.f32 1.0, %v3896
  %v3898 = vrcp.pop %v3879
  %v3899 = vmul.f32 1.0, %v3898
  %v3900 = vrcp.pop %v3880
  %v3901 = vmul.f32 1.0, %v3900
  %v3902 = vrcp.pop %v3881
  %v3903 = vmul.f32 1.0, %v3902
  %v3904 = vrcp.pop %v3882
  %v3905 = vmul.f32 1.0, %v3904
  %v3906 = vrcp.pop %v3883
  %v3907 = vmul.f32 1.0, %v3906
  %v3908 = vrcp.pop %v3884
  %v3909 = vmul.f32 1.0, %v3908
  %v3910 = vrcp.pop %v3885
  %v3911 = vmul.f32 1.0, %v3910
  %v3912 = vrcp.pop %v3886
  %v3913 = vmul.f32 1.0, %v3912
  %v3914 = vrcp.pop %v3887
  %v3915 = vmul.f32 1.0, %v3914
  %v3916 = vrcp.pop %v3888
  %v3917 = vmul.f32 1.0, %v3916
  %v3918 = vrcp.pop %v3889
  %v3919 = vmul.f32 1.0, %v3918
  %v3920 = vrcp.pop %v3890
  %v3921 = vmul.f32 1.0, %v3920
  %v3922 = vrcp.pop %v3891
  %v3923 = vmul.f32 1.0, %v3922
  %v3924 = vmul.f32 %v3893, 2.0
  %v3925 = vmul.f32 %v3895, 2.0
  %v3926 = vmul.f32 %v3897, 2.0
  %v3927 = vmul.f32 %v3899, 2.0
  %v3928 = vmul.f32 %v3901, 2.0
  %v3929 = vmul.f32 %v3903, 2.0
  %v3930 = vmul.f32 %v3905, 2.0
  %v3931 = vmul.f32 %v3907, 2.0
  %v3932 = vmul.f32 %v3909, 2.0
  %v3933 = vmul.f32 %v3911, 2.0
  %v3934 = vmul.f32 %v3913, 2.0
  %v3935 = vmul.f32 %v3915, 2.0
  %v3936 = vmul.f32 %v3917, 2.0
  %v3937 = vmul.f32 %v3919, 2.0
  %v3938 = vmul.f32 %v3921, 2.0
  %v3939 = vmul.f32 %v3923, 2.0
  %v3940 = vsub.f32 %v3924, 1.0
  %v3941 = vsub.f32 %v3925, 1.0
  %v3942 = vsub.f32 %v3926, 1.0
  %v3943 = vsub.f32 %v3927, 1.0
  %v3944 = vsub.f32 %v3928, 1.0
  %v3945 = vsub.f32 %v3929, 1.0
  %v3946 = vsub.f32 %v3930, 1.0
  %v3947 = vsub.f32 %v3931, 1.0
  %v3948 = vsub.f32 %v3932, 1.0
  %v3949 = vsub.f32 %v3933, 1.0
  %v3950 = vsub.f32 %v3934, 1.0
  %v3951 = vsub.f32 %v3935, 1.0
  %v3952 = vsub.f32 %v3936, 1.0
  %v3953 = vsub.f32 %v3937, 1.0
  %v3954 = vsub.f32 %v3938, 1.0
  %v3955 = vsub.f32 %v3939, 1.0
  %v3956 = vld [vmem:[%s2] sm:$0xff]
  %v3957 = vld [vmem:[%s2 + $0x8] sm:$0xff]
  %v3958 = vld [vmem:[%s2 + $0x10] sm:$0xff]
  %v3959 = vld [vmem:[%s2 + $0x18] sm:$0xff]
  %v3960 = vld [vmem:[%s2 + $0x20] sm:$0xff]
  %v3961 = vld [vmem:[%s2 + $0x28] sm:$0xff]
  %v3962 = vld [vmem:[%s2 + $0x30] sm:$0xff]
  %v3963 = vld [vmem:[%s2 + $0x38] sm:$0xff]
  %v3964 = vld [vmem:[%s2 + $0x40] sm:$0xff]
  %v3965 = vld [vmem:[%s2 + $0x48] sm:$0xff]
  %v3966 = vld [vmem:[%s2 + $0x50] sm:$0xff]
  %v3967 = vld [vmem:[%s2 + $0x58] sm:$0xff]
  %v3968 = vld [vmem:[%s2 + $0x60] sm:$0xff]
  %v3969 = vld [vmem:[%s2 + $0x68] sm:$0xff]
  %v3970 = vld [vmem:[%s2 + $0x70] sm:$0xff]
  %v3971 = vld [vmem:[%s2 + $0x78] sm:$0xff]
  %3988 = vrot.lane.b32.xlu0 %v3956, 32
  %v3989 = vpop.permute.xlu0 %3988
  %3990 = vrot.lane.b32.xlu0 %v3957, 32
  %v3991 = vpop.permute.xlu0 %3990
  %3992 = vrot.lane.b32.xlu0 %v3958, 32
  %v3993 = vpop.permute.xlu0 %3992
  %3994 = vrot.lane.b32.xlu0 %v3959, 32
  %v3995 = vpop.permute.xlu0 %3994
  %3996 = vrot.lane.b32.xlu0 %v3960, 32
  %v3997 = vpop.permute.xlu0 %3996
  %3998 = vrot.lane.b32.xlu0 %v3961, 32
  %v3999 = vpop.permute.xlu0 %3998
  %4000 = vrot.lane.b32.xlu0 %v3962, 32
  %v4001 = vpop.permute.xlu0 %4000
  %4002 = vrot.lane.b32.xlu0 %v3963, 32
  %v4003 = vpop.permute.xlu0 %4002
  %4004 = vrot.lane.b32.xlu0 %v3964, 32
  %v4005 = vpop.permute.xlu0 %4004
  %4006 = vrot.lane.b32.xlu0 %v3965, 32
  %v4007 = vpop.permute.xlu0 %4006
  %4008 = vrot.lane.b32.xlu0 %v3966, 32
  %v4009 = vpop.permute.xlu0 %4008
  %4010 = vrot.lane.b32.xlu0 %v3967, 32
  %v4011 = vpop.permute.xlu0 %4010
  %4012 = vrot.lane.b32.xlu0 %v3968, 32
  %v4013 = vpop.permute.xlu0 %4012
  %4014 = vrot.lane.b32.xlu0 %v3969, 32
  %v4015 = vpop.permute.xlu0 %4014
  %4016 = vrot.lane.b32.xlu0 %v3970, 32
  %v4017 = vpop.permute.xlu0 %4016
  %4018 = vrot.lane.b32.xlu0 %v3971, 32
  %v4019 = vpop.permute.xlu0 %4018
  %v4036 = vmul.f32 %v3893, %v3989
  %v4037 = vmul.f32 %v3895, %v3991
  %v4038 = vmul.f32 %v3897, %v3993
  %v4039 = vmul.f32 %v3899, %v3995
  %v4040 = vmul.f32 %v3901, %v3997
  %v4041 = vmul.f32 %v3903, %v3999
  %v4042 = vmul.f32 %v3905, %v4001
  %v4043 = vmul.f32 %v3907, %v4003
  %v4044 = vmul.f32 %v3909, %v4005
  %v4045 = vmul.f32 %v3911, %v4007
  %v4046 = vmul.f32 %v3913, %v4009
  %v4047 = vmul.f32 %v3915, %v4011
  %v4048 = vmul.f32 %v3917, %v4013
  %v4049 = vmul.f32 %v3919, %v4015
  %v4050 = vmul.f32 %v3921, %v4017
  %v4051 = vmul.f32 %v3923, %v4019
  %4068 = vrot.lane.b32.xlu0 %v3940, 32
  %v4069 = vpop.permute.xlu0 %4068
  %4070 = vrot.lane.b32.xlu0 %v3941, 32
  %v4071 = vpop.permute.xlu0 %4070
  %4072 = vrot.lane.b32.xlu0 %v3942, 32
  %v4073 = vpop.permute.xlu0 %4072
  %4074 = vrot.lane.b32.xlu0 %v3943, 32
  %v4075 = vpop.permute.xlu0 %4074
  %4076 = vrot.lane.b32.xlu0 %v3944, 32
  %v4077 = vpop.permute.xlu0 %4076
  %4078 = vrot.lane.b32.xlu0 %v3945, 32
  %v4079 = vpop.permute.xlu0 %4078
  %4080 = vrot.lane.b32.xlu0 %v3946, 32
  %v4081 = vpop.permute.xlu0 %4080
  %4082 = vrot.lane.b32.xlu0 %v3947, 32
  %v4083 = vpop.permute.xlu0 %4082
  %4084 = vrot.lane.b32.xlu0 %v3948, 32
  %v4085 = vpop.permute.xlu0 %4084
  %4086 = vrot.lane.b32.xlu0 %v3949, 32
  %v4087 = vpop.permute.xlu0 %4086
  %4088 = vrot.lane.b32.xlu0 %v3950, 32
  %v4089 = vpop.permute.xlu0 %4088
  %4090 = vrot.lane.b32.xlu0 %v3951, 32
  %v4091 = vpop.permute.xlu0 %4090
  %4092 = vrot.lane.b32.xlu0 %v3952, 32
  %v4093 = vpop.permute.xlu0 %4092
  %4094 = vrot.lane.b32.xlu0 %v3953, 32
  %v4095 = vpop.permute.xlu0 %4094
  %4096 = vrot.lane.b32.xlu0 %v3954, 32
  %v4097 = vpop.permute.xlu0 %4096
  %4098 = vrot.lane.b32.xlu0 %v3955, 32
  %v4099 = vpop.permute.xlu0 %4098
  %v4116 = vmul.f32 %v3893, %v4069
  %v4117 = vmul.f32 %v3895, %v4071
  %v4118 = vmul.f32 %v3897, %v4073
  %v4119 = vmul.f32 %v3899, %v4075
  %v4120 = vmul.f32 %v3901, %v4077
  %v4121 = vmul.f32 %v3903, %v4079
  %v4122 = vmul.f32 %v3905, %v4081
  %v4123 = vmul.f32 %v3907, %v4083
  %v4124 = vmul.f32 %v3909, %v4085
  %v4125 = vmul.f32 %v3911, %v4087
  %v4126 = vmul.f32 %v3913, %v4089
  %v4127 = vmul.f32 %v3915, %v4091
  %v4128 = vmul.f32 %v3917, %v4093
  %v4129 = vmul.f32 %v3919, %v4095
  %v4130 = vmul.f32 %v3921, %v4097
  %v4131 = vmul.f32 %v3923, %v4099
  %4148 = vrot.lane.b32.xlu0 %v4116, 32
  %v4149 = vpop.permute.xlu0 %4148
  %4150 = vrot.lane.b32.xlu0 %v4117, 32
  %v4151 = vpop.permute.xlu0 %4150
  %4152 = vrot.lane.b32.xlu0 %v4118, 32
  %v4153 = vpop.permute.xlu0 %4152
  %4154 = vrot.lane.b32.xlu0 %v4119, 32
  %v4155 = vpop.permute.xlu0 %4154
  %4156 = vrot.lane.b32.xlu0 %v4120, 32
  %v4157 = vpop.permute.xlu0 %4156
  %4158 = vrot.lane.b32.xlu0 %v4121, 32
  %v4159 = vpop.permute.xlu0 %4158
  %4160 = vrot.lane.b32.xlu0 %v4122, 32
  %v4161 = vpop.permute.xlu0 %4160
  %4162 = vrot.lane.b32.xlu0 %v4123, 32
  %v4163 = vpop.permute.xlu0 %4162
  %4164 = vrot.lane.b32.xlu0 %v4124, 32
  %v4165 = vpop.permute.xlu0 %4164
  %4166 = vrot.lane.b32.xlu0 %v4125, 32
  %v4167 = vpop.permute.xlu0 %4166
  %4168 = vrot.lane.b32.xlu0 %v4126, 32
  %v4169 = vpop.permute.xlu0 %4168
  %4170 = vrot.lane.b32.xlu0 %v4127, 32
  %v4171 = vpop.permute.xlu0 %4170
  %4172 = vrot.lane.b32.xlu0 %v4128, 32
  %v4173 = vpop.permute.xlu0 %4172
  %4174 = vrot.lane.b32.xlu0 %v4129, 32
  %v4175 = vpop.permute.xlu0 %4174
  %4176 = vrot.lane.b32.xlu0 %v4130, 32
  %v4177 = vpop.permute.xlu0 %4176
  %4178 = vrot.lane.b32.xlu0 %v4131, 32
  %v4179 = vpop.permute.xlu0 %4178
  %v4196 = vadd.f32 %v4036, %v4149
  %v4197 = vadd.f32 %v4037, %v4151
  %v4198 = vadd.f32 %v4038, %v4153
  %v4199 = vadd.f32 %v4039, %v4155
  %v4200 = vadd.f32 %v4040, %v4157
  %v4201 = vadd.f32 %v4041, %v4159
  %v4202 = vadd.f32 %v4042, %v4161
  %v4203 = vadd.f32 %v4043, %v4163
  %v4204 = vadd.f32 %v4044, %v4165
  %v4205 = vadd.f32 %v4045, %v4167
  %v4206 = vadd.f32 %v4046, %v4169
  %v4207 = vadd.f32 %v4047, %v4171
  %v4208 = vadd.f32 %v4048, %v4173
  %v4209 = vadd.f32 %v4049, %v4175
  %v4210 = vadd.f32 %v4050, %v4177
  %v4211 = vadd.f32 %v4051, %v4179
  %4228 = vrot.lane.b32.xlu0 %v4196, 32
  %v4229 = vpop.permute.xlu0 %4228
  %4230 = vrot.lane.b32.xlu0 %v4197, 32
  %v4231 = vpop.permute.xlu0 %4230
  %4232 = vrot.lane.b32.xlu0 %v4198, 32
  %v4233 = vpop.permute.xlu0 %4232
  %4234 = vrot.lane.b32.xlu0 %v4199, 32
  %v4235 = vpop.permute.xlu0 %4234
  %4236 = vrot.lane.b32.xlu0 %v4200, 32
  %v4237 = vpop.permute.xlu0 %4236
  %4238 = vrot.lane.b32.xlu0 %v4201, 32
  %v4239 = vpop.permute.xlu0 %4238
  %4240 = vrot.lane.b32.xlu0 %v4202, 32
  %v4241 = vpop.permute.xlu0 %4240
  %4242 = vrot.lane.b32.xlu0 %v4203, 32
  %v4243 = vpop.permute.xlu0 %4242
  %4244 = vrot.lane.b32.xlu0 %v4204, 32
  %v4245 = vpop.permute.xlu0 %4244
  %4246 = vrot.lane.b32.xlu0 %v4205, 32
  %v4247 = vpop.permute.xlu0 %4246
  %4248 = vrot.lane.b32.xlu0 %v4206, 32
  %v4249 = vpop.permute.xlu0 %4248
  %4250 = vrot.lane.b32.xlu0 %v4207, 32
  %v4251 = vpop.permute.xlu0 %4250
  %4252 = vrot.lane.b32.xlu0 %v4208, 32
  %v4253 = vpop.permute.xlu0 %4252
  %4254 = vrot.lane.b32.xlu0 %v4209, 32
  %v4255 = vpop.permute.xlu0 %4254
  %4256 = vrot.lane.b32.xlu0 %v4210, 32
  %v4257 = vpop.permute.xlu0 %4256
  %4258 = vrot.lane.b32.xlu0 %v4211, 32
  %v4259 = vpop.permute.xlu0 %4258
  %v4276 = vmul.f32 %v3893, %v4229
  %v4277 = vmul.f32 %v3895, %v4231
  %v4278 = vmul.f32 %v3897, %v4233
  %v4279 = vmul.f32 %v3899, %v4235
  %v4280 = vmul.f32 %v3901, %v4237
  %v4281 = vmul.f32 %v3903, %v4239
  %v4282 = vmul.f32 %v3905, %v4241
  %v4283 = vmul.f32 %v3907, %v4243
  %v4284 = vmul.f32 %v3909, %v4245
  %v4285 = vmul.f32 %v3911, %v4247
  %v4286 = vmul.f32 %v3913, %v4249
  %v4287 = vmul.f32 %v3915, %v4251
  %v4288 = vmul.f32 %v3917, %v4253
  %v4289 = vmul.f32 %v3919, %v4255
  %v4290 = vmul.f32 %v3921, %v4257
  %v4291 = vmul.f32 %v3923, %v4259
  %4308 = vrot.lane.b32.xlu0 %v4276, 64
  %v4309 = vpop.permute.xlu0 %4308
  %4310 = vrot.lane.b32.xlu0 %v4277, 64
  %v4311 = vpop.permute.xlu0 %4310
  %4312 = vrot.lane.b32.xlu0 %v4278, 64
  %v4313 = vpop.permute.xlu0 %4312
  %4314 = vrot.lane.b32.xlu0 %v4279, 64
  %v4315 = vpop.permute.xlu0 %4314
  %4316 = vrot.lane.b32.xlu0 %v4280, 64
  %v4317 = vpop.permute.xlu0 %4316
  %4318 = vrot.lane.b32.xlu0 %v4281, 64
  %v4319 = vpop.permute.xlu0 %4318
  %4320 = vrot.lane.b32.xlu0 %v4282, 64
  %v4321 = vpop.permute.xlu0 %4320
  %4322 = vrot.lane.b32.xlu0 %v4283, 64
  %v4323 = vpop.permute.xlu0 %4322
  %4324 = vrot.lane.b32.xlu0 %v4284, 64
  %v4325 = vpop.permute.xlu0 %4324
  %4326 = vrot.lane.b32.xlu0 %v4285, 64
  %v4327 = vpop.permute.xlu0 %4326
  %4328 = vrot.lane.b32.xlu0 %v4286, 64
  %v4329 = vpop.permute.xlu0 %4328
  %4330 = vrot.lane.b32.xlu0 %v4287, 64
  %v4331 = vpop.permute.xlu0 %4330
  %4332 = vrot.lane.b32.xlu0 %v4288, 64
  %v4333 = vpop.permute.xlu0 %4332
  %4334 = vrot.lane.b32.xlu0 %v4289, 64
  %v4335 = vpop.permute.xlu0 %4334
  %4336 = vrot.lane.b32.xlu0 %v4290, 64
  %v4337 = vpop.permute.xlu0 %4336
  %4338 = vrot.lane.b32.xlu0 %v4291, 64
  %v4339 = vpop.permute.xlu0 %4338
  %v4356 = vsel %vm371, %v4309, %v4196
  %v4357 = vsel %vm371, %v4311, %v4197
  %v4358 = vsel %vm371, %v4313, %v4198
  %v4359 = vsel %vm371, %v4315, %v4199
  %v4360 = vsel %vm371, %v4317, %v4200
  %v4361 = vsel %vm371, %v4319, %v4201
  %v4362 = vsel %vm371, %v4321, %v4202
  %v4363 = vsel %vm371, %v4323, %v4203
  %v4364 = vsel %vm371, %v4325, %v4204
  %v4365 = vsel %vm371, %v4327, %v4205
  %v4366 = vsel %vm371, %v4329, %v4206
  %v4367 = vsel %vm371, %v4331, %v4207
  %v4368 = vsel %vm371, %v4333, %v4208
  %v4369 = vsel %vm371, %v4335, %v4209
  %v4370 = vsel %vm371, %v4337, %v4210
  %v4371 = vsel %vm371, %v4339, %v4211
  %4372 = vst.msk [vmem:[%s7] sm:$0xff] %vm420, %v4356
  %4373 = vst.msk [vmem:[%s7 + $0x8] sm:$0xff] %vm420, %v4357
  %4374 = vst.msk [vmem:[%s7 + $0x10] sm:$0xff] %vm420, %v4358
  %4375 = vst.msk [vmem:[%s7 + $0x18] sm:$0xff] %vm420, %v4359
  %4376 = vst.msk [vmem:[%s7 + $0x20] sm:$0xff] %vm420, %v4360
  %4377 = vst.msk [vmem:[%s7 + $0x28] sm:$0xff] %vm420, %v4361
  %4378 = vst.msk [vmem:[%s7 + $0x30] sm:$0xff] %vm420, %v4362
  %4379 = vst.msk [vmem:[%s7 + $0x38] sm:$0xff] %vm420, %v4363
  %4380 = vst.msk [vmem:[%s7 + $0x40] sm:$0xff] %vm420, %v4364
  %4381 = vst.msk [vmem:[%s7 + $0x48] sm:$0xff] %vm420, %v4365
  %4382 = vst.msk [vmem:[%s7 + $0x50] sm:$0xff] %vm420, %v4366
  %4383 = vst.msk [vmem:[%s7 + $0x58] sm:$0xff] %vm420, %v4367
  %4384 = vst.msk [vmem:[%s7 + $0x60] sm:$0xff] %vm420, %v4368
  %4385 = vst.msk [vmem:[%s7 + $0x68] sm:$0xff] %vm420, %v4369
  %4386 = vst.msk [vmem:[%s7 + $0x70] sm:$0xff] %vm420, %v4370
  %4387 = vst.msk [vmem:[%s7 + $0x78] sm:$0xff] %vm420, %v4371
  // Predicated region
  $region30: #{conv_lstm_forward.1} parent=0 // pred_check
    _
  $region31: #{conv_lstm_forward.1} parent=0 // pred_check_branch
    %4389 = sbr.rel (0) target = $region33
  $region32: #{conv_lstm_forward.1} parent=0 // pred_region
    _
  $region33: #{conv_lstm_forward.1} parent=0 // pred_fallthru
    _
  // Predicated region
  $region34: #{conv_lstm_forward.1} parent=0 // pred_check
    _
  $region35: #{conv_lstm_forward.1} parent=0 // pred_check_branch
    %4391 = sbr.rel (0) target = $region37
  $region36: #{conv_lstm_forward.1} parent=0 // pred_region
    _
  $region37: #{conv_lstm_forward.1} parent=0 // pred_fallthru
    _

</llo_original>
